<compile_context>
chip_gen: v6e
topology: v6e:2x2x1
jax: 0.10.0
libtpu: 0.0.40
codegen_flags: <defaults>
</compile_context>

<pallas_src>
import jax
import jax.numpy as jnp
from jax.experimental import pallas as pl
from jax.experimental.pallas import tpu as pltpu


# --------------------------- fused network kernel ---------------------------

def _net_kernel(patches_ref, w1c_ref, b1c_ref, w2c_ref, b2c_ref,
                w1f_ref, b1f_ref, w2f_ref, b2f_ref, w3f_ref, b3f_ref,
                out_ref, acc1_ref, pool1_ref, acc2_ref):
    """One image per grid step.

    patches_ref: (1, 784, 256) bf16  im2col rows = 5x13 window x 3ch (195 real)
    w1c_ref:     (256, 40)     bf16  conv1 weight, 5 replicated/shifted blocks
    b1c_ref:     (1, 40)       f32   conv1 bias replicated per block
    w2c_ref:     (5, 40, 16)   bf16  conv2 weight per kh, rows = kw*8 + c
    b2c_ref:     (1, 16)       f32
    w1f_ref:     (25, 16, 128) bf16  fc1 weight per pool2 position
    b1f_ref/b2f_ref/b3f_ref: (1, 128) f32
    w2f_ref/w3f_ref:         (128, 128) bf16
    out_ref:     (1, 8, 128)   f32   logits broadcast over 8 rows (lane-dense)
    acc1_ref:    (784, 40)     f32   conv1 output (28x28 rows, 5x8 lanes)
    pool1_ref:   (196, 40)     bf16  pool1 output, conv2-im2col-packed lanes
    acc2_ref:    (140, 16)     f32   conv2 output (10x14 rows, 4 garbage cols)
    """
    # ---------- conv1: single K-packed MXU dot ------------------------------
    acc1_ref[...] = jnp.dot(patches_ref[0], w1c_ref[...],
                            preferred_element_type=jnp.float32)      # (784, 40)

    # ---------- pool1: 2x2/2 max + bias + ReLU (full-lane-width ops) --------
    b1 = b1c_ref[...]                                                # (1, 40)
    for hp in range(14):
        base = 2 * hp * 28
        ev = acc1_ref[pl.ds(base, 28, stride=2), :]      # even cols, rows 2hp & 2hp+1
        od = acc1_ref[pl.ds(base + 1, 28, stride=2), :]  # odd cols
        m = jnp.maximum(ev, od)                          # (28, 40)
        pooled = jnp.maximum(m[0:14], m[14:28])          # (14, 40)  h-max
        pooled = jnp.maximum(pooled + b1, 0.0)           # bias+ReLU (commute w/ max)
        pool1_ref[pl.ds(hp * 14, 14), :] = pooled.astype(jnp.bfloat16)
    # Now pool1[h*14 + w, kw*8 + c] == relu(pool1_true[h, w+kw, c] + b) for
    # w+kw < 14: conv2's (kw, c) im2col packing is already done.

    # ---------- conv2: 5 dots, one per kh, K = 40 packed (kw, c) ------------
    for kh in range(5):
        slab = pool1_ref[pl.ds(kh * 14, 140), :]                     # (140, 40)
        contrib = jnp.dot(slab, w2c_ref[kh],
                          preferred_element_type=jnp.float32)        # (140, 16)
        if kh == 0:
            acc2_ref[...] = contrib
        else:
            acc2_ref[...] += contrib

    # ---------- pool2 + bias + ReLU fused with the fc1 contraction ----------
    b2 = b2c_ref[...]                                                # (1, 16)
    h1 = b1f_ref[...]                                                # (1, 128) f32
    for hp in range(5):
        base = 2 * hp * 14
        ev = acc2_ref[pl.ds(base, 14, stride=2), :]
        od = acc2_ref[pl.ds(base + 1, 14, stride=2), :]
        m = jnp.maximum(ev, od)                                      # (14, 16)
        pooled = jnp.maximum(m[0:7], m[7:14])                        # (7, 16); w'=5,6 garbage
        pooled = jnp.maximum(pooled + b2, 0.0).astype(jnp.bfloat16)
        for wp in range(5):                                          # only valid columns
            h1 = h1 + jnp.dot(pooled[wp:wp + 1, :], w1f_ref[hp * 5 + wp],
                              preferred_element_type=jnp.float32)    # (1, 128)

    # ---------- fc2 + ReLU, fc3 ----------------------------------------------
    h = jnp.maximum(h1, 0.0).astype(jnp.bfloat16)
    h = jnp.dot(h, w2f_ref[...], preferred_element_type=jnp.float32) + b2f_ref[...]
    h = jnp.maximum(h, 0.0).astype(jnp.bfloat16)
    h = jnp.dot(h, w3f_ref[...], preferred_element_type=jnp.float32) + b3f_ref[...]
    out_ref[0, :, :] = jnp.broadcast_to(h, (8, 128))


def net_pallas(pp, patches):
    N = patches.shape[0]
    out = pl.pallas_call(
        _net_kernel,
        out_shape=jax.ShapeDtypeStruct((N, 8, 128), jnp.float32),
        grid_spec=pltpu.PrefetchScalarGridSpec(
            num_scalar_prefetch=0,
            grid=(N,),
            in_specs=[
                pl.BlockSpec((1, 784, 256), lambda n: (n, 0, 0)),    # patches
                pl.BlockSpec((256, 40), lambda n: (0, 0)),           # conv1 w (resident)
                pl.BlockSpec((1, 40), lambda n: (0, 0)),             # conv1 b
                pl.BlockSpec((5, 40, 16), lambda n: (0, 0, 0)),      # conv2 w
                pl.BlockSpec((1, 16), lambda n: (0, 0)),             # conv2 b
                pl.BlockSpec((25, 16, 128), lambda n: (0, 0, 0)),    # fc1 w
                pl.BlockSpec((1, 128), lambda n: (0, 0)),            # fc1 b
                pl.BlockSpec((128, 128), lambda n: (0, 0)),          # fc2 w
                pl.BlockSpec((1, 128), lambda n: (0, 0)),            # fc2 b
                pl.BlockSpec((128, 128), lambda n: (0, 0)),          # fc3 w
                pl.BlockSpec((1, 128), lambda n: (0, 0)),            # fc3 b
            ],
            out_specs=pl.BlockSpec((1, 8, 128), lambda n: (n, 0, 0)),
            scratch_shapes=[
                pltpu.VMEM((784, 40), jnp.float32),   # conv1 acc
                pltpu.VMEM((196, 40), jnp.bfloat16),  # pool1 (conv2-packed)
                pltpu.VMEM((140, 16), jnp.float32),   # conv2 acc
            ],
        ),
        compiler_params=pltpu.CompilerParams(dimension_semantics=("parallel",)),
    )(patches, pp["conv1_w"], pp["conv1_b"], pp["conv2_w"], pp["conv2_b"],
      pp["fc1_w"], pp["fc1_b"], pp["fc2_w"], pp["fc2_b"], pp["fc3_w"], pp["fc3_b"])
    return out[:, 0, :10]


# ------------------------------ parameters ----------------------------------

def init_params(key):
    """Deterministic init, PyTorch-like U(-1/sqrt(fan_in), 1/sqrt(fan_in))."""
    ks = jax.random.split(key, 10)

    def unif(k, shape, fan_in):
        bound = 1.0 / jnp.sqrt(float(fan_in))
        return jax.random.uniform(k, shape, jnp.float32, -bound, bound)

    return {
        "conv1_w": unif(ks[0], (6, 3, 5, 5), 3 * 5 * 5),
        "conv1_b": unif(ks[1], (6,), 3 * 5 * 5),
        "conv2_w": unif(ks[2], (16, 6, 5, 5), 6 * 5 * 5),
        "conv2_b": unif(ks[3], (16,), 6 * 5 * 5),
        "fc1_w": unif(ks[4], (120, 400), 400),   # PyTorch Linear: (out, in)
        "fc1_b": unif(ks[5], (120,), 400),
        "fc2_w": unif(ks[6], (84, 120), 120),
        "fc2_b": unif(ks[7], (84,), 120),
        "fc3_w": unif(ks[8], (10, 84), 84),
        "fc3_b": unif(ks[9], (10,), 84),
    }


def prepare_params(p):
    """One-time layout prep (outside jit): compact, K-packed bf16 weights."""
    def pad_to(a, shape):
        return jnp.pad(a, [(0, t - s) for s, t in zip(a.shape, shape)])

    # conv1: (256, 40).  Rows = (kh*13 + j)*3 + c over a 5x13 window; lane
    # block kw holds the 5x5 kernel at column offset 2*kw (w-shifted replicas).
    wt = jnp.transpose(p["conv1_w"], (2, 3, 1, 0))        # (kh, kw, c, oc) (5,5,3,6)
    wt = jnp.pad(wt, ((0, 0), (0, 0), (0, 0), (0, 2)))    # oc 6 -> 8
    blocks = [jnp.pad(wt, ((0, 0), (2 * r, 8 - 2 * r), (0, 0), (0, 0)))
              for r in range(5)]                          # each (5, 13, 3, 8)
    w1c = jnp.concatenate(blocks, axis=-1).reshape(195, 40)
    w1c = pad_to(w1c, (256, 40)).astype(jnp.bfloat16)
    b1c = jnp.tile(jnp.pad(p["conv1_b"], (0, 2)), 5).reshape(1, 40)
    b1c = b1c.astype(jnp.float32)

    # conv2: (5, 40, 16).  Per kh, rows = kw*8 + c (6 real channels per block).
    wt2 = jnp.transpose(p["conv2_w"], (2, 3, 1, 0))       # (kh, kw, c, oc) (5,5,6,16)
    wt2 = jnp.pad(wt2, ((0, 0), (0, 0), (0, 2), (0, 0)))  # c 6 -> 8
    w2c = wt2.reshape(5, 40, 16).astype(jnp.bfloat16)
    b2c = p["conv2_b"].reshape(1, 16).astype(jnp.float32)

    # fc1: (25, 16, 128).  Kernel hands pool2 over hw-major as (hw, c);
    # PyTorch's x.view(-1, 400) uses feature index c*25 + hw.
    w1f = jnp.transpose(p["fc1_w"].reshape(120, 16, 25), (2, 1, 0))  # (hw, c, o)
    w1f = pad_to(w1f, (25, 16, 128)).astype(jnp.bfloat16)

    def bias128(b):
        return pad_to(b.astype(jnp.float32), (128,)).reshape(1, 128)

    return {
        "conv1_w": w1c, "conv1_b": b1c,
        "conv2_w": w2c, "conv2_b": b2c,
        "fc1_w": w1f, "fc1_b": bias128(p["fc1_b"]),
        "fc2_w": pad_to(p["fc2_w"].T, (128, 128)).astype(jnp.bfloat16),
        "fc2_b": bias128(p["fc2_b"]),
        "fc3_w": pad_to(p["fc3_w"].T, (128, 128)).astype(jnp.bfloat16),
        "fc3_b": bias128(p["fc3_b"]),
    }


# -------------------------------- forward -----------------------------------

def net_forward(pp, x_nchw):
    """Wrapper: im2col packing for conv1 (data movement only), then the fused
    Pallas kernel."""
    N = x_nchw.shape[0]
    x = jnp.transpose(x_nchw, (0, 2, 3, 1))                 # NHWC (N, 32, 32, 3)
    x = jnp.pad(x, ((0, 0), (0, 0), (0, 8), (0, 0)))        # width 32 -> 40 (zeros)
    cols = []
    for kh in range(5):
        for kj in range(13):
            cols.append(x[:, kh:kh + 28, kj:kj + 28, :])    # (N, 28, 28, 3)
    patches = jnp.stack(cols, axis=3)                       # (N, 28, 28, 65, 3)
    patches = patches.reshape(N, 28 * 28, 65 * 3)           # (N, 784, 195)
    patches = jnp.pad(patches, ((0, 0), (0, 0), (0, 256 - 195)))
    patches = patches.astype(jnp.bfloat16)
    # TODO(synk): batch-block the grid (B images per step) once batch > ~8.
    return net_pallas(pp, patches)


if __name__ == "__main__":
    key = jax.random.PRNGKey(0)
    k_params, k_x = jax.random.split(key)
    params = init_params(k_params)
    prepared = prepare_params(params)     # hoisted one-time weight prep
    # Module implies 32x32 spatial input (to reach 5x5 after two conv+pool stages).
    x = jax.random.normal(k_x, (2, 3, 32, 32), dtype=jnp.float32)

    out = jax.jit(net_forward)(prepared, x)
    out = jax.block_until_ready(out)

    assert out.shape == (2, 10), out.shape
    assert out.dtype == jnp.float32
    assert bool(jnp.all(jnp.isfinite(out)))
    print("KERNEL_OK")
</pallas_src>

<mosaic_0001>
module attributes {stable_mosaic.version = 11 : i64} {
  func.func @_net_kernel(%arg0: i32, %arg1: memref<1x784x256xbf16, #tpu.memory_space<vmem>>, %arg2: memref<256x40xbf16, #tpu.memory_space<vmem>>, %arg3: memref<1x40xf32, #tpu.memory_space<vmem>>, %arg4: memref<5x40x16xbf16, #tpu.memory_space<vmem>>, %arg5: memref<1x16xf32, #tpu.memory_space<vmem>>, %arg6: memref<25x16x128xbf16, #tpu.memory_space<vmem>>, %arg7: memref<1x128xf32, #tpu.memory_space<vmem>>, %arg8: memref<128x128xbf16, #tpu.memory_space<vmem>>, %arg9: memref<1x128xf32, #tpu.memory_space<vmem>>, %arg10: memref<128x128xbf16, #tpu.memory_space<vmem>>, %arg11: memref<1x128xf32, #tpu.memory_space<vmem>>, %arg12: memref<1x8x128xf32, #tpu.memory_space<vmem>>, %arg13: memref<784x40xf32, #tpu.memory_space<vmem>>, %arg14: memref<196x40xbf16, #tpu.memory_space<vmem>>, %arg15: memref<140x16xf32, #tpu.memory_space<vmem>>) attributes {dimension_semantics = [#tpu.dimension_semantics<parallel>], iteration_bounds = array<i64: 2>, scalar_prefetch = 0 : i64, scratch_operands = 3 : i64, tpu.core_type = #tpu.core_type<tc>, window_params = [{transform_indices = @transform_0, window_bounds = array<i64: 1, 784, 256>}, {pipeline_mode = #tpu.pipeline_mode<synchronous>, transform_indices = @transform_1, window_bounds = array<i64: 256, 40>}, {pipeline_mode = #tpu.pipeline_mode<synchronous>, transform_indices = @transform_2, window_bounds = array<i64: 1, 40>}, {pipeline_mode = #tpu.pipeline_mode<synchronous>, transform_indices = @transform_3, window_bounds = array<i64: 5, 40, 16>}, {pipeline_mode = #tpu.pipeline_mode<synchronous>, transform_indices = @transform_4, window_bounds = array<i64: 1, 16>}, {pipeline_mode = #tpu.pipeline_mode<synchronous>, transform_indices = @transform_5, window_bounds = array<i64: 25, 16, 128>}, {pipeline_mode = #tpu.pipeline_mode<synchronous>, transform_indices = @transform_6, window_bounds = array<i64: 1, 128>}, {pipeline_mode = #tpu.pipeline_mode<synchronous>, transform_indices = @transform_7, window_bounds = array<i64: 128, 128>}, {pipeline_mode = #tpu.pipeline_mode<synchronous>, transform_indices = @transform_8, window_bounds = array<i64: 1, 128>}, {pipeline_mode = #tpu.pipeline_mode<synchronous>, transform_indices = @transform_9, window_bounds = array<i64: 128, 128>}, {pipeline_mode = #tpu.pipeline_mode<synchronous>, transform_indices = @transform_10, window_bounds = array<i64: 1, 128>}, {transform_indices = @transform_11, window_bounds = array<i64: 1, 8, 128>}]} {
    %c0 = arith.constant 0 : index
    %c0_0 = arith.constant 0 : index
    %c0_1 = arith.constant 0 : index
    %0 = vector.load %arg1[%c0, %c0_0, %c0_1] : memref<1x784x256xbf16, #tpu.memory_space<vmem>>, vector<1x784x256xbf16>
    %1 = vector.shape_cast %0 : vector<1x784x256xbf16> to vector<784x256xbf16>
    %c0_2 = arith.constant 0 : index
    %c0_3 = arith.constant 0 : index
    %2 = vector.load %arg2[%c0_2, %c0_3] : memref<256x40xbf16, #tpu.memory_space<vmem>>, vector<256x40xbf16>
    %cst = arith.constant dense<0.000000e+00> : vector<784x40xf32>
    %3 = tpu.matmul %1, %2, %cst {dimension_numbers = #tpu.dot_dimension_numbers<[1], [0], [0], [1], [0, 0, 1, 1], [], []>} : vector<784x256xbf16>, vector<256x40xbf16>, vector<784x40xf32> -> vector<784x40xf32>
    %c0_4 = arith.constant 0 : index
    %c0_5 = arith.constant 0 : index
    %4 = vector.load %arg13[%c0_4, %c0_5] : memref<784x40xf32, #tpu.memory_space<vmem>>, vector<784x40xf32>
    tpu.vector_store %arg13[%c0_4, %c0_5], %3 {strides = array<i32>} : memref<784x40xf32, #tpu.memory_space<vmem>>, vector<784x40xf32>,
    %c0_6 = arith.constant 0 : index
    %c0_7 = arith.constant 0 : index
    %5 = vector.load %arg3[%c0_6, %c0_7] : memref<1x40xf32, #tpu.memory_space<vmem>>, vector<1x40xf32>
    %c0_8 = arith.constant 0 : index
    %c0_9 = arith.constant 0 : index
    %6 = tpu.strided_load %arg13[%c0_8, %c0_9] {strides = array<i32: 2, 1>} : memref<784x40xf32, #tpu.memory_space<vmem>>, vector<28x40xf32>
    %c1 = arith.constant 1 : index
    %c0_10 = arith.constant 0 : index
    %7 = tpu.strided_load %arg13[%c1, %c0_10] {strides = array<i32: 2, 1>} : memref<784x40xf32, #tpu.memory_space<vmem>>, vector<28x40xf32>
    %8 = arith.maximumf %6, %7 : vector<28x40xf32>
    %9 = vector.extract_strided_slice %8 {offsets = [0, 0], sizes = [14, 40], strides = [1, 1]} : vector<28x40xf32> to vector<14x40xf32>
    %10 = vector.extract_strided_slice %8 {offsets = [14, 0], sizes = [14, 40], strides = [1, 1]} : vector<28x40xf32> to vector<14x40xf32>
    %11 = arith.maximumf %9, %10 : vector<14x40xf32>
    %12 = vector.broadcast %5 : vector<1x40xf32> to vector<14x40xf32>
    %13 = arith.addf %11, %12 : vector<14x40xf32>
    %cst_11 = arith.constant 0.000000e+00 : f32
    %14 = vector.broadcast %cst_11 : f32 to vector<14x40xf32>
    %15 = arith.maximumf %13, %14 : vector<14x40xf32>
    %16 = arith.truncf %15 : vector<14x40xf32> to vector<14x40xbf16>
    %c0_12 = arith.constant 0 : index
    %c0_13 = arith.constant 0 : index
    %17 = vector.load %arg14[%c0_12, %c0_13] : memref<196x40xbf16, #tpu.memory_space<vmem>>, vector<14x40xbf16>
    tpu.vector_store %arg14[%c0_12, %c0_13], %16 {strides = array<i32>} : memref<196x40xbf16, #tpu.memory_space<vmem>>, vector<14x40xbf16>,
    %c56 = arith.constant 56 : index
    %c0_14 = arith.constant 0 : index
    %18 = tpu.strided_load %arg13[%c56, %c0_14] {strides = array<i32: 2, 1>} : memref<784x40xf32, #tpu.memory_space<vmem>>, vector<28x40xf32>
    %c57 = arith.constant 57 : index
    %c0_15 = arith.constant 0 : index
    %19 = tpu.strided_load %arg13[%c57, %c0_15] {strides = array<i32: 2, 1>} : memref<784x40xf32, #tpu.memory_space<vmem>>, vector<28x40xf32>
    %20 = arith.maximumf %18, %19 : vector<28x40xf32>
    %21 = vector.extract_strided_slice %20 {offsets = [0, 0], sizes = [14, 40], strides = [1, 1]} : vector<28x40xf32> to vector<14x40xf32>
    %22 = vector.extract_strided_slice %20 {offsets = [14, 0], sizes = [14, 40], strides = [1, 1]} : vector<28x40xf32> to vector<14x40xf32>
    %23 = arith.maximumf %21, %22 : vector<14x40xf32>
    %24 = vector.broadcast %5 : vector<1x40xf32> to vector<14x40xf32>
    %25 = arith.addf %23, %24 : vector<14x40xf32>
    %cst_16 = arith.constant 0.000000e+00 : f32
    %26 = vector.broadcast %cst_16 : f32 to vector<14x40xf32>
    %27 = arith.maximumf %25, %26 : vector<14x40xf32>
    %28 = arith.truncf %27 : vector<14x40xf32> to vector<14x40xbf16>
    %c14 = arith.constant 14 : index
    %c0_17 = arith.constant 0 : index
    %29 = vector.load %arg14[%c14, %c0_17] : memref<196x40xbf16, #tpu.memory_space<vmem>>, vector<14x40xbf16>
    tpu.vector_store %arg14[%c14, %c0_17], %28 {strides = array<i32>} : memref<196x40xbf16, #tpu.memory_space<vmem>>, vector<14x40xbf16>,
    %c112 = arith.constant 112 : index
    %c0_18 = arith.constant 0 : index
    %30 = tpu.strided_load %arg13[%c112, %c0_18] {strides = array<i32: 2, 1>} : memref<784x40xf32, #tpu.memory_space<vmem>>, vector<28x40xf32>
    %c113 = arith.constant 113 : index
    %c0_19 = arith.constant 0 : index
    %31 = tpu.strided_load %arg13[%c113, %c0_19] {strides = array<i32: 2, 1>} : memref<784x40xf32, #tpu.memory_space<vmem>>, vector<28x40xf32>
    %32 = arith.maximumf %30, %31 : vector<28x40xf32>
    %33 = vector.extract_strided_slice %32 {offsets = [0, 0], sizes = [14, 40], strides = [1, 1]} : vector<28x40xf32> to vector<14x40xf32>
    %34 = vector.extract_strided_slice %32 {offsets = [14, 0], sizes = [14, 40], strides = [1, 1]} : vector<28x40xf32> to vector<14x40xf32>
    %35 = arith.maximumf %33, %34 : vector<14x40xf32>
    %36 = vector.broadcast %5 : vector<1x40xf32> to vector<14x40xf32>
    %37 = arith.addf %35, %36 : vector<14x40xf32>
    %cst_20 = arith.constant 0.000000e+00 : f32
    %38 = vector.broadcast %cst_20 : f32 to vector<14x40xf32>
    %39 = arith.maximumf %37, %38 : vector<14x40xf32>
    %40 = arith.truncf %39 : vector<14x40xf32> to vector<14x40xbf16>
    %c28 = arith.constant 28 : index
    %c0_21 = arith.constant 0 : index
    %41 = vector.load %arg14[%c28, %c0_21] : memref<196x40xbf16, #tpu.memory_space<vmem>>, vector<14x40xbf16>
    tpu.vector_store %arg14[%c28, %c0_21], %40 {strides = array<i32>} : memref<196x40xbf16, #tpu.memory_space<vmem>>, vector<14x40xbf16>,
    %c168 = arith.constant 168 : index
    %c0_22 = arith.constant 0 : index
    %42 = tpu.strided_load %arg13[%c168, %c0_22] {strides = array<i32: 2, 1>} : memref<784x40xf32, #tpu.memory_space<vmem>>, vector<28x40xf32>
    %c169 = arith.constant 169 : index
    %c0_23 = arith.constant 0 : index
    %43 = tpu.strided_load %arg13[%c169, %c0_23] {strides = array<i32: 2, 1>} : memref<784x40xf32, #tpu.memory_space<vmem>>, vector<28x40xf32>
    %44 = arith.maximumf %42, %43 : vector<28x40xf32>
    %45 = vector.extract_strided_slice %44 {offsets = [0, 0], sizes = [14, 40], strides = [1, 1]} : vector<28x40xf32> to vector<14x40xf32>
    %46 = vector.extract_strided_slice %44 {offsets = [14, 0], sizes = [14, 40], strides = [1, 1]} : vector<28x40xf32> to vector<14x40xf32>
    %47 = arith.maximumf %45, %46 : vector<14x40xf32>
    %48 = vector.broadcast %5 : vector<1x40xf32> to vector<14x40xf32>
    %49 = arith.addf %47, %48 : vector<14x40xf32>
    %cst_24 = arith.constant 0.000000e+00 : f32
    %50 = vector.broadcast %cst_24 : f32 to vector<14x40xf32>
    %51 = arith.maximumf %49, %50 : vector<14x40xf32>
    %52 = arith.truncf %51 : vector<14x40xf32> to vector<14x40xbf16>
    %c42 = arith.constant 42 : index
    %c0_25 = arith.constant 0 : index
    %53 = vector.load %arg14[%c42, %c0_25] : memref<196x40xbf16, #tpu.memory_space<vmem>>, vector<14x40xbf16>
    tpu.vector_store %arg14[%c42, %c0_25], %52 {strides = array<i32>} : memref<196x40xbf16, #tpu.memory_space<vmem>>, vector<14x40xbf16>,
    %c224 = arith.constant 224 : index
    %c0_26 = arith.constant 0 : index
    %54 = tpu.strided_load %arg13[%c224, %c0_26] {strides = array<i32: 2, 1>} : memref<784x40xf32, #tpu.memory_space<vmem>>, vector<28x40xf32>
    %c225 = arith.constant 225 : index
    %c0_27 = arith.constant 0 : index
    %55 = tpu.strided_load %arg13[%c225, %c0_27] {strides = array<i32: 2, 1>} : memref<784x40xf32, #tpu.memory_space<vmem>>, vector<28x40xf32>
    %56 = arith.maximumf %54, %55 : vector<28x40xf32>
    %57 = vector.extract_strided_slice %56 {offsets = [0, 0], sizes = [14, 40], strides = [1, 1]} : vector<28x40xf32> to vector<14x40xf32>
    %58 = vector.extract_strided_slice %56 {offsets = [14, 0], sizes = [14, 40], strides = [1, 1]} : vector<28x40xf32> to vector<14x40xf32>
    %59 = arith.maximumf %57, %58 : vector<14x40xf32>
    %60 = vector.broadcast %5 : vector<1x40xf32> to vector<14x40xf32>
    %61 = arith.addf %59, %60 : vector<14x40xf32>
    %cst_28 = arith.constant 0.000000e+00 : f32
    %62 = vector.broadcast %cst_28 : f32 to vector<14x40xf32>
    %63 = arith.maximumf %61, %62 : vector<14x40xf32>
    %64 = arith.truncf %63 : vector<14x40xf32> to vector<14x40xbf16>
    %c56_29 = arith.constant 56 : index
    %c0_30 = arith.constant 0 : index
    %65 = vector.load %arg14[%c56_29, %c0_30] : memref<196x40xbf16, #tpu.memory_space<vmem>>, vector<14x40xbf16>
    tpu.vector_store %arg14[%c56_29, %c0_30], %64 {strides = array<i32>} : memref<196x40xbf16, #tpu.memory_space<vmem>>, vector<14x40xbf16>,
    %c280 = arith.constant 280 : index
    %c0_31 = arith.constant 0 : index
    %66 = tpu.strided_load %arg13[%c280, %c0_31] {strides = array<i32: 2, 1>} : memref<784x40xf32, #tpu.memory_space<vmem>>, vector<28x40xf32>
    %c281 = arith.constant 281 : index
    %c0_32 = arith.constant 0 : index
    %67 = tpu.strided_load %arg13[%c281, %c0_32] {strides = array<i32: 2, 1>} : memref<784x40xf32, #tpu.memory_space<vmem>>, vector<28x40xf32>
    %68 = arith.maximumf %66, %67 : vector<28x40xf32>
    %69 = vector.extract_strided_slice %68 {offsets = [0, 0], sizes = [14, 40], strides = [1, 1]} : vector<28x40xf32> to vector<14x40xf32>
    %70 = vector.extract_strided_slice %68 {offsets = [14, 0], sizes = [14, 40], strides = [1, 1]} : vector<28x40xf32> to vector<14x40xf32>
    %71 = arith.maximumf %69, %70 : vector<14x40xf32>
    %72 = vector.broadcast %5 : vector<1x40xf32> to vector<14x40xf32>
    %73 = arith.addf %71, %72 : vector<14x40xf32>
    %cst_33 = arith.constant 0.000000e+00 : f32
    %74 = vector.broadcast %cst_33 : f32 to vector<14x40xf32>
    %75 = arith.maximumf %73, %74 : vector<14x40xf32>
    %76 = arith.truncf %75 : vector<14x40xf32> to vector<14x40xbf16>
    %c70 = arith.constant 70 : index
    %c0_34 = arith.constant 0 : index
    %77 = vector.load %arg14[%c70, %c0_34] : memref<196x40xbf16, #tpu.memory_space<vmem>>, vector<14x40xbf16>
    tpu.vector_store %arg14[%c70, %c0_34], %76 {strides = array<i32>} : memref<196x40xbf16, #tpu.memory_space<vmem>>, vector<14x40xbf16>,
    %c336 = arith.constant 336 : index
    %c0_35 = arith.constant 0 : index
    %78 = tpu.strided_load %arg13[%c336, %c0_35] {strides = array<i32: 2, 1>} : memref<784x40xf32, #tpu.memory_space<vmem>>, vector<28x40xf32>
    %c337 = arith.constant 337 : index
    %c0_36 = arith.constant 0 : index
    %79 = tpu.strided_load %arg13[%c337, %c0_36] {strides = array<i32: 2, 1>} : memref<784x40xf32, #tpu.memory_space<vmem>>, vector<28x40xf32>
    %80 = arith.maximumf %78, %79 : vector<28x40xf32>
    %81 = vector.extract_strided_slice %80 {offsets = [0, 0], sizes = [14, 40], strides = [1, 1]} : vector<28x40xf32> to vector<14x40xf32>
    %82 = vector.extract_strided_slice %80 {offsets = [14, 0], sizes = [14, 40], strides = [1, 1]} : vector<28x40xf32> to vector<14x40xf32>
    %83 = arith.maximumf %81, %82 : vector<14x40xf32>
    %84 = vector.broadcast %5 : vector<1x40xf32> to vector<14x40xf32>
    %85 = arith.addf %83, %84 : vector<14x40xf32>
    %cst_37 = arith.constant 0.000000e+00 : f32
    %86 = vector.broadcast %cst_37 : f32 to vector<14x40xf32>
    %87 = arith.maximumf %85, %86 : vector<14x40xf32>
    %88 = arith.truncf %87 : vector<14x40xf32> to vector<14x40xbf16>
    %c84 = arith.constant 84 : index
    %c0_38 = arith.constant 0 : index
    %89 = vector.load %arg14[%c84, %c0_38] : memref<196x40xbf16, #tpu.memory_space<vmem>>, vector<14x40xbf16>
    tpu.vector_store %arg14[%c84, %c0_38], %88 {strides = array<i32>} : memref<196x40xbf16, #tpu.memory_space<vmem>>, vector<14x40xbf16>,
    %c392 = arith.constant 392 : index
    %c0_39 = arith.constant 0 : index
    %90 = tpu.strided_load %arg13[%c392, %c0_39] {strides = array<i32: 2, 1>} : memref<784x40xf32, #tpu.memory_space<vmem>>, vector<28x40xf32>
    %c393 = arith.constant 393 : index
    %c0_40 = arith.constant 0 : index
    %91 = tpu.strided_load %arg13[%c393, %c0_40] {strides = array<i32: 2, 1>} : memref<784x40xf32, #tpu.memory_space<vmem>>, vector<28x40xf32>
    %92 = arith.maximumf %90, %91 : vector<28x40xf32>
    %93 = vector.extract_strided_slice %92 {offsets = [0, 0], sizes = [14, 40], strides = [1, 1]} : vector<28x40xf32> to vector<14x40xf32>
    %94 = vector.extract_strided_slice %92 {offsets = [14, 0], sizes = [14, 40], strides = [1, 1]} : vector<28x40xf32> to vector<14x40xf32>
    %95 = arith.maximumf %93, %94 : vector<14x40xf32>
    %96 = vector.broadcast %5 : vector<1x40xf32> to vector<14x40xf32>
    %97 = arith.addf %95, %96 : vector<14x40xf32>
    %cst_41 = arith.constant 0.000000e+00 : f32
    %98 = vector.broadcast %cst_41 : f32 to vector<14x40xf32>
    %99 = arith.maximumf %97, %98 : vector<14x40xf32>
    %100 = arith.truncf %99 : vector<14x40xf32> to vector<14x40xbf16>
    %c98 = arith.constant 98 : index
    %c0_42 = arith.constant 0 : index
    %101 = vector.load %arg14[%c98, %c0_42] : memref<196x40xbf16, #tpu.memory_space<vmem>>, vector<14x40xbf16>
    tpu.vector_store %arg14[%c98, %c0_42], %100 {strides = array<i32>} : memref<196x40xbf16, #tpu.memory_space<vmem>>, vector<14x40xbf16>,
    %c448 = arith.constant 448 : index
    %c0_43 = arith.constant 0 : index
    %102 = tpu.strided_load %arg13[%c448, %c0_43] {strides = array<i32: 2, 1>} : memref<784x40xf32, #tpu.memory_space<vmem>>, vector<28x40xf32>
    %c449 = arith.constant 449 : index
    %c0_44 = arith.constant 0 : index
    %103 = tpu.strided_load %arg13[%c449, %c0_44] {strides = array<i32: 2, 1>} : memref<784x40xf32, #tpu.memory_space<vmem>>, vector<28x40xf32>
    %104 = arith.maximumf %102, %103 : vector<28x40xf32>
    %105 = vector.extract_strided_slice %104 {offsets = [0, 0], sizes = [14, 40], strides = [1, 1]} : vector<28x40xf32> to vector<14x40xf32>
    %106 = vector.extract_strided_slice %104 {offsets = [14, 0], sizes = [14, 40], strides = [1, 1]} : vector<28x40xf32> to vector<14x40xf32>
    %107 = arith.maximumf %105, %106 : vector<14x40xf32>
    %108 = vector.broadcast %5 : vector<1x40xf32> to vector<14x40xf32>
    %109 = arith.addf %107, %108 : vector<14x40xf32>
    %cst_45 = arith.constant 0.000000e+00 : f32
    %110 = vector.broadcast %cst_45 : f32 to vector<14x40xf32>
    %111 = arith.maximumf %109, %110 : vector<14x40xf32>
    %112 = arith.truncf %111 : vector<14x40xf32> to vector<14x40xbf16>
    %c112_46 = arith.constant 112 : index
    %c0_47 = arith.constant 0 : index
    %113 = vector.load %arg14[%c112_46, %c0_47] : memref<196x40xbf16, #tpu.memory_space<vmem>>, vector<14x40xbf16>
    tpu.vector_store %arg14[%c112_46, %c0_47], %112 {strides = array<i32>} : memref<196x40xbf16, #tpu.memory_space<vmem>>, vector<14x40xbf16>,
    %c504 = arith.constant 504 : index
    %c0_48 = arith.constant 0 : index
    %114 = tpu.strided_load %arg13[%c504, %c0_48] {strides = array<i32: 2, 1>} : memref<784x40xf32, #tpu.memory_space<vmem>>, vector<28x40xf32>
    %c505 = arith.constant 505 : index
    %c0_49 = arith.constant 0 : index
    %115 = tpu.strided_load %arg13[%c505, %c0_49] {strides = array<i32: 2, 1>} : memref<784x40xf32, #tpu.memory_space<vmem>>, vector<28x40xf32>
    %116 = arith.maximumf %114, %115 : vector<28x40xf32>
    %117 = vector.extract_strided_slice %116 {offsets = [0, 0], sizes = [14, 40], strides = [1, 1]} : vector<28x40xf32> to vector<14x40xf32>
    %118 = vector.extract_strided_slice %116 {offsets = [14, 0], sizes = [14, 40], strides = [1, 1]} : vector<28x40xf32> to vector<14x40xf32>
    %119 = arith.maximumf %117, %118 : vector<14x40xf32>
    %120 = vector.broadcast %5 : vector<1x40xf32> to vector<14x40xf32>
    %121 = arith.addf %119, %120 : vector<14x40xf32>
    %cst_50 = arith.constant 0.000000e+00 : f32
    %122 = vector.broadcast %cst_50 : f32 to vector<14x40xf32>
    %123 = arith.maximumf %121, %122 : vector<14x40xf32>
    %124 = arith.truncf %123 : vector<14x40xf32> to vector<14x40xbf16>
    %c126 = arith.constant 126 : index
    %c0_51 = arith.constant 0 : index
    %125 = vector.load %arg14[%c126, %c0_51] : memref<196x40xbf16, #tpu.memory_space<vmem>>, vector<14x40xbf16>
    tpu.vector_store %arg14[%c126, %c0_51], %124 {strides = array<i32>} : memref<196x40xbf16, #tpu.memory_space<vmem>>, vector<14x40xbf16>,
    %c560 = arith.constant 560 : index
    %c0_52 = arith.constant 0 : index
    %126 = tpu.strided_load %arg13[%c560, %c0_52] {strides = array<i32: 2, 1>} : memref<784x40xf32, #tpu.memory_space<vmem>>, vector<28x40xf32>
    %c561 = arith.constant 561 : index
    %c0_53 = arith.constant 0 : index
    %127 = tpu.strided_load %arg13[%c561, %c0_53] {strides = array<i32: 2, 1>} : memref<784x40xf32, #tpu.memory_space<vmem>>, vector<28x40xf32>
    %128 = arith.maximumf %126, %127 : vector<28x40xf32>
    %129 = vector.extract_strided_slice %128 {offsets = [0, 0], sizes = [14, 40], strides = [1, 1]} : vector<28x40xf32> to vector<14x40xf32>
    %130 = vector.extract_strided_slice %128 {offsets = [14, 0], sizes = [14, 40], strides = [1, 1]} : vector<28x40xf32> to vector<14x40xf32>
    %131 = arith.maximumf %129, %130 : vector<14x40xf32>
    %132 = vector.broadcast %5 : vector<1x40xf32> to vector<14x40xf32>
    %133 = arith.addf %131, %132 : vector<14x40xf32>
    %cst_54 = arith.constant 0.000000e+00 : f32
    %134 = vector.broadcast %cst_54 : f32 to vector<14x40xf32>
    %135 = arith.maximumf %133, %134 : vector<14x40xf32>
    %136 = arith.truncf %135 : vector<14x40xf32> to vector<14x40xbf16>
    %c140 = arith.constant 140 : index
    %c0_55 = arith.constant 0 : index
    %137 = vector.load %arg14[%c140, %c0_55] : memref<196x40xbf16, #tpu.memory_space<vmem>>, vector<14x40xbf16>
    tpu.vector_store %arg14[%c140, %c0_55], %136 {strides = array<i32>} : memref<196x40xbf16, #tpu.memory_space<vmem>>, vector<14x40xbf16>,
    %c616 = arith.constant 616 : index
    %c0_56 = arith.constant 0 : index
    %138 = tpu.strided_load %arg13[%c616, %c0_56] {strides = array<i32: 2, 1>} : memref<784x40xf32, #tpu.memory_space<vmem>>, vector<28x40xf32>
    %c617 = arith.constant 617 : index
    %c0_57 = arith.constant 0 : index
    %139 = tpu.strided_load %arg13[%c617, %c0_57] {strides = array<i32: 2, 1>} : memref<784x40xf32, #tpu.memory_space<vmem>>, vector<28x40xf32>
    %140 = arith.maximumf %138, %139 : vector<28x40xf32>
    %141 = vector.extract_strided_slice %140 {offsets = [0, 0], sizes = [14, 40], strides = [1, 1]} : vector<28x40xf32> to vector<14x40xf32>
    %142 = vector.extract_strided_slice %140 {offsets = [14, 0], sizes = [14, 40], strides = [1, 1]} : vector<28x40xf32> to vector<14x40xf32>
    %143 = arith.maximumf %141, %142 : vector<14x40xf32>
    %144 = vector.broadcast %5 : vector<1x40xf32> to vector<14x40xf32>
    %145 = arith.addf %143, %144 : vector<14x40xf32>
    %cst_58 = arith.constant 0.000000e+00 : f32
    %146 = vector.broadcast %cst_58 : f32 to vector<14x40xf32>
    %147 = arith.maximumf %145, %146 : vector<14x40xf32>
    %148 = arith.truncf %147 : vector<14x40xf32> to vector<14x40xbf16>
    %c154 = arith.constant 154 : index
    %c0_59 = arith.constant 0 : index
    %149 = vector.load %arg14[%c154, %c0_59] : memref<196x40xbf16, #tpu.memory_space<vmem>>, vector<14x40xbf16>
    tpu.vector_store %arg14[%c154, %c0_59], %148 {strides = array<i32>} : memref<196x40xbf16, #tpu.memory_space<vmem>>, vector<14x40xbf16>,
    %c672 = arith.constant 672 : index
    %c0_60 = arith.constant 0 : index
    %150 = tpu.strided_load %arg13[%c672, %c0_60] {strides = array<i32: 2, 1>} : memref<784x40xf32, #tpu.memory_space<vmem>>, vector<28x40xf32>
    %c673 = arith.constant 673 : index
    %c0_61 = arith.constant 0 : index
    %151 = tpu.strided_load %arg13[%c673, %c0_61] {strides = array<i32: 2, 1>} : memref<784x40xf32, #tpu.memory_space<vmem>>, vector<28x40xf32>
    %152 = arith.maximumf %150, %151 : vector<28x40xf32>
    %153 = vector.extract_strided_slice %152 {offsets = [0, 0], sizes = [14, 40], strides = [1, 1]} : vector<28x40xf32> to vector<14x40xf32>
    %154 = vector.extract_strided_slice %152 {offsets = [14, 0], sizes = [14, 40], strides = [1, 1]} : vector<28x40xf32> to vector<14x40xf32>
    %155 = arith.maximumf %153, %154 : vector<14x40xf32>
    %156 = vector.broadcast %5 : vector<1x40xf32> to vector<14x40xf32>
    %157 = arith.addf %155, %156 : vector<14x40xf32>
    %cst_62 = arith.constant 0.000000e+00 : f32
    %158 = vector.broadcast %cst_62 : f32 to vector<14x40xf32>
    %159 = arith.maximumf %157, %158 : vector<14x40xf32>
    %160 = arith.truncf %159 : vector<14x40xf32> to vector<14x40xbf16>
    %c168_63 = arith.constant 168 : index
    %c0_64 = arith.constant 0 : index
    %161 = vector.load %arg14[%c168_63, %c0_64] : memref<196x40xbf16, #tpu.memory_space<vmem>>, vector<14x40xbf16>
    tpu.vector_store %arg14[%c168_63, %c0_64], %160 {strides = array<i32>} : memref<196x40xbf16, #tpu.memory_space<vmem>>, vector<14x40xbf16>,
    %c728 = arith.constant 728 : index
    %c0_65 = arith.constant 0 : index
    %162 = tpu.strided_load %arg13[%c728, %c0_65] {strides = array<i32: 2, 1>} : memref<784x40xf32, #tpu.memory_space<vmem>>, vector<28x40xf32>
    %c729 = arith.constant 729 : index
    %c0_66 = arith.constant 0 : index
    %163 = tpu.strided_load %arg13[%c729, %c0_66] {strides = array<i32: 2, 1>} : memref<784x40xf32, #tpu.memory_space<vmem>>, vector<28x40xf32>
    %164 = arith.maximumf %162, %163 : vector<28x40xf32>
    %165 = vector.extract_strided_slice %164 {offsets = [0, 0], sizes = [14, 40], strides = [1, 1]} : vector<28x40xf32> to vector<14x40xf32>
    %166 = vector.extract_strided_slice %164 {offsets = [14, 0], sizes = [14, 40], strides = [1, 1]} : vector<28x40xf32> to vector<14x40xf32>
    %167 = arith.maximumf %165, %166 : vector<14x40xf32>
    %168 = vector.broadcast %5 : vector<1x40xf32> to vector<14x40xf32>
    %169 = arith.addf %167, %168 : vector<14x40xf32>
    %cst_67 = arith.constant 0.000000e+00 : f32
    %170 = vector.broadcast %cst_67 : f32 to vector<14x40xf32>
    %171 = arith.maximumf %169, %170 : vector<14x40xf32>
    %172 = arith.truncf %171 : vector<14x40xf32> to vector<14x40xbf16>
    %c182 = arith.constant 182 : index
    %c0_68 = arith.constant 0 : index
    %173 = vector.load %arg14[%c182, %c0_68] : memref<196x40xbf16, #tpu.memory_space<vmem>>, vector<14x40xbf16>
    tpu.vector_store %arg14[%c182, %c0_68], %172 {strides = array<i32>} : memref<196x40xbf16, #tpu.memory_space<vmem>>, vector<14x40xbf16>,
    %c0_69 = arith.constant 0 : index
    %c0_70 = arith.constant 0 : index
    %174 = vector.load %arg14[%c0_69, %c0_70] : memref<196x40xbf16, #tpu.memory_space<vmem>>, vector<140x40xbf16>
    %c0_71 = arith.constant 0 : index
    %c0_72 = arith.constant 0 : index
    %c0_73 = arith.constant 0 : index
    %175 = vector.load %arg4[%c0_71, %c0_72, %c0_73] : memref<5x40x16xbf16, #tpu.memory_space<vmem>>, vector<1x40x16xbf16>
    %176 = vector.shape_cast %175 : vector<1x40x16xbf16> to vector<40x16xbf16>
    %cst_74 = arith.constant dense<0.000000e+00> : vector<140x16xf32>
    %177 = tpu.matmul %174, %176, %cst_74 {dimension_numbers = #tpu.dot_dimension_numbers<[1], [0], [0], [1], [0, 0, 1, 1], [], []>} : vector<140x40xbf16>, vector<40x16xbf16>, vector<140x16xf32> -> vector<140x16xf32>
    %c0_75 = arith.constant 0 : index
    %c0_76 = arith.constant 0 : index
    %178 = vector.load %arg15[%c0_75, %c0_76] : memref<140x16xf32, #tpu.memory_space<vmem>>, vector<140x16xf32>
    tpu.vector_store %arg15[%c0_75, %c0_76], %177 {strides = array<i32>} : memref<140x16xf32, #tpu.memory_space<vmem>>, vector<140x16xf32>,
    %c14_77 = arith.constant 14 : index
    %c0_78 = arith.constant 0 : index
    %179 = vector.load %arg14[%c14_77, %c0_78] : memref<196x40xbf16, #tpu.memory_space<vmem>>, vector<140x40xbf16>
    %c1_79 = arith.constant 1 : index
    %c0_80 = arith.constant 0 : index
    %c0_81 = arith.constant 0 : index
    %180 = vector.load %arg4[%c1_79, %c0_80, %c0_81] : memref<5x40x16xbf16, #tpu.memory_space<vmem>>, vector<1x40x16xbf16>
    %181 = vector.shape_cast %180 : vector<1x40x16xbf16> to vector<40x16xbf16>
    %cst_82 = arith.constant dense<0.000000e+00> : vector<140x16xf32>
    %182 = tpu.matmul %179, %181, %cst_82 {dimension_numbers = #tpu.dot_dimension_numbers<[1], [0], [0], [1], [0, 0, 1, 1], [], []>} : vector<140x40xbf16>, vector<40x16xbf16>, vector<140x16xf32> -> vector<140x16xf32>
    %c0_83 = arith.constant 0 : index
    %c0_84 = arith.constant 0 : index
    %183 = vector.load %arg15[%c0_83, %c0_84] : memref<140x16xf32, #tpu.memory_space<vmem>>, vector<140x16xf32>
    %184 = arith.addf %183, %182 : vector<140x16xf32>
    %c0_85 = arith.constant 0 : index
    %c0_86 = arith.constant 0 : index
    %185 = vector.load %arg15[%c0_85, %c0_86] : memref<140x16xf32, #tpu.memory_space<vmem>>, vector<140x16xf32>
    tpu.vector_store %arg15[%c0_85, %c0_86], %184 {strides = array<i32>} : memref<140x16xf32, #tpu.memory_space<vmem>>, vector<140x16xf32>,
    %c28_87 = arith.constant 28 : index
    %c0_88 = arith.constant 0 : index
    %186 = vector.load %arg14[%c28_87, %c0_88] : memref<196x40xbf16, #tpu.memory_space<vmem>>, vector<140x40xbf16>
    %c2 = arith.constant 2 : index
    %c0_89 = arith.constant 0 : index
    %c0_90 = arith.constant 0 : index
    %187 = vector.load %arg4[%c2, %c0_89, %c0_90] : memref<5x40x16xbf16, #tpu.memory_space<vmem>>, vector<1x40x16xbf16>
    %188 = vector.shape_cast %187 : vector<1x40x16xbf16> to vector<40x16xbf16>
    %cst_91 = arith.constant dense<0.000000e+00> : vector<140x16xf32>
    %189 = tpu.matmul %186, %188, %cst_91 {dimension_numbers = #tpu.dot_dimension_numbers<[1], [0], [0], [1], [0, 0, 1, 1], [], []>} : vector<140x40xbf16>, vector<40x16xbf16>, vector<140x16xf32> -> vector<140x16xf32>
    %c0_92 = arith.constant 0 : index
    %c0_93 = arith.constant 0 : index
    %190 = vector.load %arg15[%c0_92, %c0_93] : memref<140x16xf32, #tpu.memory_space<vmem>>, vector<140x16xf32>
    %191 = arith.addf %190, %189 : vector<140x16xf32>
    %c0_94 = arith.constant 0 : index
    %c0_95 = arith.constant 0 : index
    %192 = vector.load %arg15[%c0_94, %c0_95] : memref<140x16xf32, #tpu.memory_space<vmem>>, vector<140x16xf32>
    tpu.vector_store %arg15[%c0_94, %c0_95], %191 {strides = array<i32>} : memref<140x16xf32, #tpu.memory_space<vmem>>, vector<140x16xf32>,
    %c42_96 = arith.constant 42 : index
    %c0_97 = arith.constant 0 : index
    %193 = vector.load %arg14[%c42_96, %c0_97] : memref<196x40xbf16, #tpu.memory_space<vmem>>, vector<140x40xbf16>
    %c3 = arith.constant 3 : index
    %c0_98 = arith.constant 0 : index
    %c0_99 = arith.constant 0 : index
    %194 = vector.load %arg4[%c3, %c0_98, %c0_99] : memref<5x40x16xbf16, #tpu.memory_space<vmem>>, vector<1x40x16xbf16>
    %195 = vector.shape_cast %194 : vector<1x40x16xbf16> to vector<40x16xbf16>
    %cst_100 = arith.constant dense<0.000000e+00> : vector<140x16xf32>
    %196 = tpu.matmul %193, %195, %cst_100 {dimension_numbers = #tpu.dot_dimension_numbers<[1], [0], [0], [1], [0, 0, 1, 1], [], []>} : vector<140x40xbf16>, vector<40x16xbf16>, vector<140x16xf32> -> vector<140x16xf32>
    %c0_101 = arith.constant 0 : index
    %c0_102 = arith.constant 0 : index
    %197 = vector.load %arg15[%c0_101, %c0_102] : memref<140x16xf32, #tpu.memory_space<vmem>>, vector<140x16xf32>
    %198 = arith.addf %197, %196 : vector<140x16xf32>
    %c0_103 = arith.constant 0 : index
    %c0_104 = arith.constant 0 : index
    %199 = vector.load %arg15[%c0_103, %c0_104] : memref<140x16xf32, #tpu.memory_space<vmem>>, vector<140x16xf32>
    tpu.vector_store %arg15[%c0_103, %c0_104], %198 {strides = array<i32>} : memref<140x16xf32, #tpu.memory_space<vmem>>, vector<140x16xf32>,
    %c56_105 = arith.constant 56 : index
    %c0_106 = arith.constant 0 : index
    %200 = vector.load %arg14[%c56_105, %c0_106] : memref<196x40xbf16, #tpu.memory_space<vmem>>, vector<140x40xbf16>
    %c4 = arith.constant 4 : index
    %c0_107 = arith.constant 0 : index
    %c0_108 = arith.constant 0 : index
    %201 = vector.load %arg4[%c4, %c0_107, %c0_108] : memref<5x40x16xbf16, #tpu.memory_space<vmem>>, vector<1x40x16xbf16>
    %202 = vector.shape_cast %201 : vector<1x40x16xbf16> to vector<40x16xbf16>
    %cst_109 = arith.constant dense<0.000000e+00> : vector<140x16xf32>
    %203 = tpu.matmul %200, %202, %cst_109 {dimension_numbers = #tpu.dot_dimension_numbers<[1], [0], [0], [1], [0, 0, 1, 1], [], []>} : vector<140x40xbf16>, vector<40x16xbf16>, vector<140x16xf32> -> vector<140x16xf32>
    %c0_110 = arith.constant 0 : index
    %c0_111 = arith.constant 0 : index
    %204 = vector.load %arg15[%c0_110, %c0_111] : memref<140x16xf32, #tpu.memory_space<vmem>>, vector<140x16xf32>
    %205 = arith.addf %204, %203 : vector<140x16xf32>
    %c0_112 = arith.constant 0 : index
    %c0_113 = arith.constant 0 : index
    %206 = vector.load %arg15[%c0_112, %c0_113] : memref<140x16xf32, #tpu.memory_space<vmem>>, vector<140x16xf32>
    tpu.vector_store %arg15[%c0_112, %c0_113], %205 {strides = array<i32>} : memref<140x16xf32, #tpu.memory_space<vmem>>, vector<140x16xf32>,
    %c0_114 = arith.constant 0 : index
    %c0_115 = arith.constant 0 : index
    %207 = vector.load %arg5[%c0_114, %c0_115] : memref<1x16xf32, #tpu.memory_space<vmem>>, vector<1x16xf32>
    %c0_116 = arith.constant 0 : index
    %c0_117 = arith.constant 0 : index
    %208 = vector.load %arg7[%c0_116, %c0_117] : memref<1x128xf32, #tpu.memory_space<vmem>>, vector<1x128xf32>
    %c0_118 = arith.constant 0 : index
    %c0_119 = arith.constant 0 : index
    %209 = tpu.strided_load %arg15[%c0_118, %c0_119] {strides = array<i32: 2, 1>} : memref<140x16xf32, #tpu.memory_space<vmem>>, vector<14x16xf32>
    %c1_120 = arith.constant 1 : index
    %c0_121 = arith.constant 0 : index
    %210 = tpu.strided_load %arg15[%c1_120, %c0_121] {strides = array<i32: 2, 1>} : memref<140x16xf32, #tpu.memory_space<vmem>>, vector<14x16xf32>
    %211 = arith.maximumf %209, %210 : vector<14x16xf32>
    %212 = vector.extract_strided_slice %211 {offsets = [0, 0], sizes = [7, 16], strides = [1, 1]} : vector<14x16xf32> to vector<7x16xf32>
    %213 = vector.extract_strided_slice %211 {offsets = [7, 0], sizes = [7, 16], strides = [1, 1]} : vector<14x16xf32> to vector<7x16xf32>
    %214 = arith.maximumf %212, %213 : vector<7x16xf32>
    %215 = vector.broadcast %207 : vector<1x16xf32> to vector<7x16xf32>
    %216 = arith.addf %214, %215 : vector<7x16xf32>
    %cst_122 = arith.constant 0.000000e+00 : f32
    %217 = vector.broadcast %cst_122 : f32 to vector<7x16xf32>
    %218 = arith.maximumf %216, %217 : vector<7x16xf32>
    %219 = arith.truncf %218 : vector<7x16xf32> to vector<7x16xbf16>
    %220 = vector.extract_strided_slice %219 {offsets = [0, 0], sizes = [1, 16], strides = [1, 1]} : vector<7x16xbf16> to vector<1x16xbf16>
    %c0_123 = arith.constant 0 : index
    %c0_124 = arith.constant 0 : index
    %c0_125 = arith.constant 0 : index
    %221 = vector.load %arg6[%c0_123, %c0_124, %c0_125] : memref<25x16x128xbf16, #tpu.memory_space<vmem>>, vector<1x16x128xbf16>
    %222 = vector.shape_cast %221 : vector<1x16x128xbf16> to vector<16x128xbf16>
    %cst_126 = arith.constant dense<0.000000e+00> : vector<1x128xf32>
    %223 = tpu.matmul %220, %222, %cst_126 {dimension_numbers = #tpu.dot_dimension_numbers<[1], [0], [0], [1], [0, 0, 1, 1], [], []>} : vector<1x16xbf16>, vector<16x128xbf16>, vector<1x128xf32> -> vector<1x128xf32>
    %224 = arith.addf %208, %223 : vector<1x128xf32>
    %225 = vector.extract_strided_slice %219 {offsets = [1, 0], sizes = [1, 16], strides = [1, 1]} : vector<7x16xbf16> to vector<1x16xbf16>
    %c1_127 = arith.constant 1 : index
    %c0_128 = arith.constant 0 : index
    %c0_129 = arith.constant 0 : index
    %226 = vector.load %arg6[%c1_127, %c0_128, %c0_129] : memref<25x16x128xbf16, #tpu.memory_space<vmem>>, vector<1x16x128xbf16>
    %227 = vector.shape_cast %226 : vector<1x16x128xbf16> to vector<16x128xbf16>
    %cst_130 = arith.constant dense<0.000000e+00> : vector<1x128xf32>
    %228 = tpu.matmul %225, %227, %cst_130 {dimension_numbers = #tpu.dot_dimension_numbers<[1], [0], [0], [1], [0, 0, 1, 1], [], []>} : vector<1x16xbf16>, vector<16x128xbf16>, vector<1x128xf32> -> vector<1x128xf32>
    %229 = arith.addf %224, %228 : vector<1x128xf32>
    %230 = vector.extract_strided_slice %219 {offsets = [2, 0], sizes = [1, 16], strides = [1, 1]} : vector<7x16xbf16> to vector<1x16xbf16>
    %c2_131 = arith.constant 2 : index
    %c0_132 = arith.constant 0 : index
    %c0_133 = arith.constant 0 : index
    %231 = vector.load %arg6[%c2_131, %c0_132, %c0_133] : memref<25x16x128xbf16, #tpu.memory_space<vmem>>, vector<1x16x128xbf16>
    %232 = vector.shape_cast %231 : vector<1x16x128xbf16> to vector<16x128xbf16>
    %cst_134 = arith.constant dense<0.000000e+00> : vector<1x128xf32>
    %233 = tpu.matmul %230, %232, %cst_134 {dimension_numbers = #tpu.dot_dimension_numbers<[1], [0], [0], [1], [0, 0, 1, 1], [], []>} : vector<1x16xbf16>, vector<16x128xbf16>, vector<1x128xf32> -> vector<1x128xf32>
    %234 = arith.addf %229, %233 : vector<1x128xf32>
    %235 = vector.extract_strided_slice %219 {offsets = [3, 0], sizes = [1, 16], strides = [1, 1]} : vector<7x16xbf16> to vector<1x16xbf16>
    %c3_135 = arith.constant 3 : index
    %c0_136 = arith.constant 0 : index
    %c0_137 = arith.constant 0 : index
    %236 = vector.load %arg6[%c3_135, %c0_136, %c0_137] : memref<25x16x128xbf16, #tpu.memory_space<vmem>>, vector<1x16x128xbf16>
    %237 = vector.shape_cast %236 : vector<1x16x128xbf16> to vector<16x128xbf16>
    %cst_138 = arith.constant dense<0.000000e+00> : vector<1x128xf32>
    %238 = tpu.matmul %235, %237, %cst_138 {dimension_numbers = #tpu.dot_dimension_numbers<[1], [0], [0], [1], [0, 0, 1, 1], [], []>} : vector<1x16xbf16>, vector<16x128xbf16>, vector<1x128xf32> -> vector<1x128xf32>
    %239 = arith.addf %234, %238 : vector<1x128xf32>
    %240 = vector.extract_strided_slice %219 {offsets = [4, 0], sizes = [1, 16], strides = [1, 1]} : vector<7x16xbf16> to vector<1x16xbf16>
    %c4_139 = arith.constant 4 : index
    %c0_140 = arith.constant 0 : index
    %c0_141 = arith.constant 0 : index
    %241 = vector.load %arg6[%c4_139, %c0_140, %c0_141] : memref<25x16x128xbf16, #tpu.memory_space<vmem>>, vector<1x16x128xbf16>
    %242 = vector.shape_cast %241 : vector<1x16x128xbf16> to vector<16x128xbf16>
    %cst_142 = arith.constant dense<0.000000e+00> : vector<1x128xf32>
    %243 = tpu.matmul %240, %242, %cst_142 {dimension_numbers = #tpu.dot_dimension_numbers<[1], [0], [0], [1], [0, 0, 1, 1], [], []>} : vector<1x16xbf16>, vector<16x128xbf16>, vector<1x128xf32> -> vector<1x128xf32>
    %244 = arith.addf %239, %243 : vector<1x128xf32>
    %c28_143 = arith.constant 28 : index
    %c0_144 = arith.constant 0 : index
    %245 = tpu.strided_load %arg15[%c28_143, %c0_144] {strides = array<i32: 2, 1>} : memref<140x16xf32, #tpu.memory_space<vmem>>, vector<14x16xf32>
    %c29 = arith.constant 29 : index
    %c0_145 = arith.constant 0 : index
    %246 = tpu.strided_load %arg15[%c29, %c0_145] {strides = array<i32: 2, 1>} : memref<140x16xf32, #tpu.memory_space<vmem>>, vector<14x16xf32>
    %247 = arith.maximumf %245, %246 : vector<14x16xf32>
    %248 = vector.extract_strided_slice %247 {offsets = [0, 0], sizes = [7, 16], strides = [1, 1]} : vector<14x16xf32> to vector<7x16xf32>
    %249 = vector.extract_strided_slice %247 {offsets = [7, 0], sizes = [7, 16], strides = [1, 1]} : vector<14x16xf32> to vector<7x16xf32>
    %250 = arith.maximumf %248, %249 : vector<7x16xf32>
    %251 = vector.broadcast %207 : vector<1x16xf32> to vector<7x16xf32>
    %252 = arith.addf %250, %251 : vector<7x16xf32>
    %cst_146 = arith.constant 0.000000e+00 : f32
    %253 = vector.broadcast %cst_146 : f32 to vector<7x16xf32>
    %254 = arith.maximumf %252, %253 : vector<7x16xf32>
    %255 = arith.truncf %254 : vector<7x16xf32> to vector<7x16xbf16>
    %256 = vector.extract_strided_slice %255 {offsets = [0, 0], sizes = [1, 16], strides = [1, 1]} : vector<7x16xbf16> to vector<1x16xbf16>
    %c5 = arith.constant 5 : index
    %c0_147 = arith.constant 0 : index
    %c0_148 = arith.constant 0 : index
    %257 = vector.load %arg6[%c5, %c0_147, %c0_148] : memref<25x16x128xbf16, #tpu.memory_space<vmem>>, vector<1x16x128xbf16>
    %258 = vector.shape_cast %257 : vector<1x16x128xbf16> to vector<16x128xbf16>
    %cst_149 = arith.constant dense<0.000000e+00> : vector<1x128xf32>
    %259 = tpu.matmul %256, %258, %cst_149 {dimension_numbers = #tpu.dot_dimension_numbers<[1], [0], [0], [1], [0, 0, 1, 1], [], []>} : vector<1x16xbf16>, vector<16x128xbf16>, vector<1x128xf32> -> vector<1x128xf32>
    %260 = arith.addf %244, %259 : vector<1x128xf32>
    %261 = vector.extract_strided_slice %255 {offsets = [1, 0], sizes = [1, 16], strides = [1, 1]} : vector<7x16xbf16> to vector<1x16xbf16>
    %c6 = arith.constant 6 : index
    %c0_150 = arith.constant 0 : index
    %c0_151 = arith.constant 0 : index
    %262 = vector.load %arg6[%c6, %c0_150, %c0_151] : memref<25x16x128xbf16, #tpu.memory_space<vmem>>, vector<1x16x128xbf16>
    %263 = vector.shape_cast %262 : vector<1x16x128xbf16> to vector<16x128xbf16>
    %cst_152 = arith.constant dense<0.000000e+00> : vector<1x128xf32>
    %264 = tpu.matmul %261, %263, %cst_152 {dimension_numbers = #tpu.dot_dimension_numbers<[1], [0], [0], [1], [0, 0, 1, 1], [], []>} : vector<1x16xbf16>, vector<16x128xbf16>, vector<1x128xf32> -> vector<1x128xf32>
    %265 = arith.addf %260, %264 : vector<1x128xf32>
    %266 = vector.extract_strided_slice %255 {offsets = [2, 0], sizes = [1, 16], strides = [1, 1]} : vector<7x16xbf16> to vector<1x16xbf16>
    %c7 = arith.constant 7 : index
    %c0_153 = arith.constant 0 : index
    %c0_154 = arith.constant 0 : index
    %267 = vector.load %arg6[%c7, %c0_153, %c0_154] : memref<25x16x128xbf16, #tpu.memory_space<vmem>>, vector<1x16x128xbf16>
    %268 = vector.shape_cast %267 : vector<1x16x128xbf16> to vector<16x128xbf16>
    %cst_155 = arith.constant dense<0.000000e+00> : vector<1x128xf32>
    %269 = tpu.matmul %266, %268, %cst_155 {dimension_numbers = #tpu.dot_dimension_numbers<[1], [0], [0], [1], [0, 0, 1, 1], [], []>} : vector<1x16xbf16>, vector<16x128xbf16>, vector<1x128xf32> -> vector<1x128xf32>
    %270 = arith.addf %265, %269 : vector<1x128xf32>
    %271 = vector.extract_strided_slice %255 {offsets = [3, 0], sizes = [1, 16], strides = [1, 1]} : vector<7x16xbf16> to vector<1x16xbf16>
    %c8 = arith.constant 8 : index
    %c0_156 = arith.constant 0 : index
    %c0_157 = arith.constant 0 : index
    %272 = vector.load %arg6[%c8, %c0_156, %c0_157] : memref<25x16x128xbf16, #tpu.memory_space<vmem>>, vector<1x16x128xbf16>
    %273 = vector.shape_cast %272 : vector<1x16x128xbf16> to vector<16x128xbf16>
    %cst_158 = arith.constant dense<0.000000e+00> : vector<1x128xf32>
    %274 = tpu.matmul %271, %273, %cst_158 {dimension_numbers = #tpu.dot_dimension_numbers<[1], [0], [0], [1], [0, 0, 1, 1], [], []>} : vector<1x16xbf16>, vector<16x128xbf16>, vector<1x128xf32> -> vector<1x128xf32>
    %275 = arith.addf %270, %274 : vector<1x128xf32>
    %276 = vector.extract_strided_slice %255 {offsets = [4, 0], sizes = [1, 16], strides = [1, 1]} : vector<7x16xbf16> to vector<1x16xbf16>
    %c9 = arith.constant 9 : index
    %c0_159 = arith.constant 0 : index
    %c0_160 = arith.constant 0 : index
    %277 = vector.load %arg6[%c9, %c0_159, %c0_160] : memref<25x16x128xbf16, #tpu.memory_space<vmem>>, vector<1x16x128xbf16>
    %278 = vector.shape_cast %277 : vector<1x16x128xbf16> to vector<16x128xbf16>
    %cst_161 = arith.constant dense<0.000000e+00> : vector<1x128xf32>
    %279 = tpu.matmul %276, %278, %cst_161 {dimension_numbers = #tpu.dot_dimension_numbers<[1], [0], [0], [1], [0, 0, 1, 1], [], []>} : vector<1x16xbf16>, vector<16x128xbf16>, vector<1x128xf32> -> vector<1x128xf32>
    %280 = arith.addf %275, %279 : vector<1x128xf32>
    %c56_162 = arith.constant 56 : index
    %c0_163 = arith.constant 0 : index
    %281 = tpu.strided_load %arg15[%c56_162, %c0_163] {strides = array<i32: 2, 1>} : memref<140x16xf32, #tpu.memory_space<vmem>>, vector<14x16xf32>
    %c57_164 = arith.constant 57 : index
    %c0_165 = arith.constant 0 : index
    %282 = tpu.strided_load %arg15[%c57_164, %c0_165] {strides = array<i32: 2, 1>} : memref<140x16xf32, #tpu.memory_space<vmem>>, vector<14x16xf32>
    %283 = arith.maximumf %281, %282 : vector<14x16xf32>
    %284 = vector.extract_strided_slice %283 {offsets = [0, 0], sizes = [7, 16], strides = [1, 1]} : vector<14x16xf32> to vector<7x16xf32>
    %285 = vector.extract_strided_slice %283 {offsets = [7, 0], sizes = [7, 16], strides = [1, 1]} : vector<14x16xf32> to vector<7x16xf32>
    %286 = arith.maximumf %284, %285 : vector<7x16xf32>
    %287 = vector.broadcast %207 : vector<1x16xf32> to vector<7x16xf32>
    %288 = arith.addf %286, %287 : vector<7x16xf32>
    %cst_166 = arith.constant 0.000000e+00 : f32
    %289 = vector.broadcast %cst_166 : f32 to vector<7x16xf32>
    %290 = arith.maximumf %288, %289 : vector<7x16xf32>
    %291 = arith.truncf %290 : vector<7x16xf32> to vector<7x16xbf16>
    %292 = vector.extract_strided_slice %291 {offsets = [0, 0], sizes = [1, 16], strides = [1, 1]} : vector<7x16xbf16> to vector<1x16xbf16>
    %c10 = arith.constant 10 : index
    %c0_167 = arith.constant 0 : index
    %c0_168 = arith.constant 0 : index
    %293 = vector.load %arg6[%c10, %c0_167, %c0_168] : memref<25x16x128xbf16, #tpu.memory_space<vmem>>, vector<1x16x128xbf16>
    %294 = vector.shape_cast %293 : vector<1x16x128xbf16> to vector<16x128xbf16>
    %cst_169 = arith.constant dense<0.000000e+00> : vector<1x128xf32>
    %295 = tpu.matmul %292, %294, %cst_169 {dimension_numbers = #tpu.dot_dimension_numbers<[1], [0], [0], [1], [0, 0, 1, 1], [], []>} : vector<1x16xbf16>, vector<16x128xbf16>, vector<1x128xf32> -> vector<1x128xf32>
    %296 = arith.addf %280, %295 : vector<1x128xf32>
    %297 = vector.extract_strided_slice %291 {offsets = [1, 0], sizes = [1, 16], strides = [1, 1]} : vector<7x16xbf16> to vector<1x16xbf16>
    %c11 = arith.constant 11 : index
    %c0_170 = arith.constant 0 : index
    %c0_171 = arith.constant 0 : index
    %298 = vector.load %arg6[%c11, %c0_170, %c0_171] : memref<25x16x128xbf16, #tpu.memory_space<vmem>>, vector<1x16x128xbf16>
    %299 = vector.shape_cast %298 : vector<1x16x128xbf16> to vector<16x128xbf16>
    %cst_172 = arith.constant dense<0.000000e+00> : vector<1x128xf32>
    %300 = tpu.matmul %297, %299, %cst_172 {dimension_numbers = #tpu.dot_dimension_numbers<[1], [0], [0], [1], [0, 0, 1, 1], [], []>} : vector<1x16xbf16>, vector<16x128xbf16>, vector<1x128xf32> -> vector<1x128xf32>
    %301 = arith.addf %296, %300 : vector<1x128xf32>
    %302 = vector.extract_strided_slice %291 {offsets = [2, 0], sizes = [1, 16], strides = [1, 1]} : vector<7x16xbf16> to vector<1x16xbf16>
    %c12 = arith.constant 12 : index
    %c0_173 = arith.constant 0 : index
    %c0_174 = arith.constant 0 : index
    %303 = vector.load %arg6[%c12, %c0_173, %c0_174] : memref<25x16x128xbf16, #tpu.memory_space<vmem>>, vector<1x16x128xbf16>
    %304 = vector.shape_cast %303 : vector<1x16x128xbf16> to vector<16x128xbf16>
    %cst_175 = arith.constant dense<0.000000e+00> : vector<1x128xf32>
    %305 = tpu.matmul %302, %304, %cst_175 {dimension_numbers = #tpu.dot_dimension_numbers<[1], [0], [0], [1], [0, 0, 1, 1], [], []>} : vector<1x16xbf16>, vector<16x128xbf16>, vector<1x128xf32> -> vector<1x128xf32>
    %306 = arith.addf %301, %305 : vector<1x128xf32>
    %307 = vector.extract_strided_slice %291 {offsets = [3, 0], sizes = [1, 16], strides = [1, 1]} : vector<7x16xbf16> to vector<1x16xbf16>
    %c13 = arith.constant 13 : index
    %c0_176 = arith.constant 0 : index
    %c0_177 = arith.constant 0 : index
    %308 = vector.load %arg6[%c13, %c0_176, %c0_177] : memref<25x16x128xbf16, #tpu.memory_space<vmem>>, vector<1x16x128xbf16>
    %309 = vector.shape_cast %308 : vector<1x16x128xbf16> to vector<16x128xbf16>
    %cst_178 = arith.constant dense<0.000000e+00> : vector<1x128xf32>
    %310 = tpu.matmul %307, %309, %cst_178 {dimension_numbers = #tpu.dot_dimension_numbers<[1], [0], [0], [1], [0, 0, 1, 1], [], []>} : vector<1x16xbf16>, vector<16x128xbf16>, vector<1x128xf32> -> vector<1x128xf32>
    %311 = arith.addf %306, %310 : vector<1x128xf32>
    %312 = vector.extract_strided_slice %291 {offsets = [4, 0], sizes = [1, 16], strides = [1, 1]} : vector<7x16xbf16> to vector<1x16xbf16>
    %c14_179 = arith.constant 14 : index
    %c0_180 = arith.constant 0 : index
    %c0_181 = arith.constant 0 : index
    %313 = vector.load %arg6[%c14_179, %c0_180, %c0_181] : memref<25x16x128xbf16, #tpu.memory_space<vmem>>, vector<1x16x128xbf16>
    %314 = vector.shape_cast %313 : vector<1x16x128xbf16> to vector<16x128xbf16>
    %cst_182 = arith.constant dense<0.000000e+00> : vector<1x128xf32>
    %315 = tpu.matmul %312, %314, %cst_182 {dimension_numbers = #tpu.dot_dimension_numbers<[1], [0], [0], [1], [0, 0, 1, 1], [], []>} : vector<1x16xbf16>, vector<16x128xbf16>, vector<1x128xf32> -> vector<1x128xf32>
    %316 = arith.addf %311, %315 : vector<1x128xf32>
    %c84_183 = arith.constant 84 : index
    %c0_184 = arith.constant 0 : index
    %317 = tpu.strided_load %arg15[%c84_183, %c0_184] {strides = array<i32: 2, 1>} : memref<140x16xf32, #tpu.memory_space<vmem>>, vector<14x16xf32>
    %c85 = arith.constant 85 : index
    %c0_185 = arith.constant 0 : index
    %318 = tpu.strided_load %arg15[%c85, %c0_185] {strides = array<i32: 2, 1>} : memref<140x16xf32, #tpu.memory_space<vmem>>, vector<14x16xf32>
    %319 = arith.maximumf %317, %318 : vector<14x16xf32>
    %320 = vector.extract_strided_slice %319 {offsets = [0, 0], sizes = [7, 16], strides = [1, 1]} : vector<14x16xf32> to vector<7x16xf32>
    %321 = vector.extract_strided_slice %319 {offsets = [7, 0], sizes = [7, 16], strides = [1, 1]} : vector<14x16xf32> to vector<7x16xf32>
    %322 = arith.maximumf %320, %321 : vector<7x16xf32>
    %323 = vector.broadcast %207 : vector<1x16xf32> to vector<7x16xf32>
    %324 = arith.addf %322, %323 : vector<7x16xf32>
    %cst_186 = arith.constant 0.000000e+00 : f32
    %325 = vector.broadcast %cst_186 : f32 to vector<7x16xf32>
    %326 = arith.maximumf %324, %325 : vector<7x16xf32>
    %327 = arith.truncf %326 : vector<7x16xf32> to vector<7x16xbf16>
    %328 = vector.extract_strided_slice %327 {offsets = [0, 0], sizes = [1, 16], strides = [1, 1]} : vector<7x16xbf16> to vector<1x16xbf16>
    %c15 = arith.constant 15 : index
    %c0_187 = arith.constant 0 : index
    %c0_188 = arith.constant 0 : index
    %329 = vector.load %arg6[%c15, %c0_187, %c0_188] : memref<25x16x128xbf16, #tpu.memory_space<vmem>>, vector<1x16x128xbf16>
    %330 = vector.shape_cast %329 : vector<1x16x128xbf16> to vector<16x128xbf16>
    %cst_189 = arith.constant dense<0.000000e+00> : vector<1x128xf32>
    %331 = tpu.matmul %328, %330, %cst_189 {dimension_numbers = #tpu.dot_dimension_numbers<[1], [0], [0], [1], [0, 0, 1, 1], [], []>} : vector<1x16xbf16>, vector<16x128xbf16>, vector<1x128xf32> -> vector<1x128xf32>
    %332 = arith.addf %316, %331 : vector<1x128xf32>
    %333 = vector.extract_strided_slice %327 {offsets = [1, 0], sizes = [1, 16], strides = [1, 1]} : vector<7x16xbf16> to vector<1x16xbf16>
    %c16 = arith.constant 16 : index
    %c0_190 = arith.constant 0 : index
    %c0_191 = arith.constant 0 : index
    %334 = vector.load %arg6[%c16, %c0_190, %c0_191] : memref<25x16x128xbf16, #tpu.memory_space<vmem>>, vector<1x16x128xbf16>
    %335 = vector.shape_cast %334 : vector<1x16x128xbf16> to vector<16x128xbf16>
    %cst_192 = arith.constant dense<0.000000e+00> : vector<1x128xf32>
    %336 = tpu.matmul %333, %335, %cst_192 {dimension_numbers = #tpu.dot_dimension_numbers<[1], [0], [0], [1], [0, 0, 1, 1], [], []>} : vector<1x16xbf16>, vector<16x128xbf16>, vector<1x128xf32> -> vector<1x128xf32>
    %337 = arith.addf %332, %336 : vector<1x128xf32>
    %338 = vector.extract_strided_slice %327 {offsets = [2, 0], sizes = [1, 16], strides = [1, 1]} : vector<7x16xbf16> to vector<1x16xbf16>
    %c17 = arith.constant 17 : index
    %c0_193 = arith.constant 0 : index
    %c0_194 = arith.constant 0 : index
    %339 = vector.load %arg6[%c17, %c0_193, %c0_194] : memref<25x16x128xbf16, #tpu.memory_space<vmem>>, vector<1x16x128xbf16>
    %340 = vector.shape_cast %339 : vector<1x16x128xbf16> to vector<16x128xbf16>
    %cst_195 = arith.constant dense<0.000000e+00> : vector<1x128xf32>
    %341 = tpu.matmul %338, %340, %cst_195 {dimension_numbers = #tpu.dot_dimension_numbers<[1], [0], [0], [1], [0, 0, 1, 1], [], []>} : vector<1x16xbf16>, vector<16x128xbf16>, vector<1x128xf32> -> vector<1x128xf32>
    %342 = arith.addf %337, %341 : vector<1x128xf32>
    %343 = vector.extract_strided_slice %327 {offsets = [3, 0], sizes = [1, 16], strides = [1, 1]} : vector<7x16xbf16> to vector<1x16xbf16>
    %c18 = arith.constant 18 : index
    %c0_196 = arith.constant 0 : index
    %c0_197 = arith.constant 0 : index
    %344 = vector.load %arg6[%c18, %c0_196, %c0_197] : memref<25x16x128xbf16, #tpu.memory_space<vmem>>, vector<1x16x128xbf16>
    %345 = vector.shape_cast %344 : vector<1x16x128xbf16> to vector<16x128xbf16>
    %cst_198 = arith.constant dense<0.000000e+00> : vector<1x128xf32>
    %346 = tpu.matmul %343, %345, %cst_198 {dimension_numbers = #tpu.dot_dimension_numbers<[1], [0], [0], [1], [0, 0, 1, 1], [], []>} : vector<1x16xbf16>, vector<16x128xbf16>, vector<1x128xf32> -> vector<1x128xf32>
    %347 = arith.addf %342, %346 : vector<1x128xf32>
    %348 = vector.extract_strided_slice %327 {offsets = [4, 0], sizes = [1, 16], strides = [1, 1]} : vector<7x16xbf16> to vector<1x16xbf16>
    %c19 = arith.constant 19 : index
    %c0_199 = arith.constant 0 : index
    %c0_200 = arith.constant 0 : index
    %349 = vector.load %arg6[%c19, %c0_199, %c0_200] : memref<25x16x128xbf16, #tpu.memory_space<vmem>>, vector<1x16x128xbf16>
    %350 = vector.shape_cast %349 : vector<1x16x128xbf16> to vector<16x128xbf16>
    %cst_201 = arith.constant dense<0.000000e+00> : vector<1x128xf32>
    %351 = tpu.matmul %348, %350, %cst_201 {dimension_numbers = #tpu.dot_dimension_numbers<[1], [0], [0], [1], [0, 0, 1, 1], [], []>} : vector<1x16xbf16>, vector<16x128xbf16>, vector<1x128xf32> -> vector<1x128xf32>
    %352 = arith.addf %347, %351 : vector<1x128xf32>
    %c112_202 = arith.constant 112 : index
    %c0_203 = arith.constant 0 : index
    %353 = tpu.strided_load %arg15[%c112_202, %c0_203] {strides = array<i32: 2, 1>} : memref<140x16xf32, #tpu.memory_space<vmem>>, vector<14x16xf32>
    %c113_204 = arith.constant 113 : index
    %c0_205 = arith.constant 0 : index
    %354 = tpu.strided_load %arg15[%c113_204, %c0_205] {strides = array<i32: 2, 1>} : memref<140x16xf32, #tpu.memory_space<vmem>>, vector<14x16xf32>
    %355 = arith.maximumf %353, %354 : vector<14x16xf32>
    %356 = vector.extract_strided_slice %355 {offsets = [0, 0], sizes = [7, 16], strides = [1, 1]} : vector<14x16xf32> to vector<7x16xf32>
    %357 = vector.extract_strided_slice %355 {offsets = [7, 0], sizes = [7, 16], strides = [1, 1]} : vector<14x16xf32> to vector<7x16xf32>
    %358 = arith.maximumf %356, %357 : vector<7x16xf32>
    %359 = vector.broadcast %207 : vector<1x16xf32> to vector<7x16xf32>
    %360 = arith.addf %358, %359 : vector<7x16xf32>
    %cst_206 = arith.constant 0.000000e+00 : f32
    %361 = vector.broadcast %cst_206 : f32 to vector<7x16xf32>
    %362 = arith.maximumf %360, %361 : vector<7x16xf32>
    %363 = arith.truncf %362 : vector<7x16xf32> to vector<7x16xbf16>
    %364 = vector.extract_strided_slice %363 {offsets = [0, 0], sizes = [1, 16], strides = [1, 1]} : vector<7x16xbf16> to vector<1x16xbf16>
    %c20 = arith.constant 20 : index
    %c0_207 = arith.constant 0 : index
    %c0_208 = arith.constant 0 : index
    %365 = vector.load %arg6[%c20, %c0_207, %c0_208] : memref<25x16x128xbf16, #tpu.memory_space<vmem>>, vector<1x16x128xbf16>
    %366 = vector.shape_cast %365 : vector<1x16x128xbf16> to vector<16x128xbf16>
    %cst_209 = arith.constant dense<0.000000e+00> : vector<1x128xf32>
    %367 = tpu.matmul %364, %366, %cst_209 {dimension_numbers = #tpu.dot_dimension_numbers<[1], [0], [0], [1], [0, 0, 1, 1], [], []>} : vector<1x16xbf16>, vector<16x128xbf16>, vector<1x128xf32> -> vector<1x128xf32>
    %368 = arith.addf %352, %367 : vector<1x128xf32>
    %369 = vector.extract_strided_slice %363 {offsets = [1, 0], sizes = [1, 16], strides = [1, 1]} : vector<7x16xbf16> to vector<1x16xbf16>
    %c21 = arith.constant 21 : index
    %c0_210 = arith.constant 0 : index
    %c0_211 = arith.constant 0 : index
    %370 = vector.load %arg6[%c21, %c0_210, %c0_211] : memref<25x16x128xbf16, #tpu.memory_space<vmem>>, vector<1x16x128xbf16>
    %371 = vector.shape_cast %370 : vector<1x16x128xbf16> to vector<16x128xbf16>
    %cst_212 = arith.constant dense<0.000000e+00> : vector<1x128xf32>
    %372 = tpu.matmul %369, %371, %cst_212 {dimension_numbers = #tpu.dot_dimension_numbers<[1], [0], [0], [1], [0, 0, 1, 1], [], []>} : vector<1x16xbf16>, vector<16x128xbf16>, vector<1x128xf32> -> vector<1x128xf32>
    %373 = arith.addf %368, %372 : vector<1x128xf32>
    %374 = vector.extract_strided_slice %363 {offsets = [2, 0], sizes = [1, 16], strides = [1, 1]} : vector<7x16xbf16> to vector<1x16xbf16>
    %c22 = arith.constant 22 : index
    %c0_213 = arith.constant 0 : index
    %c0_214 = arith.constant 0 : index
    %375 = vector.load %arg6[%c22, %c0_213, %c0_214] : memref<25x16x128xbf16, #tpu.memory_space<vmem>>, vector<1x16x128xbf16>
    %376 = vector.shape_cast %375 : vector<1x16x128xbf16> to vector<16x128xbf16>
    %cst_215 = arith.constant dense<0.000000e+00> : vector<1x128xf32>
    %377 = tpu.matmul %374, %376, %cst_215 {dimension_numbers = #tpu.dot_dimension_numbers<[1], [0], [0], [1], [0, 0, 1, 1], [], []>} : vector<1x16xbf16>, vector<16x128xbf16>, vector<1x128xf32> -> vector<1x128xf32>
    %378 = arith.addf %373, %377 : vector<1x128xf32>
    %379 = vector.extract_strided_slice %363 {offsets = [3, 0], sizes = [1, 16], strides = [1, 1]} : vector<7x16xbf16> to vector<1x16xbf16>
    %c23 = arith.constant 23 : index
    %c0_216 = arith.constant 0 : index
    %c0_217 = arith.constant 0 : index
    %380 = vector.load %arg6[%c23, %c0_216, %c0_217] : memref<25x16x128xbf16, #tpu.memory_space<vmem>>, vector<1x16x128xbf16>
    %381 = vector.shape_cast %380 : vector<1x16x128xbf16> to vector<16x128xbf16>
    %cst_218 = arith.constant dense<0.000000e+00> : vector<1x128xf32>
    %382 = tpu.matmul %379, %381, %cst_218 {dimension_numbers = #tpu.dot_dimension_numbers<[1], [0], [0], [1], [0, 0, 1, 1], [], []>} : vector<1x16xbf16>, vector<16x128xbf16>, vector<1x128xf32> -> vector<1x128xf32>
    %383 = arith.addf %378, %382 : vector<1x128xf32>
    %384 = vector.extract_strided_slice %363 {offsets = [4, 0], sizes = [1, 16], strides = [1, 1]} : vector<7x16xbf16> to vector<1x16xbf16>
    %c24 = arith.constant 24 : index
    %c0_219 = arith.constant 0 : index
    %c0_220 = arith.constant 0 : index
    %385 = vector.load %arg6[%c24, %c0_219, %c0_220] : memref<25x16x128xbf16, #tpu.memory_space<vmem>>, vector<1x16x128xbf16>
    %386 = vector.shape_cast %385 : vector<1x16x128xbf16> to vector<16x128xbf16>
    %cst_221 = arith.constant dense<0.000000e+00> : vector<1x128xf32>
    %387 = tpu.matmul %384, %386, %cst_221 {dimension_numbers = #tpu.dot_dimension_numbers<[1], [0], [0], [1], [0, 0, 1, 1], [], []>} : vector<1x16xbf16>, vector<16x128xbf16>, vector<1x128xf32> -> vector<1x128xf32>
    %388 = arith.addf %383, %387 : vector<1x128xf32>
    %cst_222 = arith.constant 0.000000e+00 : f32
    %389 = vector.broadcast %cst_222 : f32 to vector<1x128xf32>
    %390 = arith.maximumf %388, %389 : vector<1x128xf32>
    %391 = arith.truncf %390 : vector<1x128xf32> to vector<1x128xbf16>
    %c0_223 = arith.constant 0 : index
    %c0_224 = arith.constant 0 : index
    %392 = vector.load %arg8[%c0_223, %c0_224] : memref<128x128xbf16, #tpu.memory_space<vmem>>, vector<128x128xbf16>
    %cst_225 = arith.constant dense<0.000000e+00> : vector<1x128xf32>
    %393 = tpu.matmul %391, %392, %cst_225 {dimension_numbers = #tpu.dot_dimension_numbers<[1], [0], [0], [1], [0, 0, 1, 1], [], []>} : vector<1x128xbf16>, vector<128x128xbf16>, vector<1x128xf32> -> vector<1x128xf32>
    %c0_226 = arith.constant 0 : index
    %c0_227 = arith.constant 0 : index
    %394 = vector.load %arg9[%c0_226, %c0_227] : memref<1x128xf32, #tpu.memory_space<vmem>>, vector<1x128xf32>
    %395 = arith.addf %393, %394 : vector<1x128xf32>
    %cst_228 = arith.constant 0.000000e+00 : f32
    %396 = vector.broadcast %cst_228 : f32 to vector<1x128xf32>
    %397 = arith.maximumf %395, %396 : vector<1x128xf32>
    %398 = arith.truncf %397 : vector<1x128xf32> to vector<1x128xbf16>
    %c0_229 = arith.constant 0 : index
    %c0_230 = arith.constant 0 : index
    %399 = vector.load %arg10[%c0_229, %c0_230] : memref<128x128xbf16, #tpu.memory_space<vmem>>, vector<128x128xbf16>
    %cst_231 = arith.constant dense<0.000000e+00> : vector<1x128xf32>
    %400 = tpu.matmul %398, %399, %cst_231 {dimension_numbers = #tpu.dot_dimension_numbers<[1], [0], [0], [1], [0, 0, 1, 1], [], []>} : vector<1x128xbf16>, vector<128x128xbf16>, vector<1x128xf32> -> vector<1x128xf32>
    %c0_232 = arith.constant 0 : index
    %c0_233 = arith.constant 0 : index
    %401 = vector.load %arg11[%c0_232, %c0_233] : memref<1x128xf32, #tpu.memory_space<vmem>>, vector<1x128xf32>
    %402 = arith.addf %400, %401 : vector<1x128xf32>
    %403 = vector.shape_cast %402 : vector<1x128xf32> to vector<1x128xf32>
    %404 = vector.broadcast %403 : vector<1x128xf32> to vector<8x128xf32>
    %c0_234 = arith.constant 0 : index
    %c0_235 = arith.constant 0 : index
    %c0_236 = arith.constant 0 : index
    %405 = vector.load %arg12[%c0_234, %c0_235, %c0_236] : memref<1x8x128xf32, #tpu.memory_space<vmem>>, vector<1x8x128xf32>
    %406 = vector.shape_cast %405 : vector<1x8x128xf32> to vector<8x128xf32>
    %407 = vector.shape_cast %404 : vector<8x128xf32> to vector<1x8x128xf32>
    tpu.vector_store %arg12[%c0_234, %c0_235, %c0_236], %407 {strides = array<i32>} : memref<1x8x128xf32, #tpu.memory_space<vmem>>, vector<1x8x128xf32>,
    return
  }
  func.func @transform_0(%arg0: i32) -> (i32, i32, i32) {
    %c0_i32 = arith.constant 0 : i32
    %c0_i32_0 = arith.constant 0 : i32
    %c0_i32_1 = arith.constant 0 : i32
    return %arg0, %c0_i32, %c0_i32_0 : i32, i32, i32
  }
  func.func @transform_1(%arg0: i32) -> (i32, i32) {
    %c0_i32 = arith.constant 0 : i32
    %c0_i32_0 = arith.constant 0 : i32
    %c0_i32_1 = arith.constant 0 : i32
    return %c0_i32, %c0_i32_0 : i32, i32
  }
  func.func @transform_2(%arg0: i32) -> (i32, i32) {
    %c0_i32 = arith.constant 0 : i32
    %c0_i32_0 = arith.constant 0 : i32
    %c0_i32_1 = arith.constant 0 : i32
    return %c0_i32, %c0_i32_0 : i32, i32
  }
  func.func @transform_3(%arg0: i32) -> (i32, i32, i32) {
    %c0_i32 = arith.constant 0 : i32
    %c0_i32_0 = arith.constant 0 : i32
    %c0_i32_1 = arith.constant 0 : i32
    %c0_i32_2 = arith.constant 0 : i32
    return %c0_i32, %c0_i32_0, %c0_i32_1 : i32, i32, i32
  }
  func.func @transform_4(%arg0: i32) -> (i32, i32) {
    %c0_i32 = arith.constant 0 : i32
    %c0_i32_0 = arith.constant 0 : i32
    %c0_i32_1 = arith.constant 0 : i32
    return %c0_i32, %c0_i32_0 : i32, i32
  }
  func.func @transform_5(%arg0: i32) -> (i32, i32, i32) {
    %c0_i32 = arith.constant 0 : i32
    %c0_i32_0 = arith.constant 0 : i32
    %c0_i32_1 = arith.constant 0 : i32
    %c0_i32_2 = arith.constant 0 : i32
    return %c0_i32, %c0_i32_0, %c0_i32_1 : i32, i32, i32
  }
  func.func @transform_6(%arg0: i32) -> (i32, i32) {
    %c0_i32 = arith.constant 0 : i32
    %c0_i32_0 = arith.constant 0 : i32
    %c0_i32_1 = arith.constant 0 : i32
    return %c0_i32, %c0_i32_0 : i32, i32
  }
  func.func @transform_7(%arg0: i32) -> (i32, i32) {
    %c0_i32 = arith.constant 0 : i32
    %c0_i32_0 = arith.constant 0 : i32
    %c0_i32_1 = arith.constant 0 : i32
    return %c0_i32, %c0_i32_0 : i32, i32
  }
  func.func @transform_8(%arg0: i32) -> (i32, i32) {
    %c0_i32 = arith.constant 0 : i32
    %c0_i32_0 = arith.constant 0 : i32
    %c0_i32_1 = arith.constant 0 : i32
    return %c0_i32, %c0_i32_0 : i32, i32
  }
  func.func @transform_9(%arg0: i32) -> (i32, i32) {
    %c0_i32 = arith.constant 0 : i32
    %c0_i32_0 = arith.constant 0 : i32
    %c0_i32_1 = arith.constant 0 : i32
    return %c0_i32, %c0_i32_0 : i32, i32
  }
  func.func @transform_10(%arg0: i32) -> (i32, i32) {
    %c0_i32 = arith.constant 0 : i32
    %c0_i32_0 = arith.constant 0 : i32
    %c0_i32_1 = arith.constant 0 : i32
    return %c0_i32, %c0_i32_0 : i32, i32
  }
  func.func @transform_11(%arg0: i32) -> (i32, i32, i32) {
    %c0_i32 = arith.constant 0 : i32
    %c0_i32_0 = arith.constant 0 : i32
    %c0_i32_1 = arith.constant 0 : i32
    return %arg0, %c0_i32, %c0_i32_0 : i32, i32, i32
  }
}

</mosaic_0001>

<llo_original>
// kernel: net_forward.1
$region0: #{net_forward.1}
  #allocation0 [shape = 'u32[]', space=smem, size = 0x4, offset = 0x4, fixed_abs, tag = 'smem constant byte address 0x4 - core index']
  #allocation1 [shape = 'u32[144,128]{1,0:T(1,128)}', space=vmem, size = 0x12000, scoped, tag = 'internal scratch']
  #allocation2 [shape = 'f32[784,40]{1,0:T(8,128)}', space=vmem, size = 0x62000, scoped, tag = 'scratch operand']
  #allocation3 [shape = 'bf16[196,40]{1,0:T(8,128)(2,1)}', space=vmem, size = 0xc800, scoped, tag = 'scratch operand']
  #allocation4 [shape = 'f32[140,16]{1,0:T(8,128)}', space=vmem, size = 0x12000, scoped, tag = 'scratch operand']
  %s0 = inlined_call_operand.vmem [shape: bf16[2,784,256], index: 0, kind: input, shape index: {}]
  %s1 = inlined_call_operand.vmem [shape: bf16[256,40], index: 1, kind: input, shape index: {}]
  %s2 = inlined_call_operand.vmem [shape: f32[1,40], index: 2, kind: input, shape index: {}]
  %s3 = inlined_call_operand.vmem [shape: bf16[5,40,16], index: 3, kind: input, shape index: {}]
  %s4 = inlined_call_operand.vmem [shape: f32[1,16], index: 4, kind: input, shape index: {}]
  %s5 = inlined_call_operand.vmem [shape: bf16[25,16,128], index: 5, kind: input, shape index: {}]
  %s6 = inlined_call_operand.vmem [shape: f32[1,128], index: 6, kind: input, shape index: {}]
  %s7 = inlined_call_operand.vmem [shape: bf16[128,128], index: 7, kind: input, shape index: {}]
  %s8 = inlined_call_operand.vmem [shape: f32[1,128], index: 8, kind: input, shape index: {}]
  %s9 = inlined_call_operand.vmem [shape: bf16[128,128], index: 9, kind: input, shape index: {}]
  %s10 = inlined_call_operand.vmem [shape: f32[1,128], index: 10, kind: input, shape index: {}]
  %s11 = inlined_call_operand.vmem [shape: f32[2,8,128], index: 11, kind: output, shape index: {}]
  %s12 = sld [smem:[#allocation0]]
  $region77: #{net_forward.1} parent=0
    _
  %s14 = ssub.s32 1, %s12
  %s15 = scalar_select 0, %s14, %s12
  loop: start=0, step=1, limit=4
  $region2: #{net_forward.1} parent=0 // loop_pre_header
    _
  $region3: #{net_forward.1} parent=0 // loop_header
    %s17 = sphi 0, %s21
    %p18 = scmp.ge.s32.totalorder %s17, 4
    %s27 = sphi 0, %s29
    %s30 = sphi 0, %s27
    %s31 = sphi 0, %s30
    %s47 = sphi 0, %s31
    %s51 = sphi 0, %s51
    %s53 = sphi 0, %s51
    %s54 = sphi 0, %s53
    %s68 = sphi 0, %s54
    %s72 = sphi 0, %s72
    %s74 = sphi 0, %s72
    %s75 = sphi 0, %s74
    %s89 = sphi 0, %s75
    %s93 = sphi 0, %s93
    %s95 = sphi 0, %s93
    %s96 = sphi 0, %s95
    %s110 = sphi 0, %s96
    %s114 = sphi 0, %s114
    %s116 = sphi 0, %s114
    %s117 = sphi 0, %s116
    %s131 = sphi 0, %s117
    %s135 = sphi 0, %s135
    %s137 = sphi 0, %s135
    %s138 = sphi 0, %s137
    %s152 = sphi 0, %s138
    %s156 = sphi 0, %s156
    %s158 = sphi 0, %s156
    %s159 = sphi 0, %s158
    %s173 = sphi 0, %s159
    %s177 = sphi 0, %s177
    %s179 = sphi 0, %s177
    %s180 = sphi 0, %s179
    %s194 = sphi 0, %s180
    %s198 = sphi 0, %s198
    %s200 = sphi 0, %s198
    %s201 = sphi 0, %s200
    %s215 = sphi 0, %s201
    %s219 = sphi 0, %s219
    %s221 = sphi 0, %s219
    %s222 = sphi 0, %s221
    %s236 = sphi 0, %s222
    %s240 = sphi 0, %s240
    %s242 = sphi 0, %s240
    %s243 = sphi 0, %s242
    %s257 = sphi 0, %s243
    %s263 = sphi 0, %s265
    %s266 = sphi 0, %s263
    %s267 = sphi 0, %s266
    %s283 = sphi 0, %s267
  $region4: #{net_forward.1} parent=0 // loop_header_branch
    %20 = sbr.rel (%p18) target = $region8
  $region5: #{net_forward.1} parent=0 // loop_body
    %s22 = ssub.s32 %s17, 1
    %s23 = ssub.s32 %s17, 2
    %s24 = sadd.s32 %s17, 1
    %s25 = ssub.s32 %s17, %s24
    %p26 = scmp.eq.s32.totalorder %s25, 0
    %s28 = sadd.s32 %s27, 1
    %s29 = scalar_select %p26, %s27, %s28
    %p32 = pneg %p26
    %p33 = scmp.eq.s32.totalorder %s17, 1
    %p34 = por %p32, %p33
    %p35 = scmp.ne.s32.totalorder %s27, %s30
    %p36 = scmp.eq.s32.totalorder %s17, 0
    %p37 = por %p35, %p36
    %p38 = scmp.ne.s32.totalorder %s27, %s30
    %p39 = scmp.eq.s32.totalorder %s22, 1
    %p40 = por %p38, %p39
    %p41 = scmp.ne.s32.totalorder %s30, %s31
    %p42 = scmp.eq.s32.totalorder %s22, 0
    %p43 = por %p41, %p42
    %p44 = scmp.ne.s32.totalorder %s30, %s31
    %p45 = scmp.eq.s32.totalorder %s23, 1
    %p46 = por %p44, %p45
    %p48 = scmp.ne.s32.totalorder %s31, %s47
    %p49 = scmp.eq.s32.totalorder %s23, 0
    %p50 = por %p48, %p49
    %s52 = sadd.s32 %s51, 1
    %p55 = scmp.eq.s32.totalorder %s17, 1
    %p56 = scmp.ne.s32.totalorder %s51, %s53
    %p57 = scmp.eq.s32.totalorder %s17, 0
    %p58 = por %p56, %p57
    %p59 = scmp.ne.s32.totalorder %s51, %s53
    %p60 = scmp.eq.s32.totalorder %s22, 1
    %p61 = por %p59, %p60
    %p62 = scmp.ne.s32.totalorder %s53, %s54
    %p63 = scmp.eq.s32.totalorder %s22, 0
    %p64 = por %p62, %p63
    %p65 = scmp.ne.s32.totalorder %s53, %s54
    %p66 = scmp.eq.s32.totalorder %s23, 1
    %p67 = por %p65, %p66
    %p69 = scmp.ne.s32.totalorder %s54, %s68
    %p70 = scmp.eq.s32.totalorder %s23, 0
    %p71 = por %p69, %p70
    %s73 = sadd.s32 %s72, 1
    %p76 = scmp.eq.s32.totalorder %s17, 1
    %p77 = scmp.ne.s32.totalorder %s72, %s74
    %p78 = scmp.eq.s32.totalorder %s17, 0
    %p79 = por %p77, %p78
    %p80 = scmp.ne.s32.totalorder %s72, %s74
    %p81 = scmp.eq.s32.totalorder %s22, 1
    %p82 = por %p80, %p81
    %p83 = scmp.ne.s32.totalorder %s74, %s75
    %p84 = scmp.eq.s32.totalorder %s22, 0
    %p85 = por %p83, %p84
    %p86 = scmp.ne.s32.totalorder %s74, %s75
    %p87 = scmp.eq.s32.totalorder %s23, 1
    %p88 = por %p86, %p87
    %p90 = scmp.ne.s32.totalorder %s75, %s89
    %p91 = scmp.eq.s32.totalorder %s23, 0
    %p92 = por %p90, %p91
    %s94 = sadd.s32 %s93, 1
    %p97 = scmp.eq.s32.totalorder %s17, 1
    %p98 = scmp.ne.s32.totalorder %s93, %s95
    %p99 = scmp.eq.s32.totalorder %s17, 0
    %p100 = por %p98, %p99
    %p101 = scmp.ne.s32.totalorder %s93, %s95
    %p102 = scmp.eq.s32.totalorder %s22, 1
    %p103 = por %p101, %p102
    %p104 = scmp.ne.s32.totalorder %s95, %s96
    %p105 = scmp.eq.s32.totalorder %s22, 0
    %p106 = por %p104, %p105
    %p107 = scmp.ne.s32.totalorder %s95, %s96
    %p108 = scmp.eq.s32.totalorder %s23, 1
    %p109 = por %p107, %p108
    %p111 = scmp.ne.s32.totalorder %s96, %s110
    %p112 = scmp.eq.s32.totalorder %s23, 0
    %p113 = por %p111, %p112
    %s115 = sadd.s32 %s114, 1
    %p118 = scmp.eq.s32.totalorder %s17, 1
    %p119 = scmp.ne.s32.totalorder %s114, %s116
    %p120 = scmp.eq.s32.totalorder %s17, 0
    %p121 = por %p119, %p120
    %p122 = scmp.ne.s32.totalorder %s114, %s116
    %p123 = scmp.eq.s32.totalorder %s22, 1
    %p124 = por %p122, %p123
    %p125 = scmp.ne.s32.totalorder %s116, %s117
    %p126 = scmp.eq.s32.totalorder %s22, 0
    %p127 = por %p125, %p126
    %p128 = scmp.ne.s32.totalorder %s116, %s117
    %p129 = scmp.eq.s32.totalorder %s23, 1
    %p130 = por %p128, %p129
    %p132 = scmp.ne.s32.totalorder %s117, %s131
    %p133 = scmp.eq.s32.totalorder %s23, 0
    %p134 = por %p132, %p133
    %s136 = sadd.s32 %s135, 1
    %p139 = scmp.eq.s32.totalorder %s17, 1
    %p140 = scmp.ne.s32.totalorder %s135, %s137
    %p141 = scmp.eq.s32.totalorder %s17, 0
    %p142 = por %p140, %p141
    %p143 = scmp.ne.s32.totalorder %s135, %s137
    %p144 = scmp.eq.s32.totalorder %s22, 1
    %p145 = por %p143, %p144
    %p146 = scmp.ne.s32.totalorder %s137, %s138
    %p147 = scmp.eq.s32.totalorder %s22, 0
    %p148 = por %p146, %p147
    %p149 = scmp.ne.s32.totalorder %s137, %s138
    %p150 = scmp.eq.s32.totalorder %s23, 1
    %p151 = por %p149, %p150
    %p153 = scmp.ne.s32.totalorder %s138, %s152
    %p154 = scmp.eq.s32.totalorder %s23, 0
    %p155 = por %p153, %p154
    %s157 = sadd.s32 %s156, 1
    %p160 = scmp.eq.s32.totalorder %s17, 1
    %p161 = scmp.ne.s32.totalorder %s156, %s158
    %p162 = scmp.eq.s32.totalorder %s17, 0
    %p163 = por %p161, %p162
    %p164 = scmp.ne.s32.totalorder %s156, %s158
    %p165 = scmp.eq.s32.totalorder %s22, 1
    %p166 = por %p164, %p165
    %p167 = scmp.ne.s32.totalorder %s158, %s159
    %p168 = scmp.eq.s32.totalorder %s22, 0
    %p169 = por %p167, %p168
    %p170 = scmp.ne.s32.totalorder %s158, %s159
    %p171 = scmp.eq.s32.totalorder %s23, 1
    %p172 = por %p170, %p171
    %p174 = scmp.ne.s32.totalorder %s159, %s173
    %p175 = scmp.eq.s32.totalorder %s23, 0
    %p176 = por %p174, %p175
    %s178 = sadd.s32 %s177, 1
    %p181 = scmp.eq.s32.totalorder %s17, 1
    %p182 = scmp.ne.s32.totalorder %s177, %s179
    %p183 = scmp.eq.s32.totalorder %s17, 0
    %p184 = por %p182, %p183
    %p185 = scmp.ne.s32.totalorder %s177, %s179
    %p186 = scmp.eq.s32.totalorder %s22, 1
    %p187 = por %p185, %p186
    %p188 = scmp.ne.s32.totalorder %s179, %s180
    %p189 = scmp.eq.s32.totalorder %s22, 0
    %p190 = por %p188, %p189
    %p191 = scmp.ne.s32.totalorder %s179, %s180
    %p192 = scmp.eq.s32.totalorder %s23, 1
    %p193 = por %p191, %p192
    %p195 = scmp.ne.s32.totalorder %s180, %s194
    %p196 = scmp.eq.s32.totalorder %s23, 0
    %p197 = por %p195, %p196
    %s199 = sadd.s32 %s198, 1
    %p202 = scmp.eq.s32.totalorder %s17, 1
    %p203 = scmp.ne.s32.totalorder %s198, %s200
    %p204 = scmp.eq.s32.totalorder %s17, 0
    %p205 = por %p203, %p204
    %p206 = scmp.ne.s32.totalorder %s198, %s200
    %p207 = scmp.eq.s32.totalorder %s22, 1
    %p208 = por %p206, %p207
    %p209 = scmp.ne.s32.totalorder %s200, %s201
    %p210 = scmp.eq.s32.totalorder %s22, 0
    %p211 = por %p209, %p210
    %p212 = scmp.ne.s32.totalorder %s200, %s201
    %p213 = scmp.eq.s32.totalorder %s23, 1
    %p214 = por %p212, %p213
    %p216 = scmp.ne.s32.totalorder %s201, %s215
    %p217 = scmp.eq.s32.totalorder %s23, 0
    %p218 = por %p216, %p217
    %s220 = sadd.s32 %s219, 1
    %p223 = scmp.eq.s32.totalorder %s17, 1
    %p224 = scmp.ne.s32.totalorder %s219, %s221
    %p225 = scmp.eq.s32.totalorder %s17, 0
    %p226 = por %p224, %p225
    %p227 = scmp.ne.s32.totalorder %s219, %s221
    %p228 = scmp.eq.s32.totalorder %s22, 1
    %p229 = por %p227, %p228
    %p230 = scmp.ne.s32.totalorder %s221, %s222
    %p231 = scmp.eq.s32.totalorder %s22, 0
    %p232 = por %p230, %p231
    %p233 = scmp.ne.s32.totalorder %s221, %s222
    %p234 = scmp.eq.s32.totalorder %s23, 1
    %p235 = por %p233, %p234
    %p237 = scmp.ne.s32.totalorder %s222, %s236
    %p238 = scmp.eq.s32.totalorder %s23, 0
    %p239 = por %p237, %p238
    %s241 = sadd.s32 %s240, 1
    %p244 = scmp.eq.s32.totalorder %s17, 1
    %p245 = scmp.ne.s32.totalorder %s240, %s242
    %p246 = scmp.eq.s32.totalorder %s17, 0
    %p247 = por %p245, %p246
    %p248 = scmp.ne.s32.totalorder %s240, %s242
    %p249 = scmp.eq.s32.totalorder %s22, 1
    %p250 = por %p248, %p249
    %p251 = scmp.ne.s32.totalorder %s242, %s243
    %p252 = scmp.eq.s32.totalorder %s22, 0
    %p253 = por %p251, %p252
    %p254 = scmp.ne.s32.totalorder %s242, %s243
    %p255 = scmp.eq.s32.totalorder %s23, 1
    %p256 = por %p254, %p255
    %p258 = scmp.ne.s32.totalorder %s243, %s257
    %p259 = scmp.eq.s32.totalorder %s23, 0
    %p260 = por %p258, %p259
    %s261 = ssub.s32 %s17, %s24
    %p262 = scmp.eq.s32.totalorder %s261, 0
    %s264 = sadd.s32 %s263, 1
    %s265 = scalar_select %p262, %s263, %s264
    %p268 = pneg %p262
    %p269 = scmp.eq.s32.totalorder %s17, 1
    %p270 = por %p268, %p269
    %p271 = scmp.ne.s32.totalorder %s263, %s266
    %p272 = scmp.eq.s32.totalorder %s17, 0
    %p273 = por %p271, %p272
    %p274 = scmp.ne.s32.totalorder %s263, %s266
    %p275 = scmp.eq.s32.totalorder %s22, 1
    %p276 = por %p274, %p275
    %p277 = scmp.ne.s32.totalorder %s266, %s267
    %p278 = scmp.eq.s32.totalorder %s22, 0
    %p279 = por %p277, %p278
    %p280 = scmp.ne.s32.totalorder %s266, %s267
    %p281 = scmp.eq.s32.totalorder %s23, 1
    %p282 = por %p280, %p281
    %p284 = scmp.ne.s32.totalorder %s267, %s283
    %p285 = scmp.eq.s32.totalorder %s23, 0
    %p286 = por %p284, %p285
    %p287 = scmp.le.s32.totalorder 1, %s17
    %p288 = scmp.lt.s32.totalorder %s17, 3
    %p289 = pnand %p287, %p288
    %p290 = pneg %p289
    // Predicated region
    $region9: #{net_forward.1} parent=5 // pred_check
      _
    $region10: #{net_forward.1} parent=5 // pred_check_branch
      %292 = sbr.rel (%p289) target = $region12
    $region11: #{net_forward.1} parent=5 // pred_region
      %s293 = ssub.s32 %s17, 1
      // Predicated region
      $region13: #{net_forward.1} parent=11 // pred_check
        %p294 = pneg %p64
      $region14: #{net_forward.1} parent=11 // pred_check_branch
        %296 = sbr.rel (%p294) target = $region16
      $region15: #{net_forward.1} parent=11 // pred_region
        _
      $region16: #{net_forward.1} parent=11 // pred_fallthru
        _
      // Predicated region
      $region17: #{net_forward.1} parent=11 // pred_check
        %p297 = pneg %p85
      $region18: #{net_forward.1} parent=11 // pred_check_branch
        %299 = sbr.rel (%p297) target = $region20
      $region19: #{net_forward.1} parent=11 // pred_region
        _
      $region20: #{net_forward.1} parent=11 // pred_fallthru
        _
      // Predicated region
      $region21: #{net_forward.1} parent=11 // pred_check
        %p300 = pneg %p106
      $region22: #{net_forward.1} parent=11 // pred_check_branch
        %302 = sbr.rel (%p300) target = $region24
      $region23: #{net_forward.1} parent=11 // pred_region
        _
      $region24: #{net_forward.1} parent=11 // pred_fallthru
        _
      // Predicated region
      $region25: #{net_forward.1} parent=11 // pred_check
        %p303 = pneg %p127
      $region26: #{net_forward.1} parent=11 // pred_check_branch
        %305 = sbr.rel (%p303) target = $region28
      $region27: #{net_forward.1} parent=11 // pred_region
        _
      $region28: #{net_forward.1} parent=11 // pred_fallthru
        _
      // Predicated region
      $region29: #{net_forward.1} parent=11 // pred_check
        %p306 = pneg %p148
      $region30: #{net_forward.1} parent=11 // pred_check_branch
        %308 = sbr.rel (%p306) target = $region32
      $region31: #{net_forward.1} parent=11 // pred_region
        _
      $region32: #{net_forward.1} parent=11 // pred_fallthru
        _
      // Predicated region
      $region33: #{net_forward.1} parent=11 // pred_check
        %p309 = pneg %p169
      $region34: #{net_forward.1} parent=11 // pred_check_branch
        %311 = sbr.rel (%p309) target = $region36
      $region35: #{net_forward.1} parent=11 // pred_region
        _
      $region36: #{net_forward.1} parent=11 // pred_fallthru
        _
      // Predicated region
      $region37: #{net_forward.1} parent=11 // pred_check
        %p312 = pneg %p190
      $region38: #{net_forward.1} parent=11 // pred_check_branch
        %314 = sbr.rel (%p312) target = $region40
      $region39: #{net_forward.1} parent=11 // pred_region
        _
      $region40: #{net_forward.1} parent=11 // pred_fallthru
        _
      // Predicated region
      $region41: #{net_forward.1} parent=11 // pred_check
        %p315 = pneg %p211
      $region42: #{net_forward.1} parent=11 // pred_check_branch
        %317 = sbr.rel (%p315) target = $region44
      $region43: #{net_forward.1} parent=11 // pred_region
        _
      $region44: #{net_forward.1} parent=11 // pred_fallthru
        _
      // Predicated region
      $region45: #{net_forward.1} parent=11 // pred_check
        %p318 = pneg %p232
      $region46: #{net_forward.1} parent=11 // pred_check_branch
        %320 = sbr.rel (%p318) target = $region48
      $region47: #{net_forward.1} parent=11 // pred_region
        _
      $region48: #{net_forward.1} parent=11 // pred_fallthru
        _
      // Predicated region
      $region49: #{net_forward.1} parent=11 // pred_check
        %p321 = pneg %p253
      $region50: #{net_forward.1} parent=11 // pred_check_branch
        %323 = sbr.rel (%p321) target = $region52
      $region51: #{net_forward.1} parent=11 // pred_region
        _
      $region52: #{net_forward.1} parent=11 // pred_fallthru
        _
    $region12: #{net_forward.1} parent=5 // pred_fallthru
      _
    %p324 = scmp.lt.s32.totalorder %s17, 2
    // Predicated region
    $region53: #{net_forward.1} parent=5 // pred_check
      %p325 = pneg %p324
    $region54: #{net_forward.1} parent=5 // pred_check_branch
      %327 = sbr.rel (%p325) target = $region56
    $region55: #{net_forward.1} parent=5 // pred_region
      // Predicated region
      $region57: #{net_forward.1} parent=55 // pred_check
        %p328 = pneg %p37
      $region58: #{net_forward.1} parent=55 // pred_check_branch
        %330 = sbr.rel (%p328) target = $region60
      $region59: #{net_forward.1} parent=55 // pred_region
        %p331 = scmp.lt.s32.totalorder %s17, 1
        %s332 = scalar_select %p331, %s17, 1
        %s333 = smul.addr %s332, 196
        %s334 = smul.addr %s333, 4
        %s335 = scalar_lea.vmem %s0, %s334
      $region60: #{net_forward.1} parent=55 // pred_fallthru
        _
    $region56: #{net_forward.1} parent=5 // pred_fallthru
      _
    %p336 = scmp.le.s32.totalorder 1, %s17
    %p337 = scmp.lt.s32.totalorder %s17, 3
    %p338 = pnand %p336, %p337
    %p339 = pneg %p338
    // Predicated region
    $region61: #{net_forward.1} parent=5 // pred_check
      _
    $region62: #{net_forward.1} parent=5 // pred_check_branch
      %341 = sbr.rel (%p338) target = $region64
    $region63: #{net_forward.1} parent=5 // pred_region
      %s342 = ssub.s32 %s17, 1
      %p343 = scmp.lt.s32.totalorder %s22, 1
      %s344 = scalar_select %p343, %s22, 1
      %s345 = smul.addr %s344, 196
      %s346 = smul.addr %s345, 4
      %s347 = scalar_lea.vmem %s0, %s346
      %p348 = pneg %p43
      %p349 = pneg %p40
      %p350 = pneg %p64
      %p351 = pneg %p61
      %p352 = pneg %p85
      %p353 = pneg %p82
      %p354 = pneg %p106
      %p355 = pneg %p103
      %p356 = pneg %p127
      %p357 = pneg %p124
      %p358 = pneg %p148
      %p359 = pneg %p145
      %p360 = pneg %p169
      %p361 = pneg %p166
      %p362 = pneg %p190
      %p363 = pneg %p187
      %p364 = pneg %p211
      %p365 = pneg %p208
      %p366 = pneg %p232
      %p367 = pneg %p229
      %p368 = pneg %p253
      %p369 = pneg %p250
      %p370 = pneg %p279
      %p371 = pneg %p276
      %p372 = scmp.lt.s32.totalorder %s22, 1
      %s373 = scalar_select %p372, %s22, 1
      %s374 = smul.addr %s373, 8
      %s375 = scalar_lea.vmem %s11, %s374
      %p376 = scmp.lt.s32.totalorder %s22, 1
      %s377 = scalar_select %p376, %s22, 1
      %s378 = smul.addr %s377, 196
      %s379 = smul.addr %s378, 4
      %s380 = scalar_lea.vmem %s0, %s379
      %p381 = scmp.lt.s32.totalorder %s22, 1
      %s382 = scalar_select %p381, %s22, 1
      %s383 = smul.addr %s382, 8
      %s384 = scalar_lea.vmem %s11, %s383
      %v386 = vld [vmem:[%s380] sm:$0xff]
      %v387 = vld [vmem:[%s380 + $0x8] sm:$0xff]
      %v388 = vld [vmem:[%s380 + $0x10] sm:$0xff]
      %v389 = vld [vmem:[%s380 + $0x18] sm:$0xff]
      %v390 = vld [vmem:[%s380 + $0x20] sm:$0xff]
      %v391 = vld [vmem:[%s380 + $0x28] sm:$0xff]
      %v392 = vld [vmem:[%s380 + $0x30] sm:$0xff]
      %v393 = vld [vmem:[%s380 + $0x38] sm:$0xff]
      %v394 = vld [vmem:[%s380 + $0x40] sm:$0xff]
      %v395 = vld [vmem:[%s380 + $0x48] sm:$0xff]
      %v396 = vld [vmem:[%s380 + $0x50] sm:$0xff]
      %v397 = vld [vmem:[%s380 + $0x58] sm:$0xff]
      %v398 = vld [vmem:[%s380 + $0x60] sm:$0xff]
      %v399 = vld [vmem:[%s380 + $0x68] sm:$0xff]
      %v400 = vld [vmem:[%s380 + $0x70] sm:$0xff]
      %v401 = vld [vmem:[%s380 + $0x78] sm:$0xff]
      %v402 = vld [vmem:[%s380 + $0x80] sm:$0xff]
      %v403 = vld [vmem:[%s380 + $0x88] sm:$0xff]
      %v404 = vld [vmem:[%s380 + $0x90] sm:$0xff]
      %v405 = vld [vmem:[%s380 + $0x98] sm:$0xff]
      %v406 = vld [vmem:[%s380 + $0xa0] sm:$0xff]
      %v407 = vld [vmem:[%s380 + $0xa8] sm:$0xff]
      %v408 = vld [vmem:[%s380 + $0xb0] sm:$0xff]
      %v409 = vld [vmem:[%s380 + $0xb8] sm:$0xff]
      %v410 = vld [vmem:[%s380 + $0xc0] sm:$0xff]
      %v411 = vld [vmem:[%s380 + $0xc8] sm:$0xff]
      %v412 = vld [vmem:[%s380 + $0xd0] sm:$0xff]
      %v413 = vld [vmem:[%s380 + $0xd8] sm:$0xff]
      %v414 = vld [vmem:[%s380 + $0xe0] sm:$0xff]
      %v415 = vld [vmem:[%s380 + $0xe8] sm:$0xff]
      %v416 = vld [vmem:[%s380 + $0xf0] sm:$0xff]
      %v417 = vld [vmem:[%s380 + $0xf8] sm:$0xff]
      %v418 = vld [vmem:[%s380 + $0x100] sm:$0xff]
      %v419 = vld [vmem:[%s380 + $0x108] sm:$0xff]
      %v420 = vld [vmem:[%s380 + $0x110] sm:$0xff]
      %v421 = vld [vmem:[%s380 + $0x118] sm:$0xff]
      %v422 = vld [vmem:[%s380 + $0x120] sm:$0xff]
      %v423 = vld [vmem:[%s380 + $0x128] sm:$0xff]
      %v424 = vld [vmem:[%s380 + $0x130] sm:$0xff]
      %v425 = vld [vmem:[%s380 + $0x138] sm:$0xff]
      %v426 = vld [vmem:[%s380 + $0x140] sm:$0xff]
      %v427 = vld [vmem:[%s380 + $0x148] sm:$0xff]
      %v428 = vld [vmem:[%s380 + $0x150] sm:$0xff]
      %v429 = vld [vmem:[%s380 + $0x158] sm:$0xff]
      %v430 = vld [vmem:[%s380 + $0x160] sm:$0xff]
      %v431 = vld [vmem:[%s380 + $0x168] sm:$0xff]
      %v432 = vld [vmem:[%s380 + $0x170] sm:$0xff]
      %v433 = vld [vmem:[%s380 + $0x178] sm:$0xff]
      %v434 = vld [vmem:[%s380 + $0x180] sm:$0xff]
      %v435 = vld [vmem:[%s380 + $0x188] sm:$0xff]
      %v436 = vld [vmem:[%s380 + $0x190] sm:$0xff]
      %v437 = vld [vmem:[%s380 + $0x198] sm:$0xff]
      %v438 = vld [vmem:[%s380 + $0x1a0] sm:$0xff]
      %v439 = vld [vmem:[%s380 + $0x1a8] sm:$0xff]
      %v440 = vld [vmem:[%s380 + $0x1b0] sm:$0xff]
      %v441 = vld [vmem:[%s380 + $0x1b8] sm:$0xff]
      %v442 = vld [vmem:[%s380 + $0x1c0] sm:$0xff]
      %v443 = vld [vmem:[%s380 + $0x1c8] sm:$0xff]
      %v444 = vld [vmem:[%s380 + $0x1d0] sm:$0xff]
      %v445 = vld [vmem:[%s380 + $0x1d8] sm:$0xff]
      %v446 = vld [vmem:[%s380 + $0x1e0] sm:$0xff]
      %v447 = vld [vmem:[%s380 + $0x1e8] sm:$0xff]
      %v448 = vld [vmem:[%s380 + $0x1f0] sm:$0xff]
      %v449 = vld [vmem:[%s380 + $0x1f8] sm:$0xff]
      %v450 = vld [vmem:[%s380 + $0x200] sm:$0xff]
      %v451 = vld [vmem:[%s380 + $0x208] sm:$0xff]
      %v452 = vld [vmem:[%s380 + $0x210] sm:$0xff]
      %v453 = vld [vmem:[%s380 + $0x218] sm:$0xff]
      %v454 = vld [vmem:[%s380 + $0x220] sm:$0xff]
      %v455 = vld [vmem:[%s380 + $0x228] sm:$0xff]
      %v456 = vld [vmem:[%s380 + $0x230] sm:$0xff]
      %v457 = vld [vmem:[%s380 + $0x238] sm:$0xff]
      %v458 = vld [vmem:[%s380 + $0x240] sm:$0xff]
      %v459 = vld [vmem:[%s380 + $0x248] sm:$0xff]
      %v460 = vld [vmem:[%s380 + $0x250] sm:$0xff]
      %v461 = vld [vmem:[%s380 + $0x258] sm:$0xff]
      %v462 = vld [vmem:[%s380 + $0x260] sm:$0xff]
      %v463 = vld [vmem:[%s380 + $0x268] sm:$0xff]
      %v464 = vld [vmem:[%s380 + $0x270] sm:$0xff]
      %v465 = vld [vmem:[%s380 + $0x278] sm:$0xff]
      %v466 = vld [vmem:[%s380 + $0x280] sm:$0xff]
      %v467 = vld [vmem:[%s380 + $0x288] sm:$0xff]
      %v468 = vld [vmem:[%s380 + $0x290] sm:$0xff]
      %v469 = vld [vmem:[%s380 + $0x298] sm:$0xff]
      %v470 = vld [vmem:[%s380 + $0x2a0] sm:$0xff]
      %v471 = vld [vmem:[%s380 + $0x2a8] sm:$0xff]
      %v472 = vld [vmem:[%s380 + $0x2b0] sm:$0xff]
      %v473 = vld [vmem:[%s380 + $0x2b8] sm:$0xff]
      %v474 = vld [vmem:[%s380 + $0x2c0] sm:$0xff]
      %v475 = vld [vmem:[%s380 + $0x2c8] sm:$0xff]
      %v476 = vld [vmem:[%s380 + $0x2d0] sm:$0xff]
      %v477 = vld [vmem:[%s380 + $0x2d8] sm:$0xff]
      %v478 = vld [vmem:[%s380 + $0x2e0] sm:$0xff]
      %v479 = vld [vmem:[%s380 + $0x2e8] sm:$0xff]
      %v480 = vld [vmem:[%s380 + $0x2f0] sm:$0xff]
      %v481 = vld [vmem:[%s380 + $0x2f8] sm:$0xff]
      %v482 = vld [vmem:[%s380 + $0x300] sm:$0xff]
      %v483 = vld [vmem:[%s380 + $0x308] sm:$0xff]
      %v484 = vld [vmem:[%s1] sm:$0xf]
      %v485 = vld [vmem:[%s1 + $0x4] sm:$0xf]
      %v486 = vld [vmem:[%s1 + $0x8] sm:$0xf]
      %v487 = vld [vmem:[%s1 + $0xc] sm:$0xf]
      %v488 = vld [vmem:[%s1 + $0x10] sm:$0xf]
      %v489 = vld [vmem:[%s1 + $0x14] sm:$0xf]
      %v490 = vld [vmem:[%s1 + $0x18] sm:$0xf]
      %v491 = vld [vmem:[%s1 + $0x1c] sm:$0xf]
      %v492 = vld [vmem:[%s1 + $0x20] sm:$0xf]
      %v493 = vld [vmem:[%s1 + $0x24] sm:$0xf]
      %v494 = vld [vmem:[%s1 + $0x28] sm:$0xf]
      %v495 = vld [vmem:[%s1 + $0x2c] sm:$0xf]
      %v496 = vld [vmem:[%s1 + $0x30] sm:$0xf]
      %v497 = vld [vmem:[%s1 + $0x34] sm:$0xf]
      %v498 = vld [vmem:[%s1 + $0x38] sm:$0xf]
      %v499 = vld [vmem:[%s1 + $0x3c] sm:$0xf]
      %v500 = vld [vmem:[%s1 + $0x40] sm:$0xf]
      %v501 = vld [vmem:[%s1 + $0x44] sm:$0xf]
      %v502 = vld [vmem:[%s1 + $0x48] sm:$0xf]
      %v503 = vld [vmem:[%s1 + $0x4c] sm:$0xf]
      %v504 = vld [vmem:[%s1 + $0x50] sm:$0xf]
      %v505 = vld [vmem:[%s1 + $0x54] sm:$0xf]
      %v506 = vld [vmem:[%s1 + $0x58] sm:$0xf]
      %v507 = vld [vmem:[%s1 + $0x5c] sm:$0xf]
      %v508 = vld [vmem:[%s1 + $0x60] sm:$0xf]
      %v509 = vld [vmem:[%s1 + $0x64] sm:$0xf]
      %v510 = vld [vmem:[%s1 + $0x68] sm:$0xf]
      %v511 = vld [vmem:[%s1 + $0x6c] sm:$0xf]
      %v512 = vld [vmem:[%s1 + $0x70] sm:$0xf]
      %v513 = vld [vmem:[%s1 + $0x74] sm:$0xf]
      %v514 = vld [vmem:[%s1 + $0x78] sm:$0xf]
      %v515 = vld [vmem:[%s1 + $0x7c] sm:$0xf]
      %v614 = vunpack.c.l.b16 %v386
      %v615 = vunpack.c.h.b16 %v386
      %v616 = vunpack.c.l.b16 %v387
      %v617 = vunpack.c.h.b16 %v387
      %v618 = vunpack.c.l.b16 %v388
      %v619 = vunpack.c.h.b16 %v388
      %v620 = vunpack.c.l.b16 %v389
      %v621 = vunpack.c.h.b16 %v389
      %v622 = vunpack.c.l.b16 %v390
      %v623 = vunpack.c.h.b16 %v390
      %v624 = vunpack.c.l.b16 %v391
      %v625 = vunpack.c.h.b16 %v391
      %v626 = vunpack.c.l.b16 %v392
      %v627 = vunpack.c.h.b16 %v392
      %v628 = vunpack.c.l.b16 %v393
      %v629 = vunpack.c.h.b16 %v393
      %v630 = vunpack.c.l.b16 %v394
      %v631 = vunpack.c.h.b16 %v394
      %v632 = vunpack.c.l.b16 %v395
      %v633 = vunpack.c.h.b16 %v395
      %v634 = vunpack.c.l.b16 %v396
      %v635 = vunpack.c.h.b16 %v396
      %v636 = vunpack.c.l.b16 %v397
      %v637 = vunpack.c.h.b16 %v397
      %v638 = vunpack.c.l.b16 %v398
      %v639 = vunpack.c.h.b16 %v398
      %v640 = vunpack.c.l.b16 %v399
      %v641 = vunpack.c.h.b16 %v399
      %v642 = vunpack.c.l.b16 %v400
      %v643 = vunpack.c.h.b16 %v400
      %v644 = vunpack.c.l.b16 %v401
      %v645 = vunpack.c.h.b16 %v401
      %v646 = vunpack.c.l.b16 %v402
      %v647 = vunpack.c.h.b16 %v402
      %v648 = vunpack.c.l.b16 %v403
      %v649 = vunpack.c.h.b16 %v403
      %v650 = vunpack.c.l.b16 %v404
      %v651 = vunpack.c.h.b16 %v404
      %v652 = vunpack.c.l.b16 %v405
      %v653 = vunpack.c.h.b16 %v405
      %v654 = vunpack.c.l.b16 %v406
      %v655 = vunpack.c.h.b16 %v406
      %v656 = vunpack.c.l.b16 %v407
      %v657 = vunpack.c.h.b16 %v407
      %v658 = vunpack.c.l.b16 %v408
      %v659 = vunpack.c.h.b16 %v408
      %v660 = vunpack.c.l.b16 %v409
      %v661 = vunpack.c.h.b16 %v409
      %v662 = vunpack.c.l.b16 %v410
      %v663 = vunpack.c.h.b16 %v410
      %v664 = vunpack.c.l.b16 %v411
      %v665 = vunpack.c.h.b16 %v411
      %v666 = vunpack.c.l.b16 %v412
      %v667 = vunpack.c.h.b16 %v412
      %v668 = vunpack.c.l.b16 %v413
      %v669 = vunpack.c.h.b16 %v413
      %v670 = vunpack.c.l.b16 %v414
      %v671 = vunpack.c.h.b16 %v414
      %v672 = vunpack.c.l.b16 %v415
      %v673 = vunpack.c.h.b16 %v415
      %v674 = vunpack.c.l.b16 %v416
      %v675 = vunpack.c.h.b16 %v416
      %v676 = vunpack.c.l.b16 %v417
      %v677 = vunpack.c.h.b16 %v417
      %v678 = vunpack.c.l.b16 %v418
      %v679 = vunpack.c.h.b16 %v418
      %v680 = vunpack.c.l.b16 %v419
      %v681 = vunpack.c.h.b16 %v419
      %v682 = vunpack.c.l.b16 %v420
      %v683 = vunpack.c.h.b16 %v420
      %v684 = vunpack.c.l.b16 %v421
      %v685 = vunpack.c.h.b16 %v421
      %v686 = vunpack.c.l.b16 %v422
      %v687 = vunpack.c.h.b16 %v422
      %v688 = vunpack.c.l.b16 %v423
      %v689 = vunpack.c.h.b16 %v423
      %v690 = vunpack.c.l.b16 %v424
      %v691 = vunpack.c.h.b16 %v424
      %v692 = vunpack.c.l.b16 %v425
      %v693 = vunpack.c.h.b16 %v425
      %v694 = vunpack.c.l.b16 %v426
      %v695 = vunpack.c.h.b16 %v426
      %v696 = vunpack.c.l.b16 %v427
      %v697 = vunpack.c.h.b16 %v427
      %v698 = vunpack.c.l.b16 %v428
      %v699 = vunpack.c.h.b16 %v428
      %v700 = vunpack.c.l.b16 %v429
      %v701 = vunpack.c.h.b16 %v429
      %v702 = vunpack.c.l.b16 %v430
      %v703 = vunpack.c.h.b16 %v430
      %v704 = vunpack.c.l.b16 %v431
      %v705 = vunpack.c.h.b16 %v431
      %v706 = vunpack.c.l.b16 %v432
      %v707 = vunpack.c.h.b16 %v432
      %v708 = vunpack.c.l.b16 %v433
      %v709 = vunpack.c.h.b16 %v433
      %v710 = vunpack.c.l.b16 %v434
      %v711 = vunpack.c.h.b16 %v434
      %v712 = vunpack.c.l.b16 %v435
      %v713 = vunpack.c.h.b16 %v435
      %v714 = vunpack.c.l.b16 %v436
      %v715 = vunpack.c.h.b16 %v436
      %v716 = vunpack.c.l.b16 %v437
      %v717 = vunpack.c.h.b16 %v437
      %v718 = vunpack.c.l.b16 %v438
      %v719 = vunpack.c.h.b16 %v438
      %v720 = vunpack.c.l.b16 %v439
      %v721 = vunpack.c.h.b16 %v439
      %v722 = vunpack.c.l.b16 %v440
      %v723 = vunpack.c.h.b16 %v440
      %v724 = vunpack.c.l.b16 %v441
      %v725 = vunpack.c.h.b16 %v441
      %v726 = vunpack.c.l.b16 %v442
      %v727 = vunpack.c.h.b16 %v442
      %v728 = vunpack.c.l.b16 %v443
      %v729 = vunpack.c.h.b16 %v443
      %v730 = vunpack.c.l.b16 %v444
      %v731 = vunpack.c.h.b16 %v444
      %v732 = vunpack.c.l.b16 %v445
      %v733 = vunpack.c.h.b16 %v445
      %v734 = vunpack.c.l.b16 %v446
      %v735 = vunpack.c.h.b16 %v446
      %v736 = vunpack.c.l.b16 %v447
      %v737 = vunpack.c.h.b16 %v447
      %v738 = vunpack.c.l.b16 %v448
      %v739 = vunpack.c.h.b16 %v448
      %v740 = vunpack.c.l.b16 %v449
      %v741 = vunpack.c.h.b16 %v449
      %v742 = vunpack.c.l.b16 %v450
      %v743 = vunpack.c.h.b16 %v450
      %v744 = vunpack.c.l.b16 %v451
      %v745 = vunpack.c.h.b16 %v451
      %v746 = vunpack.c.l.b16 %v452
      %v747 = vunpack.c.h.b16 %v452
      %v748 = vunpack.c.l.b16 %v453
      %v749 = vunpack.c.h.b16 %v453
      %v750 = vunpack.c.l.b16 %v454
      %v751 = vunpack.c.h.b16 %v454
      %v752 = vunpack.c.l.b16 %v455
      %v753 = vunpack.c.h.b16 %v455
      %v754 = vunpack.c.l.b16 %v456
      %v755 = vunpack.c.h.b16 %v456
      %v756 = vunpack.c.l.b16 %v457
      %v757 = vunpack.c.h.b16 %v457
      %v758 = vunpack.c.l.b16 %v458
      %v759 = vunpack.c.h.b16 %v458
      %v760 = vunpack.c.l.b16 %v459
      %v761 = vunpack.c.h.b16 %v459
      %v762 = vunpack.c.l.b16 %v460
      %v763 = vunpack.c.h.b16 %v460
      %v764 = vunpack.c.l.b16 %v461
      %v765 = vunpack.c.h.b16 %v461
      %v766 = vunpack.c.l.b16 %v462
      %v767 = vunpack.c.h.b16 %v462
      %v768 = vunpack.c.l.b16 %v463
      %v769 = vunpack.c.h.b16 %v463
      %v770 = vunpack.c.l.b16 %v464
      %v771 = vunpack.c.h.b16 %v464
      %v772 = vunpack.c.l.b16 %v465
      %v773 = vunpack.c.h.b16 %v465
      %v774 = vunpack.c.l.b16 %v466
      %v775 = vunpack.c.h.b16 %v466
      %v776 = vunpack.c.l.b16 %v467
      %v777 = vunpack.c.h.b16 %v467
      %v778 = vunpack.c.l.b16 %v468
      %v779 = vunpack.c.h.b16 %v468
      %v780 = vunpack.c.l.b16 %v469
      %v781 = vunpack.c.h.b16 %v469
      %v782 = vunpack.c.l.b16 %v470
      %v783 = vunpack.c.h.b16 %v470
      %v784 = vunpack.c.l.b16 %v471
      %v785 = vunpack.c.h.b16 %v471
      %v786 = vunpack.c.l.b16 %v472
      %v787 = vunpack.c.h.b16 %v472
      %v788 = vunpack.c.l.b16 %v473
      %v789 = vunpack.c.h.b16 %v473
      %v790 = vunpack.c.l.b16 %v474
      %v791 = vunpack.c.h.b16 %v474
      %v792 = vunpack.c.l.b16 %v475
      %v793 = vunpack.c.h.b16 %v475
      %v794 = vunpack.c.l.b16 %v476
      %v795 = vunpack.c.h.b16 %v476
      %v796 = vunpack.c.l.b16 %v477
      %v797 = vunpack.c.h.b16 %v477
      %v798 = vunpack.c.l.b16 %v478
      %v799 = vunpack.c.h.b16 %v478
      %v800 = vunpack.c.l.b16 %v479
      %v801 = vunpack.c.h.b16 %v479
      %v802 = vunpack.c.l.b16 %v480
      %v803 = vunpack.c.h.b16 %v480
      %v804 = vunpack.c.l.b16 %v481
      %v805 = vunpack.c.h.b16 %v481
      %v806 = vunpack.c.l.b16 %v482
      %v807 = vunpack.c.h.b16 %v482
      %v808 = vunpack.c.l.b16 %v483
      %v809 = vunpack.c.h.b16 %v483
      %v810 = vpack.c.b16 %v616, %v614
      %v811 = vpack.c.b16 %v617, %v615
      %v812 = vpack.c.b16 %v620, %v618
      %v813 = vpack.c.b16 %v621, %v619
      %v814 = vpack.c.b16 %v624, %v622
      %v815 = vpack.c.b16 %v625, %v623
      %v816 = vpack.c.b16 %v628, %v626
      %v817 = vpack.c.b16 %v629, %v627
      %v818 = vpack.c.b16 %v632, %v630
      %v819 = vpack.c.b16 %v633, %v631
      %v820 = vpack.c.b16 %v636, %v634
      %v821 = vpack.c.b16 %v637, %v635
      %v822 = vpack.c.b16 %v640, %v638
      %v823 = vpack.c.b16 %v641, %v639
      %v824 = vpack.c.b16 %v644, %v642
      %v825 = vpack.c.b16 %v645, %v643
      %v826 = vpack.c.b16 %v648, %v646
      %v827 = vpack.c.b16 %v649, %v647
      %v828 = vpack.c.b16 %v652, %v650
      %v829 = vpack.c.b16 %v653, %v651
      %v830 = vpack.c.b16 %v656, %v654
      %v831 = vpack.c.b16 %v657, %v655
      %v832 = vpack.c.b16 %v660, %v658
      %v833 = vpack.c.b16 %v661, %v659
      %v834 = vpack.c.b16 %v664, %v662
      %v835 = vpack.c.b16 %v665, %v663
      %v836 = vpack.c.b16 %v668, %v666
      %v837 = vpack.c.b16 %v669, %v667
      %v838 = vpack.c.b16 %v672, %v670
      %v839 = vpack.c.b16 %v673, %v671
      %v840 = vpack.c.b16 %v676, %v674
      %v841 = vpack.c.b16 %v677, %v675
      %v842 = vpack.c.b16 %v680, %v678
      %v843 = vpack.c.b16 %v681, %v679
      %v844 = vpack.c.b16 %v684, %v682
      %v845 = vpack.c.b16 %v685, %v683
      %v846 = vpack.c.b16 %v688, %v686
      %v847 = vpack.c.b16 %v689, %v687
      %v848 = vpack.c.b16 %v692, %v690
      %v849 = vpack.c.b16 %v693, %v691
      %v850 = vpack.c.b16 %v696, %v694
      %v851 = vpack.c.b16 %v697, %v695
      %v852 = vpack.c.b16 %v700, %v698
      %v853 = vpack.c.b16 %v701, %v699
      %v854 = vpack.c.b16 %v704, %v702
      %v855 = vpack.c.b16 %v705, %v703
      %v856 = vpack.c.b16 %v708, %v706
      %v857 = vpack.c.b16 %v709, %v707
      %v858 = vpack.c.b16 %v712, %v710
      %v859 = vpack.c.b16 %v713, %v711
      %v860 = vpack.c.b16 %v716, %v714
      %v861 = vpack.c.b16 %v717, %v715
      %v862 = vpack.c.b16 %v720, %v718
      %v863 = vpack.c.b16 %v721, %v719
      %v864 = vpack.c.b16 %v724, %v722
      %v865 = vpack.c.b16 %v725, %v723
      %v866 = vpack.c.b16 %v728, %v726
      %v867 = vpack.c.b16 %v729, %v727
      %v868 = vpack.c.b16 %v732, %v730
      %v869 = vpack.c.b16 %v733, %v731
      %v870 = vpack.c.b16 %v736, %v734
      %v871 = vpack.c.b16 %v737, %v735
      %v872 = vpack.c.b16 %v740, %v738
      %v873 = vpack.c.b16 %v741, %v739
      %v874 = vpack.c.b16 %v744, %v742
      %v875 = vpack.c.b16 %v745, %v743
      %v876 = vpack.c.b16 %v748, %v746
      %v877 = vpack.c.b16 %v749, %v747
      %v878 = vpack.c.b16 %v752, %v750
      %v879 = vpack.c.b16 %v753, %v751
      %v880 = vpack.c.b16 %v756, %v754
      %v881 = vpack.c.b16 %v757, %v755
      %v882 = vpack.c.b16 %v760, %v758
      %v883 = vpack.c.b16 %v761, %v759
      %v884 = vpack.c.b16 %v764, %v762
      %v885 = vpack.c.b16 %v765, %v763
      %v886 = vpack.c.b16 %v768, %v766
      %v887 = vpack.c.b16 %v769, %v767
      %v888 = vpack.c.b16 %v772, %v770
      %v889 = vpack.c.b16 %v773, %v771
      %v890 = vpack.c.b16 %v776, %v774
      %v891 = vpack.c.b16 %v777, %v775
      %v892 = vpack.c.b16 %v780, %v778
      %v893 = vpack.c.b16 %v781, %v779
      %v894 = vpack.c.b16 %v784, %v782
      %v895 = vpack.c.b16 %v785, %v783
      %v896 = vpack.c.b16 %v788, %v786
      %v897 = vpack.c.b16 %v789, %v787
      %v898 = vpack.c.b16 %v792, %v790
      %v899 = vpack.c.b16 %v793, %v791
      %v900 = vpack.c.b16 %v796, %v794
      %v901 = vpack.c.b16 %v797, %v795
      %v902 = vpack.c.b16 %v800, %v798
      %v903 = vpack.c.b16 %v801, %v799
      %v904 = vpack.c.b16 %v804, %v802
      %v905 = vpack.c.b16 %v805, %v803
      %v906 = vpack.c.b16 %v808, %v806
      %v907 = vpack.c.b16 %v809, %v807
      %v1038 = vunpack.c.l.b16 %v484
      %v1039 = vunpack.c.l.b16 %v485
      %v1040 = vunpack.c.l.b16 %v486
      %v1041 = vunpack.c.l.b16 %v487
      %v1042 = vunpack.c.l.b16 %v488
      %v1043 = vunpack.c.l.b16 %v489
      %v1044 = vunpack.c.l.b16 %v490
      %v1045 = vunpack.c.l.b16 %v491
      %v1046 = vunpack.c.l.b16 %v492
      %v1047 = vunpack.c.l.b16 %v493
      %v1048 = vunpack.c.l.b16 %v494
      %v1049 = vunpack.c.l.b16 %v495
      %v1050 = vunpack.c.l.b16 %v496
      %v1051 = vunpack.c.l.b16 %v497
      %v1052 = vunpack.c.l.b16 %v498
      %v1053 = vunpack.c.l.b16 %v499
      %v1054 = vunpack.c.l.b16 %v500
      %v1055 = vunpack.c.l.b16 %v501
      %v1056 = vunpack.c.l.b16 %v502
      %v1057 = vunpack.c.l.b16 %v503
      %v1058 = vunpack.c.l.b16 %v504
      %v1059 = vunpack.c.l.b16 %v505
      %v1060 = vunpack.c.l.b16 %v506
      %v1061 = vunpack.c.l.b16 %v507
      %v1062 = vunpack.c.l.b16 %v508
      %v1063 = vunpack.c.l.b16 %v509
      %v1064 = vunpack.c.l.b16 %v510
      %v1065 = vunpack.c.l.b16 %v511
      %v1066 = vunpack.c.l.b16 %v512
      %v1067 = vunpack.c.l.b16 %v513
      %v1068 = vunpack.c.l.b16 %v514
      %v1069 = vunpack.c.l.b16 %v515
      %v1070 = vpack.c.b16 %v1039, %v1038
      %v1071 = vpack.c.b16 %v1041, %v1040
      %v1072 = vpack.c.b16 %v1043, %v1042
      %v1073 = vpack.c.b16 %v1045, %v1044
      %v1074 = vpack.c.b16 %v1047, %v1046
      %v1075 = vpack.c.b16 %v1049, %v1048
      %v1076 = vpack.c.b16 %v1051, %v1050
      %v1077 = vpack.c.b16 %v1053, %v1052
      %v1078 = vpack.c.b16 %v1055, %v1054
      %v1079 = vpack.c.b16 %v1057, %v1056
      %v1080 = vpack.c.b16 %v1059, %v1058
      %v1081 = vpack.c.b16 %v1061, %v1060
      %v1082 = vpack.c.b16 %v1063, %v1062
      %v1083 = vpack.c.b16 %v1065, %v1064
      %v1084 = vpack.c.b16 %v1067, %v1066
      %v1085 = vpack.c.b16 %v1069, %v1068
      %1102 = vmatprep.subr.bf16.mxu0 0
      %1103 = vmatpush1.bf16.msra.mxu0 %v1077
      %1104 = vmatprep.subr.bf16.mxu0 0
      %1105 = vmatpush1.bf16.msra.mxu0 %v1076
      %1106 = vmatprep.subr.bf16.mxu0 0
      %1107 = vmatpush1.bf16.msra.mxu0 %v1075
      %1108 = vmatprep.subr.bf16.mxu0 0
      %1109 = vmatpush1.bf16.msra.mxu0 %v1074
      %1110 = vmatprep.subr.bf16.mxu0 0
      %1111 = vmatpush1.bf16.msra.mxu0 %v1073
      %1112 = vmatprep.subr.bf16.mxu0 0
      %1113 = vmatpush1.bf16.msra.mxu0 %v1072
      %1114 = vmatprep.subr.bf16.mxu0 0
      %1115 = vmatpush1.bf16.msra.mxu0 %v1071
      %1116 = vmatprep.subr.bf16.mxu0 0
      %1117 = vmatpush1.bf16.msra.mxu0 %v1070
      %1118 = vmatprep.subr.bf16.mxu0 0
      %1119 = vmatpush2.bf16.msra.mxu0 %v1085
      %1120 = vmatprep.subr.bf16.mxu0 0
      %1121 = vmatpush2.bf16.msra.mxu0 %v1084
      %1122 = vmatprep.subr.bf16.mxu0 0
      %1123 = vmatpush2.bf16.msra.mxu0 %v1083
      %1124 = vmatprep.subr.bf16.mxu0 0
      %1125 = vmatpush2.bf16.msra.mxu0 %v1082
      %1126 = vmatprep.subr.bf16.mxu0 0
      %1127 = vmatpush2.bf16.msra.mxu0 %v1081
      %1128 = vmatprep.subr.bf16.mxu0 0
      %1129 = vmatpush2.bf16.msra.mxu0 %v1080
      %1130 = vmatprep.subr.bf16.mxu0 0
      %1131 = vmatpush2.bf16.msra.mxu0 %v1079
      %1132 = vmatprep.subr.bf16.mxu0 0
      %1133 = vmatpush2.bf16.msra.mxu0 %v1078
      %1134 = vmatprep.mubr.bf16.mxu0 %v811
      %1135 = vmatmul.mubr.bf16.gmra.mxu0 %v810
      %v1136 = vpop.f32.mrf.mxu0
      %v1137 = vadd.f32 0.0, %v1136
      %v1138 = vpop.f32.mrf.mxu0
      %v1139 = vpop.f32.mrf.mxu0
      %v1140 = vadd.f32 0.0, %v1139
      %v1141 = vpop.f32.mrf.mxu0
      %1142 = vmatprep.mubr.bf16.mxu0 %v813
      %1143 = vmatmul.mubr.bf16.gmra.mxu0 %v812
      %v1144 = vpop.f32.mrf.mxu0
      %v1145 = vadd.f32 0.0, %v1144
      %v1146 = vpop.f32.mrf.mxu0
      %v1147 = vpop.f32.mrf.mxu0
      %v1148 = vadd.f32 0.0, %v1147
      %v1149 = vpop.f32.mrf.mxu0
      %1150 = vmatprep.mubr.bf16.mxu0 %v815
      %1151 = vmatmul.mubr.bf16.gmra.mxu0 %v814
      %v1152 = vpop.f32.mrf.mxu0
      %v1153 = vadd.f32 0.0, %v1152
      %v1154 = vpop.f32.mrf.mxu0
      %v1155 = vpop.f32.mrf.mxu0
      %v1156 = vadd.f32 0.0, %v1155
      %v1157 = vpop.f32.mrf.mxu0
      %1158 = vmatprep.mubr.bf16.mxu0 %v817
      %1159 = vmatmul.mubr.bf16.gmra.mxu0 %v816
      %v1160 = vpop.f32.mrf.mxu0
      %v1161 = vadd.f32 0.0, %v1160
      %v1162 = vpop.f32.mrf.mxu0
      %v1163 = vpop.f32.mrf.mxu0
      %v1164 = vadd.f32 0.0, %v1163
      %v1165 = vpop.f32.mrf.mxu0
      %1166 = vmatprep.mubr.bf16.mxu0 %v819
      %1167 = vmatmul.mubr.bf16.gmra.mxu0 %v818
      %v1168 = vpop.f32.mrf.mxu0
      %v1169 = vadd.f32 0.0, %v1168
      %v1170 = vpop.f32.mrf.mxu0
      %v1171 = vpop.f32.mrf.mxu0
      %v1172 = vadd.f32 0.0, %v1171
      %v1173 = vpop.f32.mrf.mxu0
      %1174 = vmatprep.mubr.bf16.mxu0 %v821
      %1175 = vmatmul.mubr.bf16.gmra.mxu0 %v820
      %v1176 = vpop.f32.mrf.mxu0
      %v1177 = vadd.f32 0.0, %v1176
      %v1178 = vpop.f32.mrf.mxu0
      %v1179 = vpop.f32.mrf.mxu0
      %v1180 = vadd.f32 0.0, %v1179
      %v1181 = vpop.f32.mrf.mxu0
      %1182 = vmatprep.mubr.bf16.mxu0 %v823
      %1183 = vmatmul.mubr.bf16.gmra.mxu0 %v822
      %v1184 = vpop.f32.mrf.mxu0
      %v1185 = vadd.f32 0.0, %v1184
      %v1186 = vpop.f32.mrf.mxu0
      %v1187 = vpop.f32.mrf.mxu0
      %v1188 = vadd.f32 0.0, %v1187
      %v1189 = vpop.f32.mrf.mxu0
      %1190 = vmatprep.mubr.bf16.mxu0 %v825
      %1191 = vmatmul.mubr.bf16.gmra.mxu0 %v824
      %v1192 = vpop.f32.mrf.mxu0
      %v1193 = vadd.f32 0.0, %v1192
      %v1194 = vpop.f32.mrf.mxu0
      %v1195 = vpop.f32.mrf.mxu0
      %v1196 = vadd.f32 0.0, %v1195
      %v1197 = vpop.f32.mrf.mxu0
      %1198 = vmatprep.mubr.bf16.mxu0 %v827
      %1199 = vmatmul.mubr.bf16.gmra.mxu0 %v826
      %v1200 = vpop.f32.mrf.mxu0
      %v1201 = vadd.f32 0.0, %v1200
      %v1202 = vpop.f32.mrf.mxu0
      %v1203 = vpop.f32.mrf.mxu0
      %v1204 = vadd.f32 0.0, %v1203
      %v1205 = vpop.f32.mrf.mxu0
      %1206 = vmatprep.mubr.bf16.mxu0 %v829
      %1207 = vmatmul.mubr.bf16.gmra.mxu0 %v828
      %v1208 = vpop.f32.mrf.mxu0
      %v1209 = vadd.f32 0.0, %v1208
      %v1210 = vpop.f32.mrf.mxu0
      %v1211 = vpop.f32.mrf.mxu0
      %v1212 = vadd.f32 0.0, %v1211
      %v1213 = vpop.f32.mrf.mxu0
      %1214 = vmatprep.mubr.bf16.mxu0 %v831
      %1215 = vmatmul.mubr.bf16.gmra.mxu0 %v830
      %v1216 = vpop.f32.mrf.mxu0
      %v1217 = vadd.f32 0.0, %v1216
      %v1218 = vpop.f32.mrf.mxu0
      %v1219 = vpop.f32.mrf.mxu0
      %v1220 = vadd.f32 0.0, %v1219
      %v1221 = vpop.f32.mrf.mxu0
      %1222 = vmatprep.mubr.bf16.mxu0 %v833
      %1223 = vmatmul.mubr.bf16.gmra.mxu0 %v832
      %v1224 = vpop.f32.mrf.mxu0
      %v1225 = vadd.f32 0.0, %v1224
      %v1226 = vpop.f32.mrf.mxu0
      %v1227 = vpop.f32.mrf.mxu0
      %v1228 = vadd.f32 0.0, %v1227
      %v1229 = vpop.f32.mrf.mxu0
      %1230 = vmatprep.mubr.bf16.mxu0 %v835
      %1231 = vmatmul.mubr.bf16.gmra.mxu0 %v834
      %v1232 = vpop.f32.mrf.mxu0
      %v1233 = vadd.f32 0.0, %v1232
      %v1234 = vpop.f32.mrf.mxu0
      %v1235 = vpop.f32.mrf.mxu0
      %v1236 = vadd.f32 0.0, %v1235
      %v1237 = vpop.f32.mrf.mxu0
      %1238 = vmatprep.mubr.bf16.mxu0 %v837
      %1239 = vmatmul.mubr.bf16.gmra.mxu0 %v836
      %v1240 = vpop.f32.mrf.mxu0
      %v1241 = vadd.f32 0.0, %v1240
      %v1242 = vpop.f32.mrf.mxu0
      %v1243 = vpop.f32.mrf.mxu0
      %v1244 = vadd.f32 0.0, %v1243
      %v1245 = vpop.f32.mrf.mxu0
      %1246 = vmatprep.mubr.bf16.mxu0 %v839
      %1247 = vmatmul.mubr.bf16.gmra.mxu0 %v838
      %v1248 = vpop.f32.mrf.mxu0
      %v1249 = vadd.f32 0.0, %v1248
      %v1250 = vpop.f32.mrf.mxu0
      %v1251 = vpop.f32.mrf.mxu0
      %v1252 = vadd.f32 0.0, %v1251
      %v1253 = vpop.f32.mrf.mxu0
      %1254 = vmatprep.mubr.bf16.mxu0 %v841
      %1255 = vmatmul.mubr.bf16.gmra.mxu0 %v840
      %v1256 = vpop.f32.mrf.mxu0
      %v1257 = vadd.f32 0.0, %v1256
      %v1258 = vpop.f32.mrf.mxu0
      %v1259 = vpop.f32.mrf.mxu0
      %v1260 = vadd.f32 0.0, %v1259
      %v1261 = vpop.f32.mrf.mxu0
      %1262 = vmatprep.mubr.bf16.mxu0 %v843
      %1263 = vmatmul.mubr.bf16.gmra.mxu0 %v842
      %v1264 = vpop.f32.mrf.mxu0
      %v1265 = vadd.f32 0.0, %v1264
      %v1266 = vpop.f32.mrf.mxu0
      %v1267 = vpop.f32.mrf.mxu0
      %v1268 = vadd.f32 0.0, %v1267
      %v1269 = vpop.f32.mrf.mxu0
      %1270 = vmatprep.mubr.bf16.mxu0 %v845
      %1271 = vmatmul.mubr.bf16.gmra.mxu0 %v844
      %v1272 = vpop.f32.mrf.mxu0
      %v1273 = vadd.f32 0.0, %v1272
      %v1274 = vpop.f32.mrf.mxu0
      %v1275 = vpop.f32.mrf.mxu0
      %v1276 = vadd.f32 0.0, %v1275
      %v1277 = vpop.f32.mrf.mxu0
      %1278 = vmatprep.mubr.bf16.mxu0 %v847
      %1279 = vmatmul.mubr.bf16.gmra.mxu0 %v846
      %v1280 = vpop.f32.mrf.mxu0
      %v1281 = vadd.f32 0.0, %v1280
      %v1282 = vpop.f32.mrf.mxu0
      %v1283 = vpop.f32.mrf.mxu0
      %v1284 = vadd.f32 0.0, %v1283
      %v1285 = vpop.f32.mrf.mxu0
      %1286 = vmatprep.mubr.bf16.mxu0 %v849
      %1287 = vmatmul.mubr.bf16.gmra.mxu0 %v848
      %v1288 = vpop.f32.mrf.mxu0
      %v1289 = vadd.f32 0.0, %v1288
      %v1290 = vpop.f32.mrf.mxu0
      %v1291 = vpop.f32.mrf.mxu0
      %v1292 = vadd.f32 0.0, %v1291
      %v1293 = vpop.f32.mrf.mxu0
      %1294 = vmatprep.mubr.bf16.mxu0 %v851
      %1295 = vmatmul.mubr.bf16.gmra.mxu0 %v850
      %v1296 = vpop.f32.mrf.mxu0
      %v1297 = vadd.f32 0.0, %v1296
      %v1298 = vpop.f32.mrf.mxu0
      %v1299 = vpop.f32.mrf.mxu0
      %v1300 = vadd.f32 0.0, %v1299
      %v1301 = vpop.f32.mrf.mxu0
      %1302 = vmatprep.mubr.bf16.mxu0 %v853
      %1303 = vmatmul.mubr.bf16.gmra.mxu0 %v852
      %v1304 = vpop.f32.mrf.mxu0
      %v1305 = vadd.f32 0.0, %v1304
      %v1306 = vpop.f32.mrf.mxu0
      %v1307 = vpop.f32.mrf.mxu0
      %v1308 = vadd.f32 0.0, %v1307
      %v1309 = vpop.f32.mrf.mxu0
      %1310 = vmatprep.mubr.bf16.mxu0 %v855
      %1311 = vmatmul.mubr.bf16.gmra.mxu0 %v854
      %v1312 = vpop.f32.mrf.mxu0
      %v1313 = vadd.f32 0.0, %v1312
      %v1314 = vpop.f32.mrf.mxu0
      %v1315 = vpop.f32.mrf.mxu0
      %v1316 = vadd.f32 0.0, %v1315
      %v1317 = vpop.f32.mrf.mxu0
      %1318 = vmatprep.mubr.bf16.mxu0 %v857
      %1319 = vmatmul.mubr.bf16.gmra.mxu0 %v856
      %v1320 = vpop.f32.mrf.mxu0
      %v1321 = vadd.f32 0.0, %v1320
      %v1322 = vpop.f32.mrf.mxu0
      %v1323 = vpop.f32.mrf.mxu0
      %v1324 = vadd.f32 0.0, %v1323
      %v1325 = vpop.f32.mrf.mxu0
      %1326 = vmatprep.mubr.bf16.mxu0 %v859
      %1327 = vmatmul.mubr.bf16.gmra.mxu0 %v858
      %v1328 = vpop.f32.mrf.mxu0
      %v1329 = vadd.f32 0.0, %v1328
      %v1330 = vpop.f32.mrf.mxu0
      %v1331 = vpop.f32.mrf.mxu0
      %v1332 = vadd.f32 0.0, %v1331
      %v1333 = vpop.f32.mrf.mxu0
      %1334 = vmatprep.mubr.bf16.mxu0 %v861
      %1335 = vmatmul.mubr.bf16.gmra.mxu0 %v860
      %v1336 = vpop.f32.mrf.mxu0
      %v1337 = vadd.f32 0.0, %v1336
      %v1338 = vpop.f32.mrf.mxu0
      %v1339 = vpop.f32.mrf.mxu0
      %v1340 = vadd.f32 0.0, %v1339
      %v1341 = vpop.f32.mrf.mxu0
      %1342 = vmatprep.mubr.bf16.mxu0 %v863
      %1343 = vmatmul.mubr.bf16.gmra.mxu0 %v862
      %v1344 = vpop.f32.mrf.mxu0
      %v1345 = vadd.f32 0.0, %v1344
      %v1346 = vpop.f32.mrf.mxu0
      %v1347 = vpop.f32.mrf.mxu0
      %v1348 = vadd.f32 0.0, %v1347
      %v1349 = vpop.f32.mrf.mxu0
      %1350 = vmatprep.mubr.bf16.mxu0 %v865
      %1351 = vmatmul.mubr.bf16.gmra.mxu0 %v864
      %v1352 = vpop.f32.mrf.mxu0
      %v1353 = vadd.f32 0.0, %v1352
      %v1354 = vpop.f32.mrf.mxu0
      %v1355 = vpop.f32.mrf.mxu0
      %v1356 = vadd.f32 0.0, %v1355
      %v1357 = vpop.f32.mrf.mxu0
      %1358 = vmatprep.mubr.bf16.mxu0 %v867
      %1359 = vmatmul.mubr.bf16.gmra.mxu0 %v866
      %v1360 = vpop.f32.mrf.mxu0
      %v1361 = vadd.f32 0.0, %v1360
      %v1362 = vpop.f32.mrf.mxu0
      %v1363 = vpop.f32.mrf.mxu0
      %v1364 = vadd.f32 0.0, %v1363
      %v1365 = vpop.f32.mrf.mxu0
      %1366 = vmatprep.mubr.bf16.mxu0 %v869
      %1367 = vmatmul.mubr.bf16.gmra.mxu0 %v868
      %v1368 = vpop.f32.mrf.mxu0
      %v1369 = vadd.f32 0.0, %v1368
      %v1370 = vpop.f32.mrf.mxu0
      %v1371 = vpop.f32.mrf.mxu0
      %v1372 = vadd.f32 0.0, %v1371
      %v1373 = vpop.f32.mrf.mxu0
      %1374 = vmatprep.mubr.bf16.mxu0 %v871
      %1375 = vmatmul.mubr.bf16.gmra.mxu0 %v870
      %v1376 = vpop.f32.mrf.mxu0
      %v1377 = vadd.f32 0.0, %v1376
      %v1378 = vpop.f32.mrf.mxu0
      %v1379 = vpop.f32.mrf.mxu0
      %v1380 = vadd.f32 0.0, %v1379
      %v1381 = vpop.f32.mrf.mxu0
      %1382 = vmatprep.mubr.bf16.mxu0 %v873
      %1383 = vmatmul.mubr.bf16.gmra.mxu0 %v872
      %v1384 = vpop.f32.mrf.mxu0
      %v1385 = vadd.f32 0.0, %v1384
      %v1386 = vpop.f32.mrf.mxu0
      %v1387 = vpop.f32.mrf.mxu0
      %v1388 = vadd.f32 0.0, %v1387
      %v1389 = vpop.f32.mrf.mxu0
      %1390 = vmatprep.mubr.bf16.mxu0 %v875
      %1391 = vmatmul.mubr.bf16.gmra.mxu0 %v874
      %v1392 = vpop.f32.mrf.mxu0
      %v1393 = vadd.f32 0.0, %v1392
      %v1394 = vpop.f32.mrf.mxu0
      %v1395 = vpop.f32.mrf.mxu0
      %v1396 = vadd.f32 0.0, %v1395
      %v1397 = vpop.f32.mrf.mxu0
      %1398 = vmatprep.mubr.bf16.mxu0 %v877
      %1399 = vmatmul.mubr.bf16.gmra.mxu0 %v876
      %v1400 = vpop.f32.mrf.mxu0
      %v1401 = vadd.f32 0.0, %v1400
      %v1402 = vpop.f32.mrf.mxu0
      %v1403 = vpop.f32.mrf.mxu0
      %v1404 = vadd.f32 0.0, %v1403
      %v1405 = vpop.f32.mrf.mxu0
      %1406 = vmatprep.mubr.bf16.mxu0 %v879
      %1407 = vmatmul.mubr.bf16.gmra.mxu0 %v878
      %v1408 = vpop.f32.mrf.mxu0
      %v1409 = vadd.f32 0.0, %v1408
      %v1410 = vpop.f32.mrf.mxu0
      %v1411 = vpop.f32.mrf.mxu0
      %v1412 = vadd.f32 0.0, %v1411
      %v1413 = vpop.f32.mrf.mxu0
      %1414 = vmatprep.mubr.bf16.mxu0 %v881
      %1415 = vmatmul.mubr.bf16.gmra.mxu0 %v880
      %v1416 = vpop.f32.mrf.mxu0
      %v1417 = vadd.f32 0.0, %v1416
      %v1418 = vpop.f32.mrf.mxu0
      %v1419 = vpop.f32.mrf.mxu0
      %v1420 = vadd.f32 0.0, %v1419
      %v1421 = vpop.f32.mrf.mxu0
      %1422 = vmatprep.mubr.bf16.mxu0 %v883
      %1423 = vmatmul.mubr.bf16.gmra.mxu0 %v882
      %v1424 = vpop.f32.mrf.mxu0
      %v1425 = vadd.f32 0.0, %v1424
      %v1426 = vpop.f32.mrf.mxu0
      %v1427 = vpop.f32.mrf.mxu0
      %v1428 = vadd.f32 0.0, %v1427
      %v1429 = vpop.f32.mrf.mxu0
      %1430 = vmatprep.mubr.bf16.mxu0 %v885
      %1431 = vmatmul.mubr.bf16.gmra.mxu0 %v884
      %v1432 = vpop.f32.mrf.mxu0
      %v1433 = vadd.f32 0.0, %v1432
      %v1434 = vpop.f32.mrf.mxu0
      %v1435 = vpop.f32.mrf.mxu0
      %v1436 = vadd.f32 0.0, %v1435
      %v1437 = vpop.f32.mrf.mxu0
      %1438 = vmatprep.mubr.bf16.mxu0 %v887
      %1439 = vmatmul.mubr.bf16.gmra.mxu0 %v886
      %v1440 = vpop.f32.mrf.mxu0
      %v1441 = vadd.f32 0.0, %v1440
      %v1442 = vpop.f32.mrf.mxu0
      %v1443 = vpop.f32.mrf.mxu0
      %v1444 = vadd.f32 0.0, %v1443
      %v1445 = vpop.f32.mrf.mxu0
      %1446 = vmatprep.mubr.bf16.mxu0 %v889
      %1447 = vmatmul.mubr.bf16.gmra.mxu0 %v888
      %v1448 = vpop.f32.mrf.mxu0
      %v1449 = vadd.f32 0.0, %v1448
      %v1450 = vpop.f32.mrf.mxu0
      %v1451 = vpop.f32.mrf.mxu0
      %v1452 = vadd.f32 0.0, %v1451
      %v1453 = vpop.f32.mrf.mxu0
      %1454 = vmatprep.mubr.bf16.mxu0 %v891
      %1455 = vmatmul.mubr.bf16.gmra.mxu0 %v890
      %v1456 = vpop.f32.mrf.mxu0
      %v1457 = vadd.f32 0.0, %v1456
      %v1458 = vpop.f32.mrf.mxu0
      %v1459 = vpop.f32.mrf.mxu0
      %v1460 = vadd.f32 0.0, %v1459
      %v1461 = vpop.f32.mrf.mxu0
      %1462 = vmatprep.mubr.bf16.mxu0 %v893
      %1463 = vmatmul.mubr.bf16.gmra.mxu0 %v892
      %v1464 = vpop.f32.mrf.mxu0
      %v1465 = vadd.f32 0.0, %v1464
      %v1466 = vpop.f32.mrf.mxu0
      %v1467 = vpop.f32.mrf.mxu0
      %v1468 = vadd.f32 0.0, %v1467
      %v1469 = vpop.f32.mrf.mxu0
      %1470 = vmatprep.mubr.bf16.mxu0 %v895
      %1471 = vmatmul.mubr.bf16.gmra.mxu0 %v894
      %v1472 = vpop.f32.mrf.mxu0
      %v1473 = vadd.f32 0.0, %v1472
      %v1474 = vpop.f32.mrf.mxu0
      %v1475 = vpop.f32.mrf.mxu0
      %v1476 = vadd.f32 0.0, %v1475
      %v1477 = vpop.f32.mrf.mxu0
      %1478 = vmatprep.mubr.bf16.mxu0 %v897
      %1479 = vmatmul.mubr.bf16.gmra.mxu0 %v896
      %v1480 = vpop.f32.mrf.mxu0
      %v1481 = vadd.f32 0.0, %v1480
      %v1482 = vpop.f32.mrf.mxu0
      %v1483 = vpop.f32.mrf.mxu0
      %v1484 = vadd.f32 0.0, %v1483
      %v1485 = vpop.f32.mrf.mxu0
      %1486 = vmatprep.mubr.bf16.mxu0 %v899
      %1487 = vmatmul.mubr.bf16.gmra.mxu0 %v898
      %v1488 = vpop.f32.mrf.mxu0
      %v1489 = vadd.f32 0.0, %v1488
      %v1490 = vpop.f32.mrf.mxu0
      %v1491 = vpop.f32.mrf.mxu0
      %v1492 = vadd.f32 0.0, %v1491
      %v1493 = vpop.f32.mrf.mxu0
      %1494 = vmatprep.mubr.bf16.mxu0 %v901
      %1495 = vmatmul.mubr.bf16.gmra.mxu0 %v900
      %v1496 = vpop.f32.mrf.mxu0
      %v1497 = vadd.f32 0.0, %v1496
      %v1498 = vpop.f32.mrf.mxu0
      %v1499 = vpop.f32.mrf.mxu0
      %v1500 = vadd.f32 0.0, %v1499
      %v1501 = vpop.f32.mrf.mxu0
      %1502 = vmatprep.mubr.bf16.mxu0 %v903
      %1503 = vmatmul.mubr.bf16.gmra.mxu0 %v902
      %v1504 = vpop.f32.mrf.mxu0
      %v1505 = vadd.f32 0.0, %v1504
      %v1506 = vpop.f32.mrf.mxu0
      %v1507 = vpop.f32.mrf.mxu0
      %v1508 = vadd.f32 0.0, %v1507
      %v1509 = vpop.f32.mrf.mxu0
      %1510 = vmatprep.mubr.bf16.mxu0 %v905
      %1511 = vmatmul.mubr.bf16.gmra.mxu0 %v904
      %v1512 = vpop.f32.mrf.mxu0
      %v1513 = vadd.f32 0.0, %v1512
      %v1514 = vpop.f32.mrf.mxu0
      %v1515 = vpop.f32.mrf.mxu0
      %v1516 = vadd.f32 0.0, %v1515
      %v1517 = vpop.f32.mrf.mxu0
      %1518 = vmatprep.mubr.bf16.mxu0 %v907
      %1519 = vmatmul.mubr.bf16.gmra.mxu0 %v906
      %v1520 = vpop.f32.mrf.mxu0
      %v1521 = vadd.f32 0.0, %v1520
      %v1522 = vpop.f32.mrf.mxu0
      %v1523 = vpop.f32.mrf.mxu0
      %v1524 = vadd.f32 0.0, %v1523
      %v1525 = vpop.f32.mrf.mxu0
      %1526 = vdwg.mxu0
      %vm1527 = vcmask 326656
      %1528 = vst.msk [vmem:[#allocation2] sm:$0xff] %vm1527, %v1137
      %1529 = vst.msk [vmem:[#allocation2 + $0x8] sm:$0xff] %vm1527, %v1140
      %1530 = vst.msk [vmem:[#allocation2 + $0x10] sm:$0xff] %vm1527, %v1145
      %1531 = vst.msk [vmem:[#allocation2 + $0x18] sm:$0xff] %vm1527, %v1148
      %1532 = vst.msk [vmem:[#allocation2 + $0x20] sm:$0xff] %vm1527, %v1153
      %1533 = vst.msk [vmem:[#allocation2 + $0x28] sm:$0xff] %vm1527, %v1156
      %1534 = vst.msk [vmem:[#allocation2 + $0x30] sm:$0xff] %vm1527, %v1161
      %1535 = vst.msk [vmem:[#allocation2 + $0x38] sm:$0xff] %vm1527, %v1164
      %1536 = vst.msk [vmem:[#allocation2 + $0x40] sm:$0xff] %vm1527, %v1169
      %1537 = vst.msk [vmem:[#allocation2 + $0x48] sm:$0xff] %vm1527, %v1172
      %1538 = vst.msk [vmem:[#allocation2 + $0x50] sm:$0xff] %vm1527, %v1177
      %1539 = vst.msk [vmem:[#allocation2 + $0x58] sm:$0xff] %vm1527, %v1180
      %1540 = vst.msk [vmem:[#allocation2 + $0x60] sm:$0xff] %vm1527, %v1185
      %1541 = vst.msk [vmem:[#allocation2 + $0x68] sm:$0xff] %vm1527, %v1188
      %1542 = vst.msk [vmem:[#allocation2 + $0x70] sm:$0xff] %vm1527, %v1193
      %1543 = vst.msk [vmem:[#allocation2 + $0x78] sm:$0xff] %vm1527, %v1196
      %1544 = vst.msk [vmem:[#allocation2 + $0x80] sm:$0xff] %vm1527, %v1201
      %1545 = vst.msk [vmem:[#allocation2 + $0x88] sm:$0xff] %vm1527, %v1204
      %1546 = vst.msk [vmem:[#allocation2 + $0x90] sm:$0xff] %vm1527, %v1209
      %1547 = vst.msk [vmem:[#allocation2 + $0x98] sm:$0xff] %vm1527, %v1212
      %1548 = vst.msk [vmem:[#allocation2 + $0xa0] sm:$0xff] %vm1527, %v1217
      %1549 = vst.msk [vmem:[#allocation2 + $0xa8] sm:$0xff] %vm1527, %v1220
      %1550 = vst.msk [vmem:[#allocation2 + $0xb0] sm:$0xff] %vm1527, %v1225
      %1551 = vst.msk [vmem:[#allocation2 + $0xb8] sm:$0xff] %vm1527, %v1228
      %1552 = vst.msk [vmem:[#allocation2 + $0xc0] sm:$0xff] %vm1527, %v1233
      %1553 = vst.msk [vmem:[#allocation2 + $0xc8] sm:$0xff] %vm1527, %v1236
      %1554 = vst.msk [vmem:[#allocation2 + $0xd0] sm:$0xff] %vm1527, %v1241
      %1555 = vst.msk [vmem:[#allocation2 + $0xd8] sm:$0xff] %vm1527, %v1244
      %1556 = vst.msk [vmem:[#allocation2 + $0xe0] sm:$0xff] %vm1527, %v1249
      %1557 = vst.msk [vmem:[#allocation2 + $0xe8] sm:$0xff] %vm1527, %v1252
      %1558 = vst.msk [vmem:[#allocation2 + $0xf0] sm:$0xff] %vm1527, %v1257
      %1559 = vst.msk [vmem:[#allocation2 + $0xf8] sm:$0xff] %vm1527, %v1260
      %1560 = vst.msk [vmem:[#allocation2 + $0x100] sm:$0xff] %vm1527, %v1265
      %1561 = vst.msk [vmem:[#allocation2 + $0x108] sm:$0xff] %vm1527, %v1268
      %1562 = vst.msk [vmem:[#allocation2 + $0x110] sm:$0xff] %vm1527, %v1273
      %1563 = vst.msk [vmem:[#allocation2 + $0x118] sm:$0xff] %vm1527, %v1276
      %1564 = vst.msk [vmem:[#allocation2 + $0x120] sm:$0xff] %vm1527, %v1281
      %1565 = vst.msk [vmem:[#allocation2 + $0x128] sm:$0xff] %vm1527, %v1284
      %1566 = vst.msk [vmem:[#allocation2 + $0x130] sm:$0xff] %vm1527, %v1289
      %1567 = vst.msk [vmem:[#allocation2 + $0x138] sm:$0xff] %vm1527, %v1292
      %1568 = vst.msk [vmem:[#allocation2 + $0x140] sm:$0xff] %vm1527, %v1297
      %1569 = vst.msk [vmem:[#allocation2 + $0x148] sm:$0xff] %vm1527, %v1300
      %1570 = vst.msk [vmem:[#allocation2 + $0x150] sm:$0xff] %vm1527, %v1305
      %1571 = vst.msk [vmem:[#allocation2 + $0x158] sm:$0xff] %vm1527, %v1308
      %1572 = vst.msk [vmem:[#allocation2 + $0x160] sm:$0xff] %vm1527, %v1313
      %1573 = vst.msk [vmem:[#allocation2 + $0x168] sm:$0xff] %vm1527, %v1316
      %1574 = vst.msk [vmem:[#allocation2 + $0x170] sm:$0xff] %vm1527, %v1321
      %1575 = vst.msk [vmem:[#allocation2 + $0x178] sm:$0xff] %vm1527, %v1324
      %1576 = vst.msk [vmem:[#allocation2 + $0x180] sm:$0xff] %vm1527, %v1329
      %1577 = vst.msk [vmem:[#allocation2 + $0x188] sm:$0xff] %vm1527, %v1332
      %1578 = vst.msk [vmem:[#allocation2 + $0x190] sm:$0xff] %vm1527, %v1337
      %1579 = vst.msk [vmem:[#allocation2 + $0x198] sm:$0xff] %vm1527, %v1340
      %1580 = vst.msk [vmem:[#allocation2 + $0x1a0] sm:$0xff] %vm1527, %v1345
      %1581 = vst.msk [vmem:[#allocation2 + $0x1a8] sm:$0xff] %vm1527, %v1348
      %1582 = vst.msk [vmem:[#allocation2 + $0x1b0] sm:$0xff] %vm1527, %v1353
      %1583 = vst.msk [vmem:[#allocation2 + $0x1b8] sm:$0xff] %vm1527, %v1356
      %1584 = vst.msk [vmem:[#allocation2 + $0x1c0] sm:$0xff] %vm1527, %v1361
      %1585 = vst.msk [vmem:[#allocation2 + $0x1c8] sm:$0xff] %vm1527, %v1364
      %1586 = vst.msk [vmem:[#allocation2 + $0x1d0] sm:$0xff] %vm1527, %v1369
      %1587 = vst.msk [vmem:[#allocation2 + $0x1d8] sm:$0xff] %vm1527, %v1372
      %1588 = vst.msk [vmem:[#allocation2 + $0x1e0] sm:$0xff] %vm1527, %v1377
      %1589 = vst.msk [vmem:[#allocation2 + $0x1e8] sm:$0xff] %vm1527, %v1380
      %1590 = vst.msk [vmem:[#allocation2 + $0x1f0] sm:$0xff] %vm1527, %v1385
      %1591 = vst.msk [vmem:[#allocation2 + $0x1f8] sm:$0xff] %vm1527, %v1388
      %1592 = vst.msk [vmem:[#allocation2 + $0x200] sm:$0xff] %vm1527, %v1393
      %1593 = vst.msk [vmem:[#allocation2 + $0x208] sm:$0xff] %vm1527, %v1396
      %1594 = vst.msk [vmem:[#allocation2 + $0x210] sm:$0xff] %vm1527, %v1401
      %1595 = vst.msk [vmem:[#allocation2 + $0x218] sm:$0xff] %vm1527, %v1404
      %1596 = vst.msk [vmem:[#allocation2 + $0x220] sm:$0xff] %vm1527, %v1409
      %1597 = vst.msk [vmem:[#allocation2 + $0x228] sm:$0xff] %vm1527, %v1412
      %1598 = vst.msk [vmem:[#allocation2 + $0x230] sm:$0xff] %vm1527, %v1417
      %1599 = vst.msk [vmem:[#allocation2 + $0x238] sm:$0xff] %vm1527, %v1420
      %1600 = vst.msk [vmem:[#allocation2 + $0x240] sm:$0xff] %vm1527, %v1425
      %1601 = vst.msk [vmem:[#allocation2 + $0x248] sm:$0xff] %vm1527, %v1428
      %1602 = vst.msk [vmem:[#allocation2 + $0x250] sm:$0xff] %vm1527, %v1433
      %1603 = vst.msk [vmem:[#allocation2 + $0x258] sm:$0xff] %vm1527, %v1436
      %1604 = vst.msk [vmem:[#allocation2 + $0x260] sm:$0xff] %vm1527, %v1441
      %1605 = vst.msk [vmem:[#allocation2 + $0x268] sm:$0xff] %vm1527, %v1444
      %1606 = vst.msk [vmem:[#allocation2 + $0x270] sm:$0xff] %vm1527, %v1449
      %1607 = vst.msk [vmem:[#allocation2 + $0x278] sm:$0xff] %vm1527, %v1452
      %1608 = vst.msk [vmem:[#allocation2 + $0x280] sm:$0xff] %vm1527, %v1457
      %1609 = vst.msk [vmem:[#allocation2 + $0x288] sm:$0xff] %vm1527, %v1460
      %1610 = vst.msk [vmem:[#allocation2 + $0x290] sm:$0xff] %vm1527, %v1465
      %1611 = vst.msk [vmem:[#allocation2 + $0x298] sm:$0xff] %vm1527, %v1468
      %1612 = vst.msk [vmem:[#allocation2 + $0x2a0] sm:$0xff] %vm1527, %v1473
      %1613 = vst.msk [vmem:[#allocation2 + $0x2a8] sm:$0xff] %vm1527, %v1476
      %1614 = vst.msk [vmem:[#allocation2 + $0x2b0] sm:$0xff] %vm1527, %v1481
      %1615 = vst.msk [vmem:[#allocation2 + $0x2b8] sm:$0xff] %vm1527, %v1484
      %1616 = vst.msk [vmem:[#allocation2 + $0x2c0] sm:$0xff] %vm1527, %v1489
      %1617 = vst.msk [vmem:[#allocation2 + $0x2c8] sm:$0xff] %vm1527, %v1492
      %1618 = vst.msk [vmem:[#allocation2 + $0x2d0] sm:$0xff] %vm1527, %v1497
      %1619 = vst.msk [vmem:[#allocation2 + $0x2d8] sm:$0xff] %vm1527, %v1500
      %1620 = vst.msk [vmem:[#allocation2 + $0x2e0] sm:$0xff] %vm1527, %v1505
      %1621 = vst.msk [vmem:[#allocation2 + $0x2e8] sm:$0xff] %vm1527, %v1508
      %1622 = vst.msk [vmem:[#allocation2 + $0x2f0] sm:$0xff] %vm1527, %v1513
      %1623 = vst.msk [vmem:[#allocation2 + $0x2f8] sm:$0xff] %vm1527, %v1516
      %1624 = vst.msk [vmem:[#allocation2 + $0x300] sm:$0xff] %vm1527, %v1521
      %1625 = vst.msk [vmem:[#allocation2 + $0x308] sm:$0xff] %vm1527, %v1524
      %v1626 = vld [vmem:[%s2] sm:$0x1]
      %v1627 = vld [vmem:[#allocation2] ss:$2 sm:$0xff]
      %s1628 = scalar_lea.vmem [#allocation2], 16
      %v1629 = vld [vmem:[%s1628] ss:$2 sm:$0xff]
      %s1630 = scalar_lea.vmem [#allocation2], 32
      %v1631 = vld [vmem:[%s1630] ss:$2 sm:$0xff]
      %s1632 = scalar_lea.vmem [#allocation2], 48
      %v1633 = vld [vmem:[%s1632] ss:$2 sm:$0xf]
      %s1634 = scalar_lea.vmem [#allocation2], 1
      %v1635 = vld [vmem:[%s1634] ss:$2 sm:$0xff]
      %s1636 = scalar_lea.vmem [#allocation2], 17
      %v1637 = vld [vmem:[%s1636] ss:$2 sm:$0xff]
      %s1638 = scalar_lea.vmem [#allocation2], 33
      %v1639 = vld [vmem:[%s1638] ss:$2 sm:$0xff]
      %s1640 = scalar_lea.vmem [#allocation2], 49
      %v1641 = vld [vmem:[%s1640] ss:$2 sm:$0xf]
      %v1642 = vmax.f32 %v1627, %v1635
      %v1643 = vmax.f32 %v1629, %v1637
      %v1644 = vmax.f32 %v1631, %v1639
      %v1645 = vmax.f32 %v1633, %v1641
      %vm1649 = vcmask 1041408
      %v1650 = vrot.slane %v1643, 6
      %v1651 = vrot.slane %v1644, 6
      %v1652 = vsel %vm1649, %v1650, %v1651
      %v1653 = vrot.slane %v1645, 6
      %v1654 = vsel %vm1649, %v1651, %v1653
      %v1657 = vmax.f32 %v1642, %v1652
      %v1658 = vmax.f32 %v1643, %v1654
      %v1660 = vlaneseq
      %v1661 = vshrl.u32 %v1660, 7
      %v1662 = vsub.s32 0, %v1661
      %v1663 = vrot.slane %v1626, %v1662
      %v1665 = vadd.f32 %v1657, %v1663
      %v1666 = vadd.f32 %v1658, %v1663
      %v1667 = vmax.f32 %v1665, 0.0
      %v1668 = vmax.f32 %v1666, 0.0
      %v1669 = vpack.c.bf16 %v1668, %v1667
      %v1671 = vunpack.c.l.b16 %v1669
      %v1672 = vunpack.c.h.b16 %v1669
      %v1673 = vpack.c.b16 %v1671, %v1671
      %v1674 = vpack.c.b16 %v1672, %v1672
      %vm1677 = vcmask 322560
      %1678 = vst.msk [vmem:[#allocation3] sm:$0xf] %vm1677, %v1673
      %vm1679 = vcmask 321536
      %1680 = vst.msk [vmem:[#allocation3 + $0x4] sm:$0x7] %vm1679, %v1674
      %s1681 = scalar_lea.vmem [#allocation2], 56
      %v1682 = vld [vmem:[%s1681] ss:$2 sm:$0xff]
      %s1683 = scalar_lea.vmem [#allocation2], 72
      %v1684 = vld [vmem:[%s1683] ss:$2 sm:$0xff]
      %s1685 = scalar_lea.vmem [#allocation2], 88
      %v1686 = vld [vmem:[%s1685] ss:$2 sm:$0xff]
      %s1687 = scalar_lea.vmem [#allocation2], 104
      %v1688 = vld [vmem:[%s1687] ss:$2 sm:$0xf]
      %s1689 = scalar_lea.vmem [#allocation2], 57
      %v1690 = vld [vmem:[%s1689] ss:$2 sm:$0xff]
      %s1691 = scalar_lea.vmem [#allocation2], 73
      %v1692 = vld [vmem:[%s1691] ss:$2 sm:$0xff]
      %s1693 = scalar_lea.vmem [#allocation2], 89
      %v1694 = vld [vmem:[%s1693] ss:$2 sm:$0xff]
      %s1695 = scalar_lea.vmem [#allocation2], 105
      %v1696 = vld [vmem:[%s1695] ss:$2 sm:$0xf]
      %v1697 = vmax.f32 %v1682, %v1690
      %v1698 = vmax.f32 %v1684, %v1692
      %v1699 = vmax.f32 %v1686, %v1694
      %v1700 = vmax.f32 %v1688, %v1696
      %v1704 = vrot.slane %v1698, 6
      %v1705 = vrot.slane %v1699, 6
      %v1706 = vsel %vm1649, %v1704, %v1705
      %v1707 = vrot.slane %v1700, 6
      %v1708 = vsel %vm1649, %v1705, %v1707
      %v1711 = vmax.f32 %v1697, %v1706
      %v1712 = vmax.f32 %v1698, %v1708
      %v1713 = vadd.f32 %v1711, %v1663
      %v1714 = vadd.f32 %v1712, %v1663
      %v1715 = vmax.f32 %v1713, 0.0
      %v1716 = vmax.f32 %v1714, 0.0
      %v1717 = vpack.c.bf16 %v1716, %v1715
      %v1719 = vunpack.c.l.b16 %v1717
      %v1720 = vunpack.c.h.b16 %v1717
      %v1721 = vpack.c.b16 %v1719, %v1719
      %v1722 = vpack.c.b16 %v1720, %v1720
      %vm1723 = vcmask 1042432
      %vm1724 = vcmask 1046532
      %vm1725 = vmor %vm1723, %vm1724
      %v1726 = vrot.slane %v1721, 5
      %v1727 = vrot.slane %v1726, 4
      %v1728 = vrot.slane %v1722, 5
      %v1729 = vsel %vm1725, %v1727, %v1728
      %v1730 = vrot.slane %v1728, 4
      %vm1734 = vcmask 322563
      %1735 = vst.msk [vmem:[#allocation3 + $0x4] sm:$0x8] %vm1734, %v1726
      %1736 = vst.msk [vmem:[#allocation3 + $0x8] sm:$0xf] %vm1677, %v1729
      %vm1737 = vcmask 320512
      %1738 = vst.msk [vmem:[#allocation3 + $0xc] sm:$0x3] %vm1737, %v1730
      %s1739 = scalar_lea.vmem [#allocation2], 112
      %v1740 = vld [vmem:[%s1739] ss:$2 sm:$0xff]
      %s1741 = scalar_lea.vmem [#allocation2], 128
      %v1742 = vld [vmem:[%s1741] ss:$2 sm:$0xff]
      %s1743 = scalar_lea.vmem [#allocation2], 144
      %v1744 = vld [vmem:[%s1743] ss:$2 sm:$0xff]
      %s1745 = scalar_lea.vmem [#allocation2], 160
      %v1746 = vld [vmem:[%s1745] ss:$2 sm:$0xf]
      %s1747 = scalar_lea.vmem [#allocation2], 113
      %v1748 = vld [vmem:[%s1747] ss:$2 sm:$0xff]
      %s1749 = scalar_lea.vmem [#allocation2], 129
      %v1750 = vld [vmem:[%s1749] ss:$2 sm:$0xff]
      %s1751 = scalar_lea.vmem [#allocation2], 145
      %v1752 = vld [vmem:[%s1751] ss:$2 sm:$0xff]
      %s1753 = scalar_lea.vmem [#allocation2], 161
      %v1754 = vld [vmem:[%s1753] ss:$2 sm:$0xf]
      %v1755 = vmax.f32 %v1740, %v1748
      %v1756 = vmax.f32 %v1742, %v1750
      %v1757 = vmax.f32 %v1744, %v1752
      %v1758 = vmax.f32 %v1746, %v1754
      %v1762 = vrot.slane %v1756, 6
      %v1763 = vrot.slane %v1757, 6
      %v1764 = vsel %vm1649, %v1762, %v1763
      %v1765 = vrot.slane %v1758, 6
      %v1766 = vsel %vm1649, %v1763, %v1765
      %v1769 = vmax.f32 %v1755, %v1764
      %v1770 = vmax.f32 %v1756, %v1766
      %v1771 = vadd.f32 %v1769, %v1663
      %v1772 = vadd.f32 %v1770, %v1663
      %v1773 = vmax.f32 %v1771, 0.0
      %v1774 = vmax.f32 %v1772, 0.0
      %v1775 = vpack.c.bf16 %v1774, %v1773
      %v1777 = vunpack.c.l.b16 %v1775
      %v1778 = vunpack.c.h.b16 %v1775
      %v1779 = vpack.c.b16 %v1777, %v1777
      %v1780 = vpack.c.b16 %v1778, %v1778
      %vm1781 = vcmask 1041408
      %vm1782 = vcmask 1045508
      %vm1783 = vmor %vm1781, %vm1782
      %v1784 = vrot.slane %v1779, 6
      %v1785 = vrot.slane %v1784, 4
      %v1786 = vrot.slane %v1780, 6
      %v1787 = vsel %vm1783, %v1785, %v1786
      %v1788 = vrot.slane %v1786, 4
      %vm1792 = vcmask 322562
      %1793 = vst.msk [vmem:[#allocation3 + $0xc] sm:$0xc] %vm1792, %v1784
      %1794 = vst.msk [vmem:[#allocation3 + $0x10] sm:$0xf] %vm1677, %v1787
      %vm1795 = vcmask 319488
      %1796 = vst.msk [vmem:[#allocation3 + $0x14] sm:$0x1] %vm1795, %v1788
      %s1797 = scalar_lea.vmem [#allocation2], 168
      %v1798 = vld [vmem:[%s1797] ss:$2 sm:$0xff]
      %s1799 = scalar_lea.vmem [#allocation2], 184
      %v1800 = vld [vmem:[%s1799] ss:$2 sm:$0xff]
      %s1801 = scalar_lea.vmem [#allocation2], 200
      %v1802 = vld [vmem:[%s1801] ss:$2 sm:$0xff]
      %s1803 = scalar_lea.vmem [#allocation2], 216
      %v1804 = vld [vmem:[%s1803] ss:$2 sm:$0xf]
      %s1805 = scalar_lea.vmem [#allocation2], 169
      %v1806 = vld [vmem:[%s1805] ss:$2 sm:$0xff]
      %s1807 = scalar_lea.vmem [#allocation2], 185
      %v1808 = vld [vmem:[%s1807] ss:$2 sm:$0xff]
      %s1809 = scalar_lea.vmem [#allocation2], 201
      %v1810 = vld [vmem:[%s1809] ss:$2 sm:$0xff]
      %s1811 = scalar_lea.vmem [#allocation2], 217
      %v1812 = vld [vmem:[%s1811] ss:$2 sm:$0xf]
      %v1813 = vmax.f32 %v1798, %v1806
      %v1814 = vmax.f32 %v1800, %v1808
      %v1815 = vmax.f32 %v1802, %v1810
      %v1816 = vmax.f32 %v1804, %v1812
      %v1820 = vrot.slane %v1814, 6
      %v1821 = vrot.slane %v1815, 6
      %v1822 = vsel %vm1649, %v1820, %v1821
      %v1823 = vrot.slane %v1816, 6
      %v1824 = vsel %vm1649, %v1821, %v1823
      %v1827 = vmax.f32 %v1813, %v1822
      %v1828 = vmax.f32 %v1814, %v1824
      %v1829 = vadd.f32 %v1827, %v1663
      %v1830 = vadd.f32 %v1828, %v1663
      %v1831 = vmax.f32 %v1829, 0.0
      %v1832 = vmax.f32 %v1830, 0.0
      %v1833 = vpack.c.bf16 %v1832, %v1831
      %v1835 = vunpack.c.l.b16 %v1833
      %v1836 = vunpack.c.h.b16 %v1833
      %v1837 = vpack.c.b16 %v1835, %v1835
      %v1838 = vpack.c.b16 %v1836, %v1836
      %vm1839 = vcmask 1040384
      %vm1840 = vcmask 1044484
      %vm1841 = vmor %vm1839, %vm1840
      %v1842 = vrot.slane %v1837, 7
      %v1843 = vrot.slane %v1842, 4
      %v1844 = vrot.slane %v1838, 7
      %v1845 = vsel %vm1841, %v1843, %v1844
      %vm1848 = vcmask 322561
      %1849 = vst.msk [vmem:[#allocation3 + $0x14] sm:$0xe] %vm1848, %v1842
      %1850 = vst.msk [vmem:[#allocation3 + $0x18] sm:$0xf] %vm1677, %v1845
      %s1851 = scalar_lea.vmem [#allocation2], 224
      %v1852 = vld [vmem:[%s1851] ss:$2 sm:$0xff]
      %s1853 = scalar_lea.vmem [#allocation2], 240
      %v1854 = vld [vmem:[%s1853] ss:$2 sm:$0xff]
      %s1855 = scalar_lea.vmem [#allocation2], 256
      %v1856 = vld [vmem:[%s1855] ss:$2 sm:$0xff]
      %s1857 = scalar_lea.vmem [#allocation2], 272
      %v1858 = vld [vmem:[%s1857] ss:$2 sm:$0xf]
      %s1859 = scalar_lea.vmem [#allocation2], 225
      %v1860 = vld [vmem:[%s1859] ss:$2 sm:$0xff]
      %s1861 = scalar_lea.vmem [#allocation2], 241
      %v1862 = vld [vmem:[%s1861] ss:$2 sm:$0xff]
      %s1863 = scalar_lea.vmem [#allocation2], 257
      %v1864 = vld [vmem:[%s1863] ss:$2 sm:$0xff]
      %s1865 = scalar_lea.vmem [#allocation2], 273
      %v1866 = vld [vmem:[%s1865] ss:$2 sm:$0xf]
      %v1867 = vmax.f32 %v1852, %v1860
      %v1868 = vmax.f32 %v1854, %v1862
      %v1869 = vmax.f32 %v1856, %v1864
      %v1870 = vmax.f32 %v1858, %v1866
      %v1874 = vrot.slane %v1868, 6
      %v1875 = vrot.slane %v1869, 6
      %v1876 = vsel %vm1649, %v1874, %v1875
      %v1877 = vrot.slane %v1870, 6
      %v1878 = vsel %vm1649, %v1875, %v1877
      %v1881 = vmax.f32 %v1867, %v1876
      %v1882 = vmax.f32 %v1868, %v1878
      %v1883 = vadd.f32 %v1881, %v1663
      %v1884 = vadd.f32 %v1882, %v1663
      %v1885 = vmax.f32 %v1883, 0.0
      %v1886 = vmax.f32 %v1884, 0.0
      %v1887 = vpack.c.bf16 %v1886, %v1885
      %v1889 = vunpack.c.l.b16 %v1887
      %v1890 = vunpack.c.h.b16 %v1887
      %v1891 = vpack.c.b16 %v1889, %v1889
      %v1892 = vpack.c.b16 %v1890, %v1890
      %1895 = vst.msk [vmem:[#allocation3 + $0x1c] sm:$0xf] %vm1677, %v1891
      %1896 = vst.msk [vmem:[#allocation3 + $0x20] sm:$0x7] %vm1679, %v1892
      %s1897 = scalar_lea.vmem [#allocation2], 280
      %v1898 = vld [vmem:[%s1897] ss:$2 sm:$0xff]
      %s1899 = scalar_lea.vmem [#allocation2], 296
      %v1900 = vld [vmem:[%s1899] ss:$2 sm:$0xff]
      %s1901 = scalar_lea.vmem [#allocation2], 312
      %v1902 = vld [vmem:[%s1901] ss:$2 sm:$0xff]
      %s1903 = scalar_lea.vmem [#allocation2], 328
      %v1904 = vld [vmem:[%s1903] ss:$2 sm:$0xf]
      %s1905 = scalar_lea.vmem [#allocation2], 281
      %v1906 = vld [vmem:[%s1905] ss:$2 sm:$0xff]
      %s1907 = scalar_lea.vmem [#allocation2], 297
      %v1908 = vld [vmem:[%s1907] ss:$2 sm:$0xff]
      %s1909 = scalar_lea.vmem [#allocation2], 313
      %v1910 = vld [vmem:[%s1909] ss:$2 sm:$0xff]
      %s1911 = scalar_lea.vmem [#allocation2], 329
      %v1912 = vld [vmem:[%s1911] ss:$2 sm:$0xf]
      %v1913 = vmax.f32 %v1898, %v1906
      %v1914 = vmax.f32 %v1900, %v1908
      %v1915 = vmax.f32 %v1902, %v1910
      %v1916 = vmax.f32 %v1904, %v1912
      %v1920 = vrot.slane %v1914, 6
      %v1921 = vrot.slane %v1915, 6
      %v1922 = vsel %vm1649, %v1920, %v1921
      %v1923 = vrot.slane %v1916, 6
      %v1924 = vsel %vm1649, %v1921, %v1923
      %v1927 = vmax.f32 %v1913, %v1922
      %v1928 = vmax.f32 %v1914, %v1924
      %v1929 = vadd.f32 %v1927, %v1663
      %v1930 = vadd.f32 %v1928, %v1663
      %v1931 = vmax.f32 %v1929, 0.0
      %v1932 = vmax.f32 %v1930, 0.0
      %v1933 = vpack.c.bf16 %v1932, %v1931
      %v1935 = vunpack.c.l.b16 %v1933
      %v1936 = vunpack.c.h.b16 %v1933
      %v1937 = vpack.c.b16 %v1935, %v1935
      %v1938 = vpack.c.b16 %v1936, %v1936
      %v1939 = vrot.slane %v1937, 5
      %v1940 = vrot.slane %v1939, 4
      %v1941 = vrot.slane %v1938, 5
      %v1942 = vsel %vm1725, %v1940, %v1941
      %v1943 = vrot.slane %v1941, 4
      %1947 = vst.msk [vmem:[#allocation3 + $0x20] sm:$0x8] %vm1734, %v1939
      %1948 = vst.msk [vmem:[#allocation3 + $0x24] sm:$0xf] %vm1677, %v1942
      %1949 = vst.msk [vmem:[#allocation3 + $0x28] sm:$0x3] %vm1737, %v1943
      %s1950 = scalar_lea.vmem [#allocation2], 336
      %v1951 = vld [vmem:[%s1950] ss:$2 sm:$0xff]
      %s1952 = scalar_lea.vmem [#allocation2], 352
      %v1953 = vld [vmem:[%s1952] ss:$2 sm:$0xff]
      %s1954 = scalar_lea.vmem [#allocation2], 368
      %v1955 = vld [vmem:[%s1954] ss:$2 sm:$0xff]
      %s1956 = scalar_lea.vmem [#allocation2], 384
      %v1957 = vld [vmem:[%s1956] ss:$2 sm:$0xf]
      %s1958 = scalar_lea.vmem [#allocation2], 337
      %v1959 = vld [vmem:[%s1958] ss:$2 sm:$0xff]
      %s1960 = scalar_lea.vmem [#allocation2], 353
      %v1961 = vld [vmem:[%s1960] ss:$2 sm:$0xff]
      %s1962 = scalar_lea.vmem [#allocation2], 369
      %v1963 = vld [vmem:[%s1962] ss:$2 sm:$0xff]
      %s1964 = scalar_lea.vmem [#allocation2], 385
      %v1965 = vld [vmem:[%s1964] ss:$2 sm:$0xf]
      %v1966 = vmax.f32 %v1951, %v1959
      %v1967 = vmax.f32 %v1953, %v1961
      %v1968 = vmax.f32 %v1955, %v1963
      %v1969 = vmax.f32 %v1957, %v1965
      %v1973 = vrot.slane %v1967, 6
      %v1974 = vrot.slane %v1968, 6
      %v1975 = vsel %vm1649, %v1973, %v1974
      %v1976 = vrot.slane %v1969, 6
      %v1977 = vsel %vm1649, %v1974, %v1976
      %v1980 = vmax.f32 %v1966, %v1975
      %v1981 = vmax.f32 %v1967, %v1977
      %v1982 = vadd.f32 %v1980, %v1663
      %v1983 = vadd.f32 %v1981, %v1663
      %v1984 = vmax.f32 %v1982, 0.0
      %v1985 = vmax.f32 %v1983, 0.0
      %v1986 = vpack.c.bf16 %v1985, %v1984
      %v1988 = vunpack.c.l.b16 %v1986
      %v1989 = vunpack.c.h.b16 %v1986
      %v1990 = vpack.c.b16 %v1988, %v1988
      %v1991 = vpack.c.b16 %v1989, %v1989
      %v1992 = vrot.slane %v1990, 6
      %v1993 = vrot.slane %v1992, 4
      %v1994 = vrot.slane %v1991, 6
      %v1995 = vsel %vm1783, %v1993, %v1994
      %v1996 = vrot.slane %v1994, 4
      %2000 = vst.msk [vmem:[#allocation3 + $0x28] sm:$0xc] %vm1792, %v1992
      %2001 = vst.msk [vmem:[#allocation3 + $0x2c] sm:$0xf] %vm1677, %v1995
      %2002 = vst.msk [vmem:[#allocation3 + $0x30] sm:$0x1] %vm1795, %v1996
      %s2003 = scalar_lea.vmem [#allocation2], 392
      %v2004 = vld [vmem:[%s2003] ss:$2 sm:$0xff]
      %s2005 = scalar_lea.vmem [#allocation2], 408
      %v2006 = vld [vmem:[%s2005] ss:$2 sm:$0xff]
      %s2007 = scalar_lea.vmem [#allocation2], 424
      %v2008 = vld [vmem:[%s2007] ss:$2 sm:$0xff]
      %s2009 = scalar_lea.vmem [#allocation2], 440
      %v2010 = vld [vmem:[%s2009] ss:$2 sm:$0xf]
      %s2011 = scalar_lea.vmem [#allocation2], 393
      %v2012 = vld [vmem:[%s2011] ss:$2 sm:$0xff]
      %s2013 = scalar_lea.vmem [#allocation2], 409
      %v2014 = vld [vmem:[%s2013] ss:$2 sm:$0xff]
      %s2015 = scalar_lea.vmem [#allocation2], 425
      %v2016 = vld [vmem:[%s2015] ss:$2 sm:$0xff]
      %s2017 = scalar_lea.vmem [#allocation2], 441
      %v2018 = vld [vmem:[%s2017] ss:$2 sm:$0xf]
      %v2019 = vmax.f32 %v2004, %v2012
      %v2020 = vmax.f32 %v2006, %v2014
      %v2021 = vmax.f32 %v2008, %v2016
      %v2022 = vmax.f32 %v2010, %v2018
      %v2026 = vrot.slane %v2020, 6
      %v2027 = vrot.slane %v2021, 6
      %v2028 = vsel %vm1649, %v2026, %v2027
      %v2029 = vrot.slane %v2022, 6
      %v2030 = vsel %vm1649, %v2027, %v2029
      %v2033 = vmax.f32 %v2019, %v2028
      %v2034 = vmax.f32 %v2020, %v2030
      %v2035 = vadd.f32 %v2033, %v1663
      %v2036 = vadd.f32 %v2034, %v1663
      %v2037 = vmax.f32 %v2035, 0.0
      %v2038 = vmax.f32 %v2036, 0.0
      %v2039 = vpack.c.bf16 %v2038, %v2037
      %v2041 = vunpack.c.l.b16 %v2039
      %v2042 = vunpack.c.h.b16 %v2039
      %v2043 = vpack.c.b16 %v2041, %v2041
      %v2044 = vpack.c.b16 %v2042, %v2042
      %v2045 = vrot.slane %v2043, 7
      %v2046 = vrot.slane %v2045, 4
      %v2047 = vrot.slane %v2044, 7
      %v2048 = vsel %vm1841, %v2046, %v2047
      %2051 = vst.msk [vmem:[#allocation3 + $0x30] sm:$0xe] %vm1848, %v2045
      %2052 = vst.msk [vmem:[#allocation3 + $0x34] sm:$0xf] %vm1677, %v2048
      %s2053 = scalar_lea.vmem [#allocation2], 448
      %v2054 = vld [vmem:[%s2053] ss:$2 sm:$0xff]
      %s2055 = scalar_lea.vmem [#allocation2], 464
      %v2056 = vld [vmem:[%s2055] ss:$2 sm:$0xff]
      %s2057 = scalar_lea.vmem [#allocation2], 480
      %v2058 = vld [vmem:[%s2057] ss:$2 sm:$0xff]
      %s2059 = scalar_lea.vmem [#allocation2], 496
      %v2060 = vld [vmem:[%s2059] ss:$2 sm:$0xf]
      %s2061 = scalar_lea.vmem [#allocation2], 449
      %v2062 = vld [vmem:[%s2061] ss:$2 sm:$0xff]
      %s2063 = scalar_lea.vmem [#allocation2], 465
      %v2064 = vld [vmem:[%s2063] ss:$2 sm:$0xff]
      %s2065 = scalar_lea.vmem [#allocation2], 481
      %v2066 = vld [vmem:[%s2065] ss:$2 sm:$0xff]
      %s2067 = scalar_lea.vmem [#allocation2], 497
      %v2068 = vld [vmem:[%s2067] ss:$2 sm:$0xf]
      %v2069 = vmax.f32 %v2054, %v2062
      %v2070 = vmax.f32 %v2056, %v2064
      %v2071 = vmax.f32 %v2058, %v2066
      %v2072 = vmax.f32 %v2060, %v2068
      %v2076 = vrot.slane %v2070, 6
      %v2077 = vrot.slane %v2071, 6
      %v2078 = vsel %vm1649, %v2076, %v2077
      %v2079 = vrot.slane %v2072, 6
      %v2080 = vsel %vm1649, %v2077, %v2079
      %v2083 = vmax.f32 %v2069, %v2078
      %v2084 = vmax.f32 %v2070, %v2080
      %v2085 = vadd.f32 %v2083, %v1663
      %v2086 = vadd.f32 %v2084, %v1663
      %v2087 = vmax.f32 %v2085, 0.0
      %v2088 = vmax.f32 %v2086, 0.0
      %v2089 = vpack.c.bf16 %v2088, %v2087
      %v2091 = vunpack.c.l.b16 %v2089
      %v2092 = vunpack.c.h.b16 %v2089
      %v2093 = vpack.c.b16 %v2091, %v2091
      %v2094 = vpack.c.b16 %v2092, %v2092
      %2097 = vst.msk [vmem:[#allocation3 + $0x38] sm:$0xf] %vm1677, %v2093
      %2098 = vst.msk [vmem:[#allocation3 + $0x3c] sm:$0x7] %vm1679, %v2094
      %s2099 = scalar_lea.vmem [#allocation2], 504
      %v2100 = vld [vmem:[%s2099] ss:$2 sm:$0xff]
      %s2101 = scalar_lea.vmem [#allocation2], 520
      %v2102 = vld [vmem:[%s2101] ss:$2 sm:$0xff]
      %s2103 = scalar_lea.vmem [#allocation2], 536
      %v2104 = vld [vmem:[%s2103] ss:$2 sm:$0xff]
      %s2105 = scalar_lea.vmem [#allocation2], 552
      %v2106 = vld [vmem:[%s2105] ss:$2 sm:$0xf]
      %s2107 = scalar_lea.vmem [#allocation2], 505
      %v2108 = vld [vmem:[%s2107] ss:$2 sm:$0xff]
      %s2109 = scalar_lea.vmem [#allocation2], 521
      %v2110 = vld [vmem:[%s2109] ss:$2 sm:$0xff]
      %s2111 = scalar_lea.vmem [#allocation2], 537
      %v2112 = vld [vmem:[%s2111] ss:$2 sm:$0xff]
      %s2113 = scalar_lea.vmem [#allocation2], 553
      %v2114 = vld [vmem:[%s2113] ss:$2 sm:$0xf]
      %v2115 = vmax.f32 %v2100, %v2108
      %v2116 = vmax.f32 %v2102, %v2110
      %v2117 = vmax.f32 %v2104, %v2112
      %v2118 = vmax.f32 %v2106, %v2114
      %v2122 = vrot.slane %v2116, 6
      %v2123 = vrot.slane %v2117, 6
      %v2124 = vsel %vm1649, %v2122, %v2123
      %v2125 = vrot.slane %v2118, 6
      %v2126 = vsel %vm1649, %v2123, %v2125
      %v2129 = vmax.f32 %v2115, %v2124
      %v2130 = vmax.f32 %v2116, %v2126
      %v2131 = vadd.f32 %v2129, %v1663
      %v2132 = vadd.f32 %v2130, %v1663
      %v2133 = vmax.f32 %v2131, 0.0
      %v2134 = vmax.f32 %v2132, 0.0
      %v2135 = vpack.c.bf16 %v2134, %v2133
      %v2137 = vunpack.c.l.b16 %v2135
      %v2138 = vunpack.c.h.b16 %v2135
      %v2139 = vpack.c.b16 %v2137, %v2137
      %v2140 = vpack.c.b16 %v2138, %v2138
      %v2141 = vrot.slane %v2139, 5
      %v2142 = vrot.slane %v2141, 4
      %v2143 = vrot.slane %v2140, 5
      %v2144 = vsel %vm1725, %v2142, %v2143
      %v2145 = vrot.slane %v2143, 4
      %2149 = vst.msk [vmem:[#allocation3 + $0x3c] sm:$0x8] %vm1734, %v2141
      %2150 = vst.msk [vmem:[#allocation3 + $0x40] sm:$0xf] %vm1677, %v2144
      %2151 = vst.msk [vmem:[#allocation3 + $0x44] sm:$0x3] %vm1737, %v2145
      %s2152 = scalar_lea.vmem [#allocation2], 560
      %v2153 = vld [vmem:[%s2152] ss:$2 sm:$0xff]
      %s2154 = scalar_lea.vmem [#allocation2], 576
      %v2155 = vld [vmem:[%s2154] ss:$2 sm:$0xff]
      %s2156 = scalar_lea.vmem [#allocation2], 592
      %v2157 = vld [vmem:[%s2156] ss:$2 sm:$0xff]
      %s2158 = scalar_lea.vmem [#allocation2], 608
      %v2159 = vld [vmem:[%s2158] ss:$2 sm:$0xf]
      %s2160 = scalar_lea.vmem [#allocation2], 561
      %v2161 = vld [vmem:[%s2160] ss:$2 sm:$0xff]
      %s2162 = scalar_lea.vmem [#allocation2], 577
      %v2163 = vld [vmem:[%s2162] ss:$2 sm:$0xff]
      %s2164 = scalar_lea.vmem [#allocation2], 593
      %v2165 = vld [vmem:[%s2164] ss:$2 sm:$0xff]
      %s2166 = scalar_lea.vmem [#allocation2], 609
      %v2167 = vld [vmem:[%s2166] ss:$2 sm:$0xf]
      %v2168 = vmax.f32 %v2153, %v2161
      %v2169 = vmax.f32 %v2155, %v2163
      %v2170 = vmax.f32 %v2157, %v2165
      %v2171 = vmax.f32 %v2159, %v2167
      %v2175 = vrot.slane %v2169, 6
      %v2176 = vrot.slane %v2170, 6
      %v2177 = vsel %vm1649, %v2175, %v2176
      %v2178 = vrot.slane %v2171, 6
      %v2179 = vsel %vm1649, %v2176, %v2178
      %v2182 = vmax.f32 %v2168, %v2177
      %v2183 = vmax.f32 %v2169, %v2179
      %v2184 = vadd.f32 %v2182, %v1663
      %v2185 = vadd.f32 %v2183, %v1663
      %v2186 = vmax.f32 %v2184, 0.0
      %v2187 = vmax.f32 %v2185, 0.0
      %v2188 = vpack.c.bf16 %v2187, %v2186
      %v2190 = vunpack.c.l.b16 %v2188
      %v2191 = vunpack.c.h.b16 %v2188
      %v2192 = vpack.c.b16 %v2190, %v2190
      %v2193 = vpack.c.b16 %v2191, %v2191
      %v2194 = vrot.slane %v2192, 6
      %v2195 = vrot.slane %v2194, 4
      %v2196 = vrot.slane %v2193, 6
      %v2197 = vsel %vm1783, %v2195, %v2196
      %v2198 = vrot.slane %v2196, 4
      %2202 = vst.msk [vmem:[#allocation3 + $0x44] sm:$0xc] %vm1792, %v2194
      %2203 = vst.msk [vmem:[#allocation3 + $0x48] sm:$0xf] %vm1677, %v2197
      %2204 = vst.msk [vmem:[#allocation3 + $0x4c] sm:$0x1] %vm1795, %v2198
      %s2205 = scalar_lea.vmem [#allocation2], 616
      %v2206 = vld [vmem:[%s2205] ss:$2 sm:$0xff]
      %s2207 = scalar_lea.vmem [#allocation2], 632
      %v2208 = vld [vmem:[%s2207] ss:$2 sm:$0xff]
      %s2209 = scalar_lea.vmem [#allocation2], 648
      %v2210 = vld [vmem:[%s2209] ss:$2 sm:$0xff]
      %s2211 = scalar_lea.vmem [#allocation2], 664
      %v2212 = vld [vmem:[%s2211] ss:$2 sm:$0xf]
      %s2213 = scalar_lea.vmem [#allocation2], 617
      %v2214 = vld [vmem:[%s2213] ss:$2 sm:$0xff]
      %s2215 = scalar_lea.vmem [#allocation2], 633
      %v2216 = vld [vmem:[%s2215] ss:$2 sm:$0xff]
      %s2217 = scalar_lea.vmem [#allocation2], 649
      %v2218 = vld [vmem:[%s2217] ss:$2 sm:$0xff]
      %s2219 = scalar_lea.vmem [#allocation2], 665
      %v2220 = vld [vmem:[%s2219] ss:$2 sm:$0xf]
      %v2221 = vmax.f32 %v2206, %v2214
      %v2222 = vmax.f32 %v2208, %v2216
      %v2223 = vmax.f32 %v2210, %v2218
      %v2224 = vmax.f32 %v2212, %v2220
      %v2228 = vrot.slane %v2222, 6
      %v2229 = vrot.slane %v2223, 6
      %v2230 = vsel %vm1649, %v2228, %v2229
      %v2231 = vrot.slane %v2224, 6
      %v2232 = vsel %vm1649, %v2229, %v2231
      %v2235 = vmax.f32 %v2221, %v2230
      %v2236 = vmax.f32 %v2222, %v2232
      %v2237 = vadd.f32 %v2235, %v1663
      %v2238 = vadd.f32 %v2236, %v1663
      %v2239 = vmax.f32 %v2237, 0.0
      %v2240 = vmax.f32 %v2238, 0.0
      %v2241 = vpack.c.bf16 %v2240, %v2239
      %v2243 = vunpack.c.l.b16 %v2241
      %v2244 = vunpack.c.h.b16 %v2241
      %v2245 = vpack.c.b16 %v2243, %v2243
      %v2246 = vpack.c.b16 %v2244, %v2244
      %v2247 = vrot.slane %v2245, 7
      %v2248 = vrot.slane %v2247, 4
      %v2249 = vrot.slane %v2246, 7
      %v2250 = vsel %vm1841, %v2248, %v2249
      %2253 = vst.msk [vmem:[#allocation3 + $0x4c] sm:$0xe] %vm1848, %v2247
      %2254 = vst.msk [vmem:[#allocation3 + $0x50] sm:$0xf] %vm1677, %v2250
      %s2255 = scalar_lea.vmem [#allocation2], 672
      %v2256 = vld [vmem:[%s2255] ss:$2 sm:$0xff]
      %s2257 = scalar_lea.vmem [#allocation2], 688
      %v2258 = vld [vmem:[%s2257] ss:$2 sm:$0xff]
      %s2259 = scalar_lea.vmem [#allocation2], 704
      %v2260 = vld [vmem:[%s2259] ss:$2 sm:$0xff]
      %s2261 = scalar_lea.vmem [#allocation2], 720
      %v2262 = vld [vmem:[%s2261] ss:$2 sm:$0xf]
      %s2263 = scalar_lea.vmem [#allocation2], 673
      %v2264 = vld [vmem:[%s2263] ss:$2 sm:$0xff]
      %s2265 = scalar_lea.vmem [#allocation2], 689
      %v2266 = vld [vmem:[%s2265] ss:$2 sm:$0xff]
      %s2267 = scalar_lea.vmem [#allocation2], 705
      %v2268 = vld [vmem:[%s2267] ss:$2 sm:$0xff]
      %s2269 = scalar_lea.vmem [#allocation2], 721
      %v2270 = vld [vmem:[%s2269] ss:$2 sm:$0xf]
      %v2271 = vmax.f32 %v2256, %v2264
      %v2272 = vmax.f32 %v2258, %v2266
      %v2273 = vmax.f32 %v2260, %v2268
      %v2274 = vmax.f32 %v2262, %v2270
      %v2278 = vrot.slane %v2272, 6
      %v2279 = vrot.slane %v2273, 6
      %v2280 = vsel %vm1649, %v2278, %v2279
      %v2281 = vrot.slane %v2274, 6
      %v2282 = vsel %vm1649, %v2279, %v2281
      %v2285 = vmax.f32 %v2271, %v2280
      %v2286 = vmax.f32 %v2272, %v2282
      %v2287 = vadd.f32 %v2285, %v1663
      %v2288 = vadd.f32 %v2286, %v1663
      %v2289 = vmax.f32 %v2287, 0.0
      %v2290 = vmax.f32 %v2288, 0.0
      %v2291 = vpack.c.bf16 %v2290, %v2289
      %v2293 = vunpack.c.l.b16 %v2291
      %v2294 = vunpack.c.h.b16 %v2291
      %v2295 = vpack.c.b16 %v2293, %v2293
      %v2296 = vpack.c.b16 %v2294, %v2294
      %2299 = vst.msk [vmem:[#allocation3 + $0x54] sm:$0xf] %vm1677, %v2295
      %2300 = vst.msk [vmem:[#allocation3 + $0x58] sm:$0x7] %vm1679, %v2296
      %s2301 = scalar_lea.vmem [#allocation2], 728
      %v2302 = vld [vmem:[%s2301] ss:$2 sm:$0xff]
      %s2303 = scalar_lea.vmem [#allocation2], 744
      %v2304 = vld [vmem:[%s2303] ss:$2 sm:$0xff]
      %s2305 = scalar_lea.vmem [#allocation2], 760
      %v2306 = vld [vmem:[%s2305] ss:$2 sm:$0xff]
      %s2307 = scalar_lea.vmem [#allocation2], 776
      %v2308 = vld [vmem:[%s2307] ss:$2 sm:$0xf]
      %s2309 = scalar_lea.vmem [#allocation2], 729
      %v2310 = vld [vmem:[%s2309] ss:$2 sm:$0xff]
      %s2311 = scalar_lea.vmem [#allocation2], 745
      %v2312 = vld [vmem:[%s2311] ss:$2 sm:$0xff]
      %s2313 = scalar_lea.vmem [#allocation2], 761
      %v2314 = vld [vmem:[%s2313] ss:$2 sm:$0xff]
      %s2315 = scalar_lea.vmem [#allocation2], 777
      %v2316 = vld [vmem:[%s2315] ss:$2 sm:$0xf]
      %v2317 = vmax.f32 %v2302, %v2310
      %v2318 = vmax.f32 %v2304, %v2312
      %v2319 = vmax.f32 %v2306, %v2314
      %v2320 = vmax.f32 %v2308, %v2316
      %v2324 = vrot.slane %v2318, 6
      %v2325 = vrot.slane %v2319, 6
      %v2326 = vsel %vm1649, %v2324, %v2325
      %v2327 = vrot.slane %v2320, 6
      %v2328 = vsel %vm1649, %v2325, %v2327
      %v2331 = vmax.f32 %v2317, %v2326
      %v2332 = vmax.f32 %v2318, %v2328
      %v2333 = vadd.f32 %v2331, %v1663
      %v2334 = vadd.f32 %v2332, %v1663
      %v2335 = vmax.f32 %v2333, 0.0
      %v2336 = vmax.f32 %v2334, 0.0
      %v2337 = vpack.c.bf16 %v2336, %v2335
      %v2339 = vunpack.c.l.b16 %v2337
      %v2340 = vunpack.c.h.b16 %v2337
      %v2341 = vpack.c.b16 %v2339, %v2339
      %v2342 = vpack.c.b16 %v2340, %v2340
      %v2343 = vrot.slane %v2341, 5
      %v2344 = vrot.slane %v2343, 4
      %v2345 = vrot.slane %v2342, 5
      %v2346 = vsel %vm1725, %v2344, %v2345
      %v2347 = vrot.slane %v2345, 4
      %2351 = vst.msk [vmem:[#allocation3 + $0x58] sm:$0x8] %vm1734, %v2343
      %2352 = vst.msk [vmem:[#allocation3 + $0x5c] sm:$0xf] %vm1677, %v2346
      %2353 = vst.msk [vmem:[#allocation3 + $0x60] sm:$0x3] %vm1737, %v2347
      %v2354 = vld [vmem:[#allocation3] sm:$0xf]
      %v2355 = vld [vmem:[#allocation3 + $0x4] sm:$0xf]
      %v2356 = vld [vmem:[#allocation3 + $0x8] sm:$0xf]
      %v2357 = vld [vmem:[#allocation3 + $0xc] sm:$0xf]
      %v2358 = vld [vmem:[#allocation3 + $0x10] sm:$0xf]
      %v2359 = vld [vmem:[#allocation3 + $0x14] sm:$0xf]
      %v2360 = vld [vmem:[#allocation3 + $0x18] sm:$0xf]
      %v2361 = vld [vmem:[#allocation3 + $0x1c] sm:$0xf]
      %v2362 = vld [vmem:[#allocation3 + $0x20] sm:$0xf]
      %v2363 = vld [vmem:[#allocation3 + $0x24] sm:$0xf]
      %v2364 = vld [vmem:[#allocation3 + $0x28] sm:$0xf]
      %v2365 = vld [vmem:[#allocation3 + $0x2c] sm:$0xf]
      %v2366 = vld [vmem:[#allocation3 + $0x30] sm:$0xf]
      %v2367 = vld [vmem:[#allocation3 + $0x34] sm:$0xf]
      %v2368 = vld [vmem:[#allocation3 + $0x38] sm:$0xf]
      %v2369 = vld [vmem:[#allocation3 + $0x3c] sm:$0xf]
      %v2370 = vld [vmem:[#allocation3 + $0x40] sm:$0xf]
      %v2371 = vld [vmem:[#allocation3 + $0x44] sm:$0x3]
      %v2372 = vld [vmem:[%s3] sm:$0xf]
      %v2373 = vld [vmem:[%s3 + $0x4] sm:$0xf]
      %v2374 = vld [vmem:[%s3 + $0x8] sm:$0xf]
      %v2375 = vld [vmem:[%s3 + $0xc] sm:$0xf]
      %v2376 = vld [vmem:[%s3 + $0x10] sm:$0xf]
      %v2395 = vunpack.c.l.b16 %v2354
      %v2396 = vunpack.c.l.b16 %v2355
      %v2397 = vunpack.c.l.b16 %v2356
      %v2398 = vunpack.c.l.b16 %v2357
      %v2399 = vunpack.c.l.b16 %v2358
      %v2400 = vunpack.c.l.b16 %v2359
      %v2401 = vunpack.c.l.b16 %v2360
      %v2402 = vunpack.c.l.b16 %v2361
      %v2403 = vunpack.c.l.b16 %v2362
      %v2404 = vunpack.c.l.b16 %v2363
      %v2405 = vunpack.c.l.b16 %v2364
      %v2406 = vunpack.c.l.b16 %v2365
      %v2407 = vunpack.c.l.b16 %v2366
      %v2408 = vunpack.c.l.b16 %v2367
      %v2409 = vunpack.c.l.b16 %v2368
      %v2410 = vunpack.c.l.b16 %v2369
      %v2411 = vunpack.c.l.b16 %v2370
      %v2412 = vunpack.c.l.b16 %v2371
      %v2413 = vpack.c.b16 %v2396, %v2395
      %v2414 = vpack.c.b16 %v2398, %v2397
      %v2415 = vpack.c.b16 %v2400, %v2399
      %v2416 = vpack.c.b16 %v2402, %v2401
      %v2417 = vpack.c.b16 %v2404, %v2403
      %v2418 = vpack.c.b16 %v2406, %v2405
      %v2419 = vpack.c.b16 %v2408, %v2407
      %v2420 = vpack.c.b16 %v2410, %v2409
      %v2421 = vpack.c.b16 %v2412, %v2411
      %v2427 = vunpack.c.l.b16 %v2372
      %v2428 = vunpack.c.l.b16 %v2373
      %v2429 = vunpack.c.l.b16 %v2374
      %v2430 = vunpack.c.l.b16 %v2375
      %v2431 = vunpack.c.l.b16 %v2376
      %v2432 = vpack.c.b16 %v2428, %v2427
      %v2433 = vpack.c.b16 %v2430, %v2429
      %v2434 = vpack.c.b16 %v2431, %v2431
      %v2438 = vsel %vm1527, %v2413, 0
      %v2441 = vsel %vm1527, %v2414, 0
      %v2444 = vsel %vm1527, %v2415, 0
      %v2447 = vsel %vm1527, %v2416, 0
      %v2450 = vsel %vm1527, %v2417, 0
      %v2453 = vsel %vm1527, %v2418, 0
      %v2456 = vsel %vm1527, %v2419, 0
      %v2459 = vsel %vm1527, %v2420, 0
      %v2462 = vsel %vm1527, %v2421, 0
      %vm2464 = vcmask 1043456
      %v2466 = vsel %vm2464, %v2434, 0
      %2468 = vmatprep.subr.bf16.mxu0 0
      %2469 = vmatpush1.bf16.msra.mxu0 0
      %2470 = vmatprep.subr.bf16.mxu0 0
      %2471 = vmatpush1.bf16.msra.mxu0 0
      %2472 = vmatprep.subr.bf16.mxu0 0
      %2473 = vmatpush1.bf16.msra.mxu0 0
      %2474 = vmatprep.subr.bf16.mxu0 0
      %2475 = vmatpush1.bf16.msra.mxu0 0
      %2476 = vmatprep.subr.bf16.mxu0 0
      %2477 = vmatpush1.bf16.msra.mxu0 0
      %2478 = vmatprep.subr.bf16.mxu0 0
      %2479 = vmatpush1.bf16.msra.mxu0 %v2466
      %2480 = vmatprep.subr.bf16.mxu0 0
      %2481 = vmatpush1.bf16.msra.mxu0 %v2433
      %2482 = vmatprep.subr.bf16.mxu0 0
      %2483 = vmatpush1.bf16.msra.mxu0 %v2432
      %2484 = vmatprep.subr.bf16.mxu0 0
      %2485 = vmatpush2.bf16.msra.mxu0 0
      %2486 = vmatprep.subr.bf16.mxu0 0
      %2487 = vmatpush2.bf16.msra.mxu0 0
      %2488 = vmatprep.subr.bf16.mxu0 0
      %2489 = vmatpush2.bf16.msra.mxu0 0
      %2490 = vmatprep.subr.bf16.mxu0 0
      %2491 = vmatpush2.bf16.msra.mxu0 0
      %2492 = vmatprep.subr.bf16.mxu0 0
      %2493 = vmatpush2.bf16.msra.mxu0 0
      %2494 = vmatprep.subr.bf16.mxu0 0
      %2495 = vmatpush2.bf16.msra.mxu0 0
      %2496 = vmatprep.subr.bf16.mxu0 0
      %2497 = vmatpush2.bf16.msra.mxu0 0
      %2498 = vmatprep.subr.bf16.mxu0 0
      %2499 = vmatpush2.bf16.msra.mxu0 0
      %2500 = vmatprep.mubr.bf16.mxu0 0
      %2501 = vmatmul.mubr.bf16.gmra.mxu0 %v2438
      %v2502 = vpop.f32.mrf.mxu0
      %v2503 = vadd.f32 0.0, %v2502
      %v2504 = vpop.f32.mrf.mxu0
      %v2505 = vpop.f32.mrf.mxu0
      %v2506 = vadd.f32 0.0, %v2505
      %v2507 = vpop.f32.mrf.mxu0
      %2508 = vmatprep.mubr.bf16.mxu0 0
      %2509 = vmatmul.mubr.bf16.gmra.mxu0 %v2441
      %v2510 = vpop.f32.mrf.mxu0
      %v2511 = vadd.f32 0.0, %v2510
      %v2512 = vpop.f32.mrf.mxu0
      %v2513 = vpop.f32.mrf.mxu0
      %v2514 = vadd.f32 0.0, %v2513
      %v2515 = vpop.f32.mrf.mxu0
      %2516 = vmatprep.mubr.bf16.mxu0 0
      %2517 = vmatmul.mubr.bf16.gmra.mxu0 %v2444
      %v2518 = vpop.f32.mrf.mxu0
      %v2519 = vadd.f32 0.0, %v2518
      %v2520 = vpop.f32.mrf.mxu0
      %v2521 = vpop.f32.mrf.mxu0
      %v2522 = vadd.f32 0.0, %v2521
      %v2523 = vpop.f32.mrf.mxu0
      %2524 = vmatprep.mubr.bf16.mxu0 0
      %2525 = vmatmul.mubr.bf16.gmra.mxu0 %v2447
      %v2526 = vpop.f32.mrf.mxu0
      %v2527 = vadd.f32 0.0, %v2526
      %v2528 = vpop.f32.mrf.mxu0
      %v2529 = vpop.f32.mrf.mxu0
      %v2530 = vadd.f32 0.0, %v2529
      %v2531 = vpop.f32.mrf.mxu0
      %2532 = vmatprep.mubr.bf16.mxu0 0
      %2533 = vmatmul.mubr.bf16.gmra.mxu0 %v2450
      %v2534 = vpop.f32.mrf.mxu0
      %v2535 = vadd.f32 0.0, %v2534
      %v2536 = vpop.f32.mrf.mxu0
      %v2537 = vpop.f32.mrf.mxu0
      %v2538 = vadd.f32 0.0, %v2537
      %v2539 = vpop.f32.mrf.mxu0
      %2540 = vmatprep.mubr.bf16.mxu0 0
      %2541 = vmatmul.mubr.bf16.gmra.mxu0 %v2453
      %v2542 = vpop.f32.mrf.mxu0
      %v2543 = vadd.f32 0.0, %v2542
      %v2544 = vpop.f32.mrf.mxu0
      %v2545 = vpop.f32.mrf.mxu0
      %v2546 = vadd.f32 0.0, %v2545
      %v2547 = vpop.f32.mrf.mxu0
      %2548 = vmatprep.mubr.bf16.mxu0 0
      %2549 = vmatmul.mubr.bf16.gmra.mxu0 %v2456
      %v2550 = vpop.f32.mrf.mxu0
      %v2551 = vadd.f32 0.0, %v2550
      %v2552 = vpop.f32.mrf.mxu0
      %v2553 = vpop.f32.mrf.mxu0
      %v2554 = vadd.f32 0.0, %v2553
      %v2555 = vpop.f32.mrf.mxu0
      %2556 = vmatprep.mubr.bf16.mxu0 0
      %2557 = vmatmul.mubr.bf16.gmra.mxu0 %v2459
      %v2558 = vpop.f32.mrf.mxu0
      %v2559 = vadd.f32 0.0, %v2558
      %v2560 = vpop.f32.mrf.mxu0
      %v2561 = vpop.f32.mrf.mxu0
      %v2562 = vadd.f32 0.0, %v2561
      %v2563 = vpop.f32.mrf.mxu0
      %2564 = vmatprep.mubr.bf16.mxu0 0
      %2565 = vmatmul.mubr.bf16.gmra.mxu0 %v2462
      %v2566 = vpop.f32.mrf.mxu0
      %v2567 = vadd.f32 0.0, %v2566
      %v2568 = vpop.f32.mrf.mxu0
      %v2569 = vpop.f32.mrf.mxu0
      %v2570 = vadd.f32 0.0, %v2569
      %v2571 = vpop.f32.mrf.mxu0
      %2572 = vdwg.mxu0
      %vm2573 = vcmask 130048
      %2574 = vst.msk [vmem:[#allocation4] sm:$0xff] %vm2573, %v2503
      %2575 = vst.msk [vmem:[#allocation4 + $0x8] sm:$0xff] %vm2573, %v2506
      %2576 = vst.msk [vmem:[#allocation4 + $0x10] sm:$0xff] %vm2573, %v2511
      %2577 = vst.msk [vmem:[#allocation4 + $0x18] sm:$0xff] %vm2573, %v2514
      %2578 = vst.msk [vmem:[#allocation4 + $0x20] sm:$0xff] %vm2573, %v2519
      %2579 = vst.msk [vmem:[#allocation4 + $0x28] sm:$0xff] %vm2573, %v2522
      %2580 = vst.msk [vmem:[#allocation4 + $0x30] sm:$0xff] %vm2573, %v2527
      %2581 = vst.msk [vmem:[#allocation4 + $0x38] sm:$0xff] %vm2573, %v2530
      %2582 = vst.msk [vmem:[#allocation4 + $0x40] sm:$0xff] %vm2573, %v2535
      %2583 = vst.msk [vmem:[#allocation4 + $0x48] sm:$0xff] %vm2573, %v2538
      %2584 = vst.msk [vmem:[#allocation4 + $0x50] sm:$0xff] %vm2573, %v2543
      %2585 = vst.msk [vmem:[#allocation4 + $0x58] sm:$0xff] %vm2573, %v2546
      %2586 = vst.msk [vmem:[#allocation4 + $0x60] sm:$0xff] %vm2573, %v2551
      %2587 = vst.msk [vmem:[#allocation4 + $0x68] sm:$0xff] %vm2573, %v2554
      %2588 = vst.msk [vmem:[#allocation4 + $0x70] sm:$0xff] %vm2573, %v2559
      %2589 = vst.msk [vmem:[#allocation4 + $0x78] sm:$0xff] %vm2573, %v2562
      %2590 = vst.msk [vmem:[#allocation4 + $0x80] sm:$0xff] %vm2573, %v2567
      %vm2591 = vcmask 125952
      %2592 = vst.msk [vmem:[#allocation4 + $0x88] sm:$0xf] %vm2591, %v2570
      %v2593 = vld [vmem:[#allocation3 + $0x4] sm:$0x8]
      %v2594 = vld [vmem:[#allocation3 + $0x8] sm:$0xf]
      %v2595 = vld [vmem:[#allocation3 + $0xc] sm:$0xf]
      %v2596 = vld [vmem:[#allocation3 + $0x10] sm:$0xf]
      %v2597 = vld [vmem:[#allocation3 + $0x14] sm:$0xf]
      %v2598 = vld [vmem:[#allocation3 + $0x18] sm:$0xf]
      %v2599 = vld [vmem:[#allocation3 + $0x1c] sm:$0xf]
      %v2600 = vld [vmem:[#allocation3 + $0x20] sm:$0xf]
      %v2601 = vld [vmem:[#allocation3 + $0x24] sm:$0xf]
      %v2602 = vld [vmem:[#allocation3 + $0x28] sm:$0xf]
      %v2603 = vld [vmem:[#allocation3 + $0x2c] sm:$0xf]
      %v2604 = vld [vmem:[#allocation3 + $0x30] sm:$0xf]
      %v2605 = vld [vmem:[#allocation3 + $0x34] sm:$0xf]
      %v2606 = vld [vmem:[#allocation3 + $0x38] sm:$0xf]
      %v2607 = vld [vmem:[#allocation3 + $0x3c] sm:$0xf]
      %v2608 = vld [vmem:[#allocation3 + $0x40] sm:$0xf]
      %v2609 = vld [vmem:[#allocation3 + $0x44] sm:$0xf]
      %v2610 = vld [vmem:[#allocation3 + $0x48] sm:$0xf]
      %v2611 = vld [vmem:[#allocation3 + $0x4c] sm:$0x1]
      %s2612 = scalar_lea.vmem %s3, 20
      %v2613 = vld [vmem:[%s2612] sm:$0xf]
      %v2614 = vld [vmem:[%s2612 + $0x4] sm:$0xf]
      %v2615 = vld [vmem:[%s2612 + $0x8] sm:$0xf]
      %v2616 = vld [vmem:[%s2612 + $0xc] sm:$0xf]
      %v2617 = vld [vmem:[%s2612 + $0x10] sm:$0xf]
      %v2637 = vunpack.c.l.b16 %v2593
      %v2638 = vunpack.c.l.b16 %v2594
      %v2639 = vunpack.c.l.b16 %v2595
      %v2640 = vunpack.c.l.b16 %v2596
      %v2641 = vunpack.c.l.b16 %v2597
      %v2642 = vunpack.c.l.b16 %v2598
      %v2643 = vunpack.c.l.b16 %v2599
      %v2644 = vunpack.c.l.b16 %v2600
      %v2645 = vunpack.c.l.b16 %v2601
      %v2646 = vunpack.c.l.b16 %v2602
      %v2647 = vunpack.c.l.b16 %v2603
      %v2648 = vunpack.c.l.b16 %v2604
      %v2649 = vunpack.c.l.b16 %v2605
      %v2650 = vunpack.c.l.b16 %v2606
      %v2651 = vunpack.c.l.b16 %v2607
      %v2652 = vunpack.c.l.b16 %v2608
      %v2653 = vunpack.c.l.b16 %v2609
      %v2654 = vunpack.c.l.b16 %v2610
      %v2655 = vunpack.c.l.b16 %v2611
      %v2656 = vpack.c.b16 %v2638, %v2637
      %v2657 = vpack.c.b16 %v2640, %v2639
      %v2658 = vpack.c.b16 %v2642, %v2641
      %v2659 = vpack.c.b16 %v2644, %v2643
      %v2660 = vpack.c.b16 %v2646, %v2645
      %v2661 = vpack.c.b16 %v2648, %v2647
      %v2662 = vpack.c.b16 %v2650, %v2649
      %v2663 = vpack.c.b16 %v2652, %v2651
      %v2664 = vpack.c.b16 %v2654, %v2653
      %v2665 = vpack.c.b16 %v2655, %v2655
      %vm2666 = vcmask 1044480
      %v2667 = vrot.slane %v2656, 3
      %v2668 = vrot.slane %v2657, 3
      %v2669 = vsel %vm2666, %v2667, %v2668
      %v2670 = vrot.slane %v2658, 3
      %v2671 = vsel %vm2666, %v2668, %v2670
      %v2672 = vrot.slane %v2659, 3
      %v2673 = vsel %vm2666, %v2670, %v2672
      %v2674 = vrot.slane %v2660, 3
      %v2675 = vsel %vm2666, %v2672, %v2674
      %v2676 = vrot.slane %v2661, 3
      %v2677 = vsel %vm2666, %v2674, %v2676
      %v2678 = vrot.slane %v2662, 3
      %v2679 = vsel %vm2666, %v2676, %v2678
      %v2680 = vrot.slane %v2663, 3
      %v2681 = vsel %vm2666, %v2678, %v2680
      %v2682 = vrot.slane %v2664, 3
      %v2683 = vsel %vm2666, %v2680, %v2682
      %v2684 = vrot.slane %v2665, 3
      %v2685 = vsel %vm2666, %v2682, %v2684
      %v2691 = vunpack.c.l.b16 %v2613
      %v2692 = vunpack.c.l.b16 %v2614
      %v2693 = vunpack.c.l.b16 %v2615
      %v2694 = vunpack.c.l.b16 %v2616
      %v2695 = vunpack.c.l.b16 %v2617
      %v2696 = vpack.c.b16 %v2692, %v2691
      %v2697 = vpack.c.b16 %v2694, %v2693
      %v2698 = vpack.c.b16 %v2695, %v2695
      %v2702 = vsel %vm1527, %v2669, 0
      %v2705 = vsel %vm1527, %v2671, 0
      %v2708 = vsel %vm1527, %v2673, 0
      %v2711 = vsel %vm1527, %v2675, 0
      %v2714 = vsel %vm1527, %v2677, 0
      %v2717 = vsel %vm1527, %v2679, 0
      %v2720 = vsel %vm1527, %v2681, 0
      %v2723 = vsel %vm1527, %v2683, 0
      %v2726 = vsel %vm1527, %v2685, 0
      %v2729 = vsel %vm2464, %v2698, 0
      %2731 = vmatprep.subr.bf16.mxu0 0
      %2732 = vmatpush1.bf16.msra.mxu0 0
      %2733 = vmatprep.subr.bf16.mxu0 0
      %2734 = vmatpush1.bf16.msra.mxu0 0
      %2735 = vmatprep.subr.bf16.mxu0 0
      %2736 = vmatpush1.bf16.msra.mxu0 0
      %2737 = vmatprep.subr.bf16.mxu0 0
      %2738 = vmatpush1.bf16.msra.mxu0 0
      %2739 = vmatprep.subr.bf16.mxu0 0
      %2740 = vmatpush1.bf16.msra.mxu0 0
      %2741 = vmatprep.subr.bf16.mxu0 0
      %2742 = vmatpush1.bf16.msra.mxu0 %v2729
      %2743 = vmatprep.subr.bf16.mxu0 0
      %2744 = vmatpush1.bf16.msra.mxu0 %v2697
      %2745 = vmatprep.subr.bf16.mxu0 0
      %2746 = vmatpush1.bf16.msra.mxu0 %v2696
      %2747 = vmatprep.subr.bf16.mxu0 0
      %2748 = vmatpush2.bf16.msra.mxu0 0
      %2749 = vmatprep.subr.bf16.mxu0 0
      %2750 = vmatpush2.bf16.msra.mxu0 0
      %2751 = vmatprep.subr.bf16.mxu0 0
      %2752 = vmatpush2.bf16.msra.mxu0 0
      %2753 = vmatprep.subr.bf16.mxu0 0
      %2754 = vmatpush2.bf16.msra.mxu0 0
      %2755 = vmatprep.subr.bf16.mxu0 0
      %2756 = vmatpush2.bf16.msra.mxu0 0
      %2757 = vmatprep.subr.bf16.mxu0 0
      %2758 = vmatpush2.bf16.msra.mxu0 0
      %2759 = vmatprep.subr.bf16.mxu0 0
      %2760 = vmatpush2.bf16.msra.mxu0 0
      %2761 = vmatprep.subr.bf16.mxu0 0
      %2762 = vmatpush2.bf16.msra.mxu0 0
      %2763 = vmatprep.mubr.bf16.mxu0 0
      %2764 = vmatmul.mubr.bf16.gmra.mxu0 %v2702
      %v2765 = vpop.f32.mrf.mxu0
      %v2766 = vadd.f32 0.0, %v2765
      %v2767 = vpop.f32.mrf.mxu0
      %v2768 = vpop.f32.mrf.mxu0
      %v2769 = vadd.f32 0.0, %v2768
      %v2770 = vpop.f32.mrf.mxu0
      %2771 = vmatprep.mubr.bf16.mxu0 0
      %2772 = vmatmul.mubr.bf16.gmra.mxu0 %v2705
      %v2773 = vpop.f32.mrf.mxu0
      %v2774 = vadd.f32 0.0, %v2773
      %v2775 = vpop.f32.mrf.mxu0
      %v2776 = vpop.f32.mrf.mxu0
      %v2777 = vadd.f32 0.0, %v2776
      %v2778 = vpop.f32.mrf.mxu0
      %2779 = vmatprep.mubr.bf16.mxu0 0
      %2780 = vmatmul.mubr.bf16.gmra.mxu0 %v2708
      %v2781 = vpop.f32.mrf.mxu0
      %v2782 = vadd.f32 0.0, %v2781
      %v2783 = vpop.f32.mrf.mxu0
      %v2784 = vpop.f32.mrf.mxu0
      %v2785 = vadd.f32 0.0, %v2784
      %v2786 = vpop.f32.mrf.mxu0
      %2787 = vmatprep.mubr.bf16.mxu0 0
      %2788 = vmatmul.mubr.bf16.gmra.mxu0 %v2711
      %v2789 = vpop.f32.mrf.mxu0
      %v2790 = vadd.f32 0.0, %v2789
      %v2791 = vpop.f32.mrf.mxu0
      %v2792 = vpop.f32.mrf.mxu0
      %v2793 = vadd.f32 0.0, %v2792
      %v2794 = vpop.f32.mrf.mxu0
      %2795 = vmatprep.mubr.bf16.mxu0 0
      %2796 = vmatmul.mubr.bf16.gmra.mxu0 %v2714
      %v2797 = vpop.f32.mrf.mxu0
      %v2798 = vadd.f32 0.0, %v2797
      %v2799 = vpop.f32.mrf.mxu0
      %v2800 = vpop.f32.mrf.mxu0
      %v2801 = vadd.f32 0.0, %v2800
      %v2802 = vpop.f32.mrf.mxu0
      %2803 = vmatprep.mubr.bf16.mxu0 0
      %2804 = vmatmul.mubr.bf16.gmra.mxu0 %v2717
      %v2805 = vpop.f32.mrf.mxu0
      %v2806 = vadd.f32 0.0, %v2805
      %v2807 = vpop.f32.mrf.mxu0
      %v2808 = vpop.f32.mrf.mxu0
      %v2809 = vadd.f32 0.0, %v2808
      %v2810 = vpop.f32.mrf.mxu0
      %2811 = vmatprep.mubr.bf16.mxu0 0
      %2812 = vmatmul.mubr.bf16.gmra.mxu0 %v2720
      %v2813 = vpop.f32.mrf.mxu0
      %v2814 = vadd.f32 0.0, %v2813
      %v2815 = vpop.f32.mrf.mxu0
      %v2816 = vpop.f32.mrf.mxu0
      %v2817 = vadd.f32 0.0, %v2816
      %v2818 = vpop.f32.mrf.mxu0
      %2819 = vmatprep.mubr.bf16.mxu0 0
      %2820 = vmatmul.mubr.bf16.gmra.mxu0 %v2723
      %v2821 = vpop.f32.mrf.mxu0
      %v2822 = vadd.f32 0.0, %v2821
      %v2823 = vpop.f32.mrf.mxu0
      %v2824 = vpop.f32.mrf.mxu0
      %v2825 = vadd.f32 0.0, %v2824
      %v2826 = vpop.f32.mrf.mxu0
      %2827 = vmatprep.mubr.bf16.mxu0 0
      %2828 = vmatmul.mubr.bf16.gmra.mxu0 %v2726
      %v2829 = vpop.f32.mrf.mxu0
      %v2830 = vadd.f32 0.0, %v2829
      %v2831 = vpop.f32.mrf.mxu0
      %v2832 = vpop.f32.mrf.mxu0
      %v2833 = vadd.f32 0.0, %v2832
      %v2834 = vpop.f32.mrf.mxu0
      %2835 = vdwg.mxu0
      %v2836 = vld [vmem:[#allocation4] sm:$0xff]
      %v2837 = vld [vmem:[#allocation4 + $0x8] sm:$0xff]
      %v2838 = vld [vmem:[#allocation4 + $0x10] sm:$0xff]
      %v2839 = vld [vmem:[#allocation4 + $0x18] sm:$0xff]
      %v2840 = vld [vmem:[#allocation4 + $0x20] sm:$0xff]
      %v2841 = vld [vmem:[#allocation4 + $0x28] sm:$0xff]
      %v2842 = vld [vmem:[#allocation4 + $0x30] sm:$0xff]
      %v2843 = vld [vmem:[#allocation4 + $0x38] sm:$0xff]
      %v2844 = vld [vmem:[#allocation4 + $0x40] sm:$0xff]
      %v2845 = vld [vmem:[#allocation4 + $0x48] sm:$0xff]
      %v2846 = vld [vmem:[#allocation4 + $0x50] sm:$0xff]
      %v2847 = vld [vmem:[#allocation4 + $0x58] sm:$0xff]
      %v2848 = vld [vmem:[#allocation4 + $0x60] sm:$0xff]
      %v2849 = vld [vmem:[#allocation4 + $0x68] sm:$0xff]
      %v2850 = vld [vmem:[#allocation4 + $0x70] sm:$0xff]
      %v2851 = vld [vmem:[#allocation4 + $0x78] sm:$0xff]
      %v2852 = vld [vmem:[#allocation4 + $0x80] sm:$0xff]
      %v2853 = vld [vmem:[#allocation4 + $0x88] sm:$0xf]
      %v2854 = vadd.f32 %v2836, %v2766
      %v2855 = vadd.f32 %v2837, %v2769
      %v2856 = vadd.f32 %v2838, %v2774
      %v2857 = vadd.f32 %v2839, %v2777
      %v2858 = vadd.f32 %v2840, %v2782
      %v2859 = vadd.f32 %v2841, %v2785
      %v2860 = vadd.f32 %v2842, %v2790
      %v2861 = vadd.f32 %v2843, %v2793
      %v2862 = vadd.f32 %v2844, %v2798
      %v2863 = vadd.f32 %v2845, %v2801
      %v2864 = vadd.f32 %v2846, %v2806
      %v2865 = vadd.f32 %v2847, %v2809
      %v2866 = vadd.f32 %v2848, %v2814
      %v2867 = vadd.f32 %v2849, %v2817
      %v2868 = vadd.f32 %v2850, %v2822
      %v2869 = vadd.f32 %v2851, %v2825
      %v2870 = vadd.f32 %v2852, %v2830
      %v2871 = vadd.f32 %v2853, %v2833
      %2872 = vst.msk [vmem:[#allocation4] sm:$0xff] %vm2573, %v2854
      %2873 = vst.msk [vmem:[#allocation4 + $0x8] sm:$0xff] %vm2573, %v2855
      %2874 = vst.msk [vmem:[#allocation4 + $0x10] sm:$0xff] %vm2573, %v2856
      %2875 = vst.msk [vmem:[#allocation4 + $0x18] sm:$0xff] %vm2573, %v2857
      %2876 = vst.msk [vmem:[#allocation4 + $0x20] sm:$0xff] %vm2573, %v2858
      %2877 = vst.msk [vmem:[#allocation4 + $0x28] sm:$0xff] %vm2573, %v2859
      %2878 = vst.msk [vmem:[#allocation4 + $0x30] sm:$0xff] %vm2573, %v2860
      %2879 = vst.msk [vmem:[#allocation4 + $0x38] sm:$0xff] %vm2573, %v2861
      %2880 = vst.msk [vmem:[#allocation4 + $0x40] sm:$0xff] %vm2573, %v2862
      %2881 = vst.msk [vmem:[#allocation4 + $0x48] sm:$0xff] %vm2573, %v2863
      %2882 = vst.msk [vmem:[#allocation4 + $0x50] sm:$0xff] %vm2573, %v2864
      %2883 = vst.msk [vmem:[#allocation4 + $0x58] sm:$0xff] %vm2573, %v2865
      %2884 = vst.msk [vmem:[#allocation4 + $0x60] sm:$0xff] %vm2573, %v2866
      %2885 = vst.msk [vmem:[#allocation4 + $0x68] sm:$0xff] %vm2573, %v2867
      %2886 = vst.msk [vmem:[#allocation4 + $0x70] sm:$0xff] %vm2573, %v2868
      %2887 = vst.msk [vmem:[#allocation4 + $0x78] sm:$0xff] %vm2573, %v2869
      %2888 = vst.msk [vmem:[#allocation4 + $0x80] sm:$0xff] %vm2573, %v2870
      %2889 = vst.msk [vmem:[#allocation4 + $0x88] sm:$0xf] %vm2591, %v2871
      %v2890 = vld [vmem:[#allocation3 + $0xc] sm:$0xc]
      %v2891 = vld [vmem:[#allocation3 + $0x10] sm:$0xf]
      %v2892 = vld [vmem:[#allocation3 + $0x14] sm:$0xf]
      %v2893 = vld [vmem:[#allocation3 + $0x18] sm:$0xf]
      %v2894 = vld [vmem:[#allocation3 + $0x1c] sm:$0xf]
      %v2895 = vld [vmem:[#allocation3 + $0x20] sm:$0xf]
      %v2896 = vld [vmem:[#allocation3 + $0x24] sm:$0xf]
      %v2897 = vld [vmem:[#allocation3 + $0x28] sm:$0xf]
      %v2898 = vld [vmem:[#allocation3 + $0x2c] sm:$0xf]
      %v2899 = vld [vmem:[#allocation3 + $0x30] sm:$0xf]
      %v2900 = vld [vmem:[#allocation3 + $0x34] sm:$0xf]
      %v2901 = vld [vmem:[#allocation3 + $0x38] sm:$0xf]
      %v2902 = vld [vmem:[#allocation3 + $0x3c] sm:$0xf]
      %v2903 = vld [vmem:[#allocation3 + $0x40] sm:$0xf]
      %v2904 = vld [vmem:[#allocation3 + $0x44] sm:$0xf]
      %v2905 = vld [vmem:[#allocation3 + $0x48] sm:$0xf]
      %v2906 = vld [vmem:[#allocation3 + $0x4c] sm:$0xf]
      %v2907 = vld [vmem:[#allocation3 + $0x50] sm:$0xf]
      %s2908 = scalar_lea.vmem %s3, 40
      %v2909 = vld [vmem:[%s2908] sm:$0xf]
      %v2910 = vld [vmem:[%s2908 + $0x4] sm:$0xf]
      %v2911 = vld [vmem:[%s2908 + $0x8] sm:$0xf]
      %v2912 = vld [vmem:[%s2908 + $0xc] sm:$0xf]
      %v2913 = vld [vmem:[%s2908 + $0x10] sm:$0xf]
      %v2932 = vunpack.c.l.b16 %v2890
      %v2933 = vunpack.c.l.b16 %v2891
      %v2934 = vunpack.c.l.b16 %v2892
      %v2935 = vunpack.c.l.b16 %v2893
      %v2936 = vunpack.c.l.b16 %v2894
      %v2937 = vunpack.c.l.b16 %v2895
      %v2938 = vunpack.c.l.b16 %v2896
      %v2939 = vunpack.c.l.b16 %v2897
      %v2940 = vunpack.c.l.b16 %v2898
      %v2941 = vunpack.c.l.b16 %v2899
      %v2942 = vunpack.c.l.b16 %v2900
      %v2943 = vunpack.c.l.b16 %v2901
      %v2944 = vunpack.c.l.b16 %v2902
      %v2945 = vunpack.c.l.b16 %v2903
      %v2946 = vunpack.c.l.b16 %v2904
      %v2947 = vunpack.c.l.b16 %v2905
      %v2948 = vunpack.c.l.b16 %v2906
      %v2949 = vunpack.c.l.b16 %v2907
      %v2950 = vpack.c.b16 %v2933, %v2932
      %v2951 = vpack.c.b16 %v2935, %v2934
      %v2952 = vpack.c.b16 %v2937, %v2936
      %v2953 = vpack.c.b16 %v2939, %v2938
      %v2954 = vpack.c.b16 %v2941, %v2940
      %v2955 = vpack.c.b16 %v2943, %v2942
      %v2956 = vpack.c.b16 %v2945, %v2944
      %v2957 = vpack.c.b16 %v2947, %v2946
      %v2958 = vpack.c.b16 %v2949, %v2948
      %vm2959 = vcmask 1045504
      %v2960 = vrot.slane %v2950, 2
      %v2961 = vrot.slane %v2951, 2
      %v2962 = vsel %vm2959, %v2960, %v2961
      %v2963 = vrot.slane %v2952, 2
      %v2964 = vsel %vm2959, %v2961, %v2963
      %v2965 = vrot.slane %v2953, 2
      %v2966 = vsel %vm2959, %v2963, %v2965
      %v2967 = vrot.slane %v2954, 2
      %v2968 = vsel %vm2959, %v2965, %v2967
      %v2969 = vrot.slane %v2955, 2
      %v2970 = vsel %vm2959, %v2967, %v2969
      %v2971 = vrot.slane %v2956, 2
      %v2972 = vsel %vm2959, %v2969, %v2971
      %v2973 = vrot.slane %v2957, 2
      %v2974 = vsel %vm2959, %v2971, %v2973
      %v2975 = vrot.slane %v2958, 2
      %v2976 = vsel %vm2959, %v2973, %v2975
      %v2982 = vunpack.c.l.b16 %v2909
      %v2983 = vunpack.c.l.b16 %v2910
      %v2984 = vunpack.c.l.b16 %v2911
      %v2985 = vunpack.c.l.b16 %v2912
      %v2986 = vunpack.c.l.b16 %v2913
      %v2987 = vpack.c.b16 %v2983, %v2982
      %v2988 = vpack.c.b16 %v2985, %v2984
      %v2989 = vpack.c.b16 %v2986, %v2986
      %v2993 = vsel %vm1527, %v2962, 0
      %v2996 = vsel %vm1527, %v2964, 0
      %v2999 = vsel %vm1527, %v2966, 0
      %v3002 = vsel %vm1527, %v2968, 0
      %v3005 = vsel %vm1527, %v2970, 0
      %v3008 = vsel %vm1527, %v2972, 0
      %v3011 = vsel %vm1527, %v2974, 0
      %v3014 = vsel %vm1527, %v2976, 0
      %v3017 = vsel %vm1527, %v2975, 0
      %v3020 = vsel %vm2464, %v2989, 0
      %3022 = vmatprep.subr.bf16.mxu0 0
      %3023 = vmatpush1.bf16.msra.mxu0 0
      %3024 = vmatprep.subr.bf16.mxu0 0
      %3025 = vmatpush1.bf16.msra.mxu0 0
      %3026 = vmatprep.subr.bf16.mxu0 0
      %3027 = vmatpush1.bf16.msra.mxu0 0
      %3028 = vmatprep.subr.bf16.mxu0 0
      %3029 = vmatpush1.bf16.msra.mxu0 0
      %3030 = vmatprep.subr.bf16.mxu0 0
      %3031 = vmatpush1.bf16.msra.mxu0 0
      %3032 = vmatprep.subr.bf16.mxu0 0
      %3033 = vmatpush1.bf16.msra.mxu0 %v3020
      %3034 = vmatprep.subr.bf16.mxu0 0
      %3035 = vmatpush1.bf16.msra.mxu0 %v2988
      %3036 = vmatprep.subr.bf16.mxu0 0
      %3037 = vmatpush1.bf16.msra.mxu0 %v2987
      %3038 = vmatprep.subr.bf16.mxu0 0
      %3039 = vmatpush2.bf16.msra.mxu0 0
      %3040 = vmatprep.subr.bf16.mxu0 0
      %3041 = vmatpush2.bf16.msra.mxu0 0
      %3042 = vmatprep.subr.bf16.mxu0 0
      %3043 = vmatpush2.bf16.msra.mxu0 0
      %3044 = vmatprep.subr.bf16.mxu0 0
      %3045 = vmatpush2.bf16.msra.mxu0 0
      %3046 = vmatprep.subr.bf16.mxu0 0
      %3047 = vmatpush2.bf16.msra.mxu0 0
      %3048 = vmatprep.subr.bf16.mxu0 0
      %3049 = vmatpush2.bf16.msra.mxu0 0
      %3050 = vmatprep.subr.bf16.mxu0 0
      %3051 = vmatpush2.bf16.msra.mxu0 0
      %3052 = vmatprep.subr.bf16.mxu0 0
      %3053 = vmatpush2.bf16.msra.mxu0 0
      %3054 = vmatprep.mubr.bf16.mxu0 0
      %3055 = vmatmul.mubr.bf16.gmra.mxu0 %v2993
      %v3056 = vpop.f32.mrf.mxu0
      %v3057 = vadd.f32 0.0, %v3056
      %v3058 = vpop.f32.mrf.mxu0
      %v3059 = vpop.f32.mrf.mxu0
      %v3060 = vadd.f32 0.0, %v3059
      %v3061 = vpop.f32.mrf.mxu0
      %3062 = vmatprep.mubr.bf16.mxu0 0
      %3063 = vmatmul.mubr.bf16.gmra.mxu0 %v2996
      %v3064 = vpop.f32.mrf.mxu0
      %v3065 = vadd.f32 0.0, %v3064
      %v3066 = vpop.f32.mrf.mxu0
      %v3067 = vpop.f32.mrf.mxu0
      %v3068 = vadd.f32 0.0, %v3067
      %v3069 = vpop.f32.mrf.mxu0
      %3070 = vmatprep.mubr.bf16.mxu0 0
      %3071 = vmatmul.mubr.bf16.gmra.mxu0 %v2999
      %v3072 = vpop.f32.mrf.mxu0
      %v3073 = vadd.f32 0.0, %v3072
      %v3074 = vpop.f32.mrf.mxu0
      %v3075 = vpop.f32.mrf.mxu0
      %v3076 = vadd.f32 0.0, %v3075
      %v3077 = vpop.f32.mrf.mxu0
      %3078 = vmatprep.mubr.bf16.mxu0 0
      %3079 = vmatmul.mubr.bf16.gmra.mxu0 %v3002
      %v3080 = vpop.f32.mrf.mxu0
      %v3081 = vadd.f32 0.0, %v3080
      %v3082 = vpop.f32.mrf.mxu0
      %v3083 = vpop.f32.mrf.mxu0
      %v3084 = vadd.f32 0.0, %v3083
      %v3085 = vpop.f32.mrf.mxu0
      %3086 = vmatprep.mubr.bf16.mxu0 0
      %3087 = vmatmul.mubr.bf16.gmra.mxu0 %v3005
      %v3088 = vpop.f32.mrf.mxu0
      %v3089 = vadd.f32 0.0, %v3088
      %v3090 = vpop.f32.mrf.mxu0
      %v3091 = vpop.f32.mrf.mxu0
      %v3092 = vadd.f32 0.0, %v3091
      %v3093 = vpop.f32.mrf.mxu0
      %3094 = vmatprep.mubr.bf16.mxu0 0
      %3095 = vmatmul.mubr.bf16.gmra.mxu0 %v3008
      %v3096 = vpop.f32.mrf.mxu0
      %v3097 = vadd.f32 0.0, %v3096
      %v3098 = vpop.f32.mrf.mxu0
      %v3099 = vpop.f32.mrf.mxu0
      %v3100 = vadd.f32 0.0, %v3099
      %v3101 = vpop.f32.mrf.mxu0
      %3102 = vmatprep.mubr.bf16.mxu0 0
      %3103 = vmatmul.mubr.bf16.gmra.mxu0 %v3011
      %v3104 = vpop.f32.mrf.mxu0
      %v3105 = vadd.f32 0.0, %v3104
      %v3106 = vpop.f32.mrf.mxu0
      %v3107 = vpop.f32.mrf.mxu0
      %v3108 = vadd.f32 0.0, %v3107
      %v3109 = vpop.f32.mrf.mxu0
      %3110 = vmatprep.mubr.bf16.mxu0 0
      %3111 = vmatmul.mubr.bf16.gmra.mxu0 %v3014
      %v3112 = vpop.f32.mrf.mxu0
      %v3113 = vadd.f32 0.0, %v3112
      %v3114 = vpop.f32.mrf.mxu0
      %v3115 = vpop.f32.mrf.mxu0
      %v3116 = vadd.f32 0.0, %v3115
      %v3117 = vpop.f32.mrf.mxu0
      %3118 = vmatprep.mubr.bf16.mxu0 0
      %3119 = vmatmul.mubr.bf16.gmra.mxu0 %v3017
      %v3120 = vpop.f32.mrf.mxu0
      %v3121 = vadd.f32 0.0, %v3120
      %v3122 = vpop.f32.mrf.mxu0
      %v3123 = vpop.f32.mrf.mxu0
      %v3124 = vadd.f32 0.0, %v3123
      %v3125 = vpop.f32.mrf.mxu0
      %3126 = vdwg.mxu0
      %v3127 = vld [vmem:[#allocation4] sm:$0xff]
      %v3128 = vld [vmem:[#allocation4 + $0x8] sm:$0xff]
      %v3129 = vld [vmem:[#allocation4 + $0x10] sm:$0xff]
      %v3130 = vld [vmem:[#allocation4 + $0x18] sm:$0xff]
      %v3131 = vld [vmem:[#allocation4 + $0x20] sm:$0xff]
      %v3132 = vld [vmem:[#allocation4 + $0x28] sm:$0xff]
      %v3133 = vld [vmem:[#allocation4 + $0x30] sm:$0xff]
      %v3134 = vld [vmem:[#allocation4 + $0x38] sm:$0xff]
      %v3135 = vld [vmem:[#allocation4 + $0x40] sm:$0xff]
      %v3136 = vld [vmem:[#allocation4 + $0x48] sm:$0xff]
      %v3137 = vld [vmem:[#allocation4 + $0x50] sm:$0xff]
      %v3138 = vld [vmem:[#allocation4 + $0x58] sm:$0xff]
      %v3139 = vld [vmem:[#allocation4 + $0x60] sm:$0xff]
      %v3140 = vld [vmem:[#allocation4 + $0x68] sm:$0xff]
      %v3141 = vld [vmem:[#allocation4 + $0x70] sm:$0xff]
      %v3142 = vld [vmem:[#allocation4 + $0x78] sm:$0xff]
      %v3143 = vld [vmem:[#allocation4 + $0x80] sm:$0xff]
      %v3144 = vld [vmem:[#allocation4 + $0x88] sm:$0xf]
      %v3145 = vadd.f32 %v3127, %v3057
      %v3146 = vadd.f32 %v3128, %v3060
      %v3147 = vadd.f32 %v3129, %v3065
      %v3148 = vadd.f32 %v3130, %v3068
      %v3149 = vadd.f32 %v3131, %v3073
      %v3150 = vadd.f32 %v3132, %v3076
      %v3151 = vadd.f32 %v3133, %v3081
      %v3152 = vadd.f32 %v3134, %v3084
      %v3153 = vadd.f32 %v3135, %v3089
      %v3154 = vadd.f32 %v3136, %v3092
      %v3155 = vadd.f32 %v3137, %v3097
      %v3156 = vadd.f32 %v3138, %v3100
      %v3157 = vadd.f32 %v3139, %v3105
      %v3158 = vadd.f32 %v3140, %v3108
      %v3159 = vadd.f32 %v3141, %v3113
      %v3160 = vadd.f32 %v3142, %v3116
      %v3161 = vadd.f32 %v3143, %v3121
      %v3162 = vadd.f32 %v3144, %v3124
      %3163 = vst.msk [vmem:[#allocation4] sm:$0xff] %vm2573, %v3145
      %3164 = vst.msk [vmem:[#allocation4 + $0x8] sm:$0xff] %vm2573, %v3146
      %3165 = vst.msk [vmem:[#allocation4 + $0x10] sm:$0xff] %vm2573, %v3147
      %3166 = vst.msk [vmem:[#allocation4 + $0x18] sm:$0xff] %vm2573, %v3148
      %3167 = vst.msk [vmem:[#allocation4 + $0x20] sm:$0xff] %vm2573, %v3149
      %3168 = vst.msk [vmem:[#allocation4 + $0x28] sm:$0xff] %vm2573, %v3150
      %3169 = vst.msk [vmem:[#allocation4 + $0x30] sm:$0xff] %vm2573, %v3151
      %3170 = vst.msk [vmem:[#allocation4 + $0x38] sm:$0xff] %vm2573, %v3152
      %3171 = vst.msk [vmem:[#allocation4 + $0x40] sm:$0xff] %vm2573, %v3153
      %3172 = vst.msk [vmem:[#allocation4 + $0x48] sm:$0xff] %vm2573, %v3154
      %3173 = vst.msk [vmem:[#allocation4 + $0x50] sm:$0xff] %vm2573, %v3155
      %3174 = vst.msk [vmem:[#allocation4 + $0x58] sm:$0xff] %vm2573, %v3156
      %3175 = vst.msk [vmem:[#allocation4 + $0x60] sm:$0xff] %vm2573, %v3157
      %3176 = vst.msk [vmem:[#allocation4 + $0x68] sm:$0xff] %vm2573, %v3158
      %3177 = vst.msk [vmem:[#allocation4 + $0x70] sm:$0xff] %vm2573, %v3159
      %3178 = vst.msk [vmem:[#allocation4 + $0x78] sm:$0xff] %vm2573, %v3160
      %3179 = vst.msk [vmem:[#allocation4 + $0x80] sm:$0xff] %vm2573, %v3161
      %3180 = vst.msk [vmem:[#allocation4 + $0x88] sm:$0xf] %vm2591, %v3162
      %v3181 = vld [vmem:[#allocation3 + $0x14] sm:$0xe]
      %v3182 = vld [vmem:[#allocation3 + $0x18] sm:$0xf]
      %v3183 = vld [vmem:[#allocation3 + $0x1c] sm:$0xf]
      %v3184 = vld [vmem:[#allocation3 + $0x20] sm:$0xf]
      %v3185 = vld [vmem:[#allocation3 + $0x24] sm:$0xf]
      %v3186 = vld [vmem:[#allocation3 + $0x28] sm:$0xf]
      %v3187 = vld [vmem:[#allocation3 + $0x2c] sm:$0xf]
      %v3188 = vld [vmem:[#allocation3 + $0x30] sm:$0xf]
      %v3189 = vld [vmem:[#allocation3 + $0x34] sm:$0xf]
      %v3190 = vld [vmem:[#allocation3 + $0x38] sm:$0xf]
      %v3191 = vld [vmem:[#allocation3 + $0x3c] sm:$0xf]
      %v3192 = vld [vmem:[#allocation3 + $0x40] sm:$0xf]
      %v3193 = vld [vmem:[#allocation3 + $0x44] sm:$0xf]
      %v3194 = vld [vmem:[#allocation3 + $0x48] sm:$0xf]
      %v3195 = vld [vmem:[#allocation3 + $0x4c] sm:$0xf]
      %v3196 = vld [vmem:[#allocation3 + $0x50] sm:$0xf]
      %v3197 = vld [vmem:[#allocation3 + $0x54] sm:$0xf]
      %v3198 = vld [vmem:[#allocation3 + $0x58] sm:$0x7]
      %s3199 = scalar_lea.vmem %s3, 60
      %v3200 = vld [vmem:[%s3199] sm:$0xf]
      %v3201 = vld [vmem:[%s3199 + $0x4] sm:$0xf]
      %v3202 = vld [vmem:[%s3199 + $0x8] sm:$0xf]
      %v3203 = vld [vmem:[%s3199 + $0xc] sm:$0xf]
      %v3204 = vld [vmem:[%s3199 + $0x10] sm:$0xf]
      %v3223 = vunpack.c.l.b16 %v3181
      %v3224 = vunpack.c.l.b16 %v3182
      %v3225 = vunpack.c.l.b16 %v3183
      %v3226 = vunpack.c.l.b16 %v3184
      %v3227 = vunpack.c.l.b16 %v3185
      %v3228 = vunpack.c.l.b16 %v3186
      %v3229 = vunpack.c.l.b16 %v3187
      %v3230 = vunpack.c.l.b16 %v3188
      %v3231 = vunpack.c.l.b16 %v3189
      %v3232 = vunpack.c.l.b16 %v3190
      %v3233 = vunpack.c.l.b16 %v3191
      %v3234 = vunpack.c.l.b16 %v3192
      %v3235 = vunpack.c.l.b16 %v3193
      %v3236 = vunpack.c.l.b16 %v3194
      %v3237 = vunpack.c.l.b16 %v3195
      %v3238 = vunpack.c.l.b16 %v3196
      %v3239 = vunpack.c.l.b16 %v3197
      %v3240 = vunpack.c.l.b16 %v3198
      %v3241 = vpack.c.b16 %v3224, %v3223
      %v3242 = vpack.c.b16 %v3226, %v3225
      %v3243 = vpack.c.b16 %v3228, %v3227
      %v3244 = vpack.c.b16 %v3230, %v3229
      %v3245 = vpack.c.b16 %v3232, %v3231
      %v3246 = vpack.c.b16 %v3234, %v3233
      %v3247 = vpack.c.b16 %v3236, %v3235
      %v3248 = vpack.c.b16 %v3238, %v3237
      %v3249 = vpack.c.b16 %v3240, %v3239
      %vm3250 = vcmask 1046528
      %v3251 = vrot.slane %v3241, 1
      %v3252 = vrot.slane %v3242, 1
      %v3253 = vsel %vm3250, %v3251, %v3252
      %v3254 = vrot.slane %v3243, 1
      %v3255 = vsel %vm3250, %v3252, %v3254
      %v3256 = vrot.slane %v3244, 1
      %v3257 = vsel %vm3250, %v3254, %v3256
      %v3258 = vrot.slane %v3245, 1
      %v3259 = vsel %vm3250, %v3256, %v3258
      %v3260 = vrot.slane %v3246, 1
      %v3261 = vsel %vm3250, %v3258, %v3260
      %v3262 = vrot.slane %v3247, 1
      %v3263 = vsel %vm3250, %v3260, %v3262
      %v3264 = vrot.slane %v3248, 1
      %v3265 = vsel %vm3250, %v3262, %v3264
      %v3266 = vrot.slane %v3249, 1
      %v3267 = vsel %vm3250, %v3264, %v3266
      %v3273 = vunpack.c.l.b16 %v3200
      %v3274 = vunpack.c.l.b16 %v3201
      %v3275 = vunpack.c.l.b16 %v3202
      %v3276 = vunpack.c.l.b16 %v3203
      %v3277 = vunpack.c.l.b16 %v3204
      %v3278 = vpack.c.b16 %v3274, %v3273
      %v3279 = vpack.c.b16 %v3276, %v3275
      %v3280 = vpack.c.b16 %v3277, %v3277
      %v3284 = vsel %vm1527, %v3253, 0
      %v3287 = vsel %vm1527, %v3255, 0
      %v3290 = vsel %vm1527, %v3257, 0
      %v3293 = vsel %vm1527, %v3259, 0
      %v3296 = vsel %vm1527, %v3261, 0
      %v3299 = vsel %vm1527, %v3263, 0
      %v3302 = vsel %vm1527, %v3265, 0
      %v3305 = vsel %vm1527, %v3267, 0
      %v3308 = vsel %vm1527, %v3266, 0
      %v3311 = vsel %vm2464, %v3280, 0
      %3313 = vmatprep.subr.bf16.mxu0 0
      %3314 = vmatpush1.bf16.msra.mxu0 0
      %3315 = vmatprep.subr.bf16.mxu0 0
      %3316 = vmatpush1.bf16.msra.mxu0 0
      %3317 = vmatprep.subr.bf16.mxu0 0
      %3318 = vmatpush1.bf16.msra.mxu0 0
      %3319 = vmatprep.subr.bf16.mxu0 0
      %3320 = vmatpush1.bf16.msra.mxu0 0
      %3321 = vmatprep.subr.bf16.mxu0 0
      %3322 = vmatpush1.bf16.msra.mxu0 0
      %3323 = vmatprep.subr.bf16.mxu0 0
      %3324 = vmatpush1.bf16.msra.mxu0 %v3311
      %3325 = vmatprep.subr.bf16.mxu0 0
      %3326 = vmatpush1.bf16.msra.mxu0 %v3279
      %3327 = vmatprep.subr.bf16.mxu0 0
      %3328 = vmatpush1.bf16.msra.mxu0 %v3278
      %3329 = vmatprep.subr.bf16.mxu0 0
      %3330 = vmatpush2.bf16.msra.mxu0 0
      %3331 = vmatprep.subr.bf16.mxu0 0
      %3332 = vmatpush2.bf16.msra.mxu0 0
      %3333 = vmatprep.subr.bf16.mxu0 0
      %3334 = vmatpush2.bf16.msra.mxu0 0
      %3335 = vmatprep.subr.bf16.mxu0 0
      %3336 = vmatpush2.bf16.msra.mxu0 0
      %3337 = vmatprep.subr.bf16.mxu0 0
      %3338 = vmatpush2.bf16.msra.mxu0 0
      %3339 = vmatprep.subr.bf16.mxu0 0
      %3340 = vmatpush2.bf16.msra.mxu0 0
      %3341 = vmatprep.subr.bf16.mxu0 0
      %3342 = vmatpush2.bf16.msra.mxu0 0
      %3343 = vmatprep.subr.bf16.mxu0 0
      %3344 = vmatpush2.bf16.msra.mxu0 0
      %3345 = vmatprep.mubr.bf16.mxu0 0
      %3346 = vmatmul.mubr.bf16.gmra.mxu0 %v3284
      %v3347 = vpop.f32.mrf.mxu0
      %v3348 = vadd.f32 0.0, %v3347
      %v3349 = vpop.f32.mrf.mxu0
      %v3350 = vpop.f32.mrf.mxu0
      %v3351 = vadd.f32 0.0, %v3350
      %v3352 = vpop.f32.mrf.mxu0
      %3353 = vmatprep.mubr.bf16.mxu0 0
      %3354 = vmatmul.mubr.bf16.gmra.mxu0 %v3287
      %v3355 = vpop.f32.mrf.mxu0
      %v3356 = vadd.f32 0.0, %v3355
      %v3357 = vpop.f32.mrf.mxu0
      %v3358 = vpop.f32.mrf.mxu0
      %v3359 = vadd.f32 0.0, %v3358
      %v3360 = vpop.f32.mrf.mxu0
      %3361 = vmatprep.mubr.bf16.mxu0 0
      %3362 = vmatmul.mubr.bf16.gmra.mxu0 %v3290
      %v3363 = vpop.f32.mrf.mxu0
      %v3364 = vadd.f32 0.0, %v3363
      %v3365 = vpop.f32.mrf.mxu0
      %v3366 = vpop.f32.mrf.mxu0
      %v3367 = vadd.f32 0.0, %v3366
      %v3368 = vpop.f32.mrf.mxu0
      %3369 = vmatprep.mubr.bf16.mxu0 0
      %3370 = vmatmul.mubr.bf16.gmra.mxu0 %v3293
      %v3371 = vpop.f32.mrf.mxu0
      %v3372 = vadd.f32 0.0, %v3371
      %v3373 = vpop.f32.mrf.mxu0
      %v3374 = vpop.f32.mrf.mxu0
      %v3375 = vadd.f32 0.0, %v3374
      %v3376 = vpop.f32.mrf.mxu0
      %3377 = vmatprep.mubr.bf16.mxu0 0
      %3378 = vmatmul.mubr.bf16.gmra.mxu0 %v3296
      %v3379 = vpop.f32.mrf.mxu0
      %v3380 = vadd.f32 0.0, %v3379
      %v3381 = vpop.f32.mrf.mxu0
      %v3382 = vpop.f32.mrf.mxu0
      %v3383 = vadd.f32 0.0, %v3382
      %v3384 = vpop.f32.mrf.mxu0
      %3385 = vmatprep.mubr.bf16.mxu0 0
      %3386 = vmatmul.mubr.bf16.gmra.mxu0 %v3299
      %v3387 = vpop.f32.mrf.mxu0
      %v3388 = vadd.f32 0.0, %v3387
      %v3389 = vpop.f32.mrf.mxu0
      %v3390 = vpop.f32.mrf.mxu0
      %v3391 = vadd.f32 0.0, %v3390
      %v3392 = vpop.f32.mrf.mxu0
      %3393 = vmatprep.mubr.bf16.mxu0 0
      %3394 = vmatmul.mubr.bf16.gmra.mxu0 %v3302
      %v3395 = vpop.f32.mrf.mxu0
      %v3396 = vadd.f32 0.0, %v3395
      %v3397 = vpop.f32.mrf.mxu0
      %v3398 = vpop.f32.mrf.mxu0
      %v3399 = vadd.f32 0.0, %v3398
      %v3400 = vpop.f32.mrf.mxu0
      %3401 = vmatprep.mubr.bf16.mxu0 0
      %3402 = vmatmul.mubr.bf16.gmra.mxu0 %v3305
      %v3403 = vpop.f32.mrf.mxu0
      %v3404 = vadd.f32 0.0, %v3403
      %v3405 = vpop.f32.mrf.mxu0
      %v3406 = vpop.f32.mrf.mxu0
      %v3407 = vadd.f32 0.0, %v3406
      %v3408 = vpop.f32.mrf.mxu0
      %3409 = vmatprep.mubr.bf16.mxu0 0
      %3410 = vmatmul.mubr.bf16.gmra.mxu0 %v3308
      %v3411 = vpop.f32.mrf.mxu0
      %v3412 = vadd.f32 0.0, %v3411
      %v3413 = vpop.f32.mrf.mxu0
      %v3414 = vpop.f32.mrf.mxu0
      %v3415 = vadd.f32 0.0, %v3414
      %v3416 = vpop.f32.mrf.mxu0
      %3417 = vdwg.mxu0
      %v3418 = vld [vmem:[#allocation4] sm:$0xff]
      %v3419 = vld [vmem:[#allocation4 + $0x8] sm:$0xff]
      %v3420 = vld [vmem:[#allocation4 + $0x10] sm:$0xff]
      %v3421 = vld [vmem:[#allocation4 + $0x18] sm:$0xff]
      %v3422 = vld [vmem:[#allocation4 + $0x20] sm:$0xff]
      %v3423 = vld [vmem:[#allocation4 + $0x28] sm:$0xff]
      %v3424 = vld [vmem:[#allocation4 + $0x30] sm:$0xff]
      %v3425 = vld [vmem:[#allocation4 + $0x38] sm:$0xff]
      %v3426 = vld [vmem:[#allocation4 + $0x40] sm:$0xff]
      %v3427 = vld [vmem:[#allocation4 + $0x48] sm:$0xff]
      %v3428 = vld [vmem:[#allocation4 + $0x50] sm:$0xff]
      %v3429 = vld [vmem:[#allocation4 + $0x58] sm:$0xff]
      %v3430 = vld [vmem:[#allocation4 + $0x60] sm:$0xff]
      %v3431 = vld [vmem:[#allocation4 + $0x68] sm:$0xff]
      %v3432 = vld [vmem:[#allocation4 + $0x70] sm:$0xff]
      %v3433 = vld [vmem:[#allocation4 + $0x78] sm:$0xff]
      %v3434 = vld [vmem:[#allocation4 + $0x80] sm:$0xff]
      %v3435 = vld [vmem:[#allocation4 + $0x88] sm:$0xf]
      %v3436 = vadd.f32 %v3418, %v3348
      %v3437 = vadd.f32 %v3419, %v3351
      %v3438 = vadd.f32 %v3420, %v3356
      %v3439 = vadd.f32 %v3421, %v3359
      %v3440 = vadd.f32 %v3422, %v3364
      %v3441 = vadd.f32 %v3423, %v3367
      %v3442 = vadd.f32 %v3424, %v3372
      %v3443 = vadd.f32 %v3425, %v3375
      %v3444 = vadd.f32 %v3426, %v3380
      %v3445 = vadd.f32 %v3427, %v3383
      %v3446 = vadd.f32 %v3428, %v3388
      %v3447 = vadd.f32 %v3429, %v3391
      %v3448 = vadd.f32 %v3430, %v3396
      %v3449 = vadd.f32 %v3431, %v3399
      %v3450 = vadd.f32 %v3432, %v3404
      %v3451 = vadd.f32 %v3433, %v3407
      %v3452 = vadd.f32 %v3434, %v3412
      %v3453 = vadd.f32 %v3435, %v3415
      %3454 = vst.msk [vmem:[#allocation4] sm:$0xff] %vm2573, %v3436
      %3455 = vst.msk [vmem:[#allocation4 + $0x8] sm:$0xff] %vm2573, %v3437
      %3456 = vst.msk [vmem:[#allocation4 + $0x10] sm:$0xff] %vm2573, %v3438
      %3457 = vst.msk [vmem:[#allocation4 + $0x18] sm:$0xff] %vm2573, %v3439
      %3458 = vst.msk [vmem:[#allocation4 + $0x20] sm:$0xff] %vm2573, %v3440
      %3459 = vst.msk [vmem:[#allocation4 + $0x28] sm:$0xff] %vm2573, %v3441
      %3460 = vst.msk [vmem:[#allocation4 + $0x30] sm:$0xff] %vm2573, %v3442
      %3461 = vst.msk [vmem:[#allocation4 + $0x38] sm:$0xff] %vm2573, %v3443
      %3462 = vst.msk [vmem:[#allocation4 + $0x40] sm:$0xff] %vm2573, %v3444
      %3463 = vst.msk [vmem:[#allocation4 + $0x48] sm:$0xff] %vm2573, %v3445
      %3464 = vst.msk [vmem:[#allocation4 + $0x50] sm:$0xff] %vm2573, %v3446
      %3465 = vst.msk [vmem:[#allocation4 + $0x58] sm:$0xff] %vm2573, %v3447
      %3466 = vst.msk [vmem:[#allocation4 + $0x60] sm:$0xff] %vm2573, %v3448
      %3467 = vst.msk [vmem:[#allocation4 + $0x68] sm:$0xff] %vm2573, %v3449
      %3468 = vst.msk [vmem:[#allocation4 + $0x70] sm:$0xff] %vm2573, %v3450
      %3469 = vst.msk [vmem:[#allocation4 + $0x78] sm:$0xff] %vm2573, %v3451
      %3470 = vst.msk [vmem:[#allocation4 + $0x80] sm:$0xff] %vm2573, %v3452
      %3471 = vst.msk [vmem:[#allocation4 + $0x88] sm:$0xf] %vm2591, %v3453
      %v3472 = vld [vmem:[#allocation3 + $0x1c] sm:$0xf]
      %v3473 = vld [vmem:[#allocation3 + $0x20] sm:$0xf]
      %v3474 = vld [vmem:[#allocation3 + $0x24] sm:$0xf]
      %v3475 = vld [vmem:[#allocation3 + $0x28] sm:$0xf]
      %v3476 = vld [vmem:[#allocation3 + $0x2c] sm:$0xf]
      %v3477 = vld [vmem:[#allocation3 + $0x30] sm:$0xf]
      %v3478 = vld [vmem:[#allocation3 + $0x34] sm:$0xf]
      %v3479 = vld [vmem:[#allocation3 + $0x38] sm:$0xf]
      %v3480 = vld [vmem:[#allocation3 + $0x3c] sm:$0xf]
      %v3481 = vld [vmem:[#allocation3 + $0x40] sm:$0xf]
      %v3482 = vld [vmem:[#allocation3 + $0x44] sm:$0xf]
      %v3483 = vld [vmem:[#allocation3 + $0x48] sm:$0xf]
      %v3484 = vld [vmem:[#allocation3 + $0x4c] sm:$0xf]
      %v3485 = vld [vmem:[#allocation3 + $0x50] sm:$0xf]
      %v3486 = vld [vmem:[#allocation3 + $0x54] sm:$0xf]
      %v3487 = vld [vmem:[#allocation3 + $0x58] sm:$0xf]
      %v3488 = vld [vmem:[#allocation3 + $0x5c] sm:$0xf]
      %v3489 = vld [vmem:[#allocation3 + $0x60] sm:$0x3]
      %s3490 = scalar_lea.vmem %s3, 80
      %v3491 = vld [vmem:[%s3490] sm:$0xf]
      %v3492 = vld [vmem:[%s3490 + $0x4] sm:$0xf]
      %v3493 = vld [vmem:[%s3490 + $0x8] sm:$0xf]
      %v3494 = vld [vmem:[%s3490 + $0xc] sm:$0xf]
      %v3495 = vld [vmem:[%s3490 + $0x10] sm:$0xf]
      %v3514 = vunpack.c.l.b16 %v3472
      %v3515 = vunpack.c.l.b16 %v3473
      %v3516 = vunpack.c.l.b16 %v3474
      %v3517 = vunpack.c.l.b16 %v3475
      %v3518 = vunpack.c.l.b16 %v3476
      %v3519 = vunpack.c.l.b16 %v3477
      %v3520 = vunpack.c.l.b16 %v3478
      %v3521 = vunpack.c.l.b16 %v3479
      %v3522 = vunpack.c.l.b16 %v3480
      %v3523 = vunpack.c.l.b16 %v3481
      %v3524 = vunpack.c.l.b16 %v3482
      %v3525 = vunpack.c.l.b16 %v3483
      %v3526 = vunpack.c.l.b16 %v3484
      %v3527 = vunpack.c.l.b16 %v3485
      %v3528 = vunpack.c.l.b16 %v3486
      %v3529 = vunpack.c.l.b16 %v3487
      %v3530 = vunpack.c.l.b16 %v3488
      %v3531 = vunpack.c.l.b16 %v3489
      %v3532 = vpack.c.b16 %v3515, %v3514
      %v3533 = vpack.c.b16 %v3517, %v3516
      %v3534 = vpack.c.b16 %v3519, %v3518
      %v3535 = vpack.c.b16 %v3521, %v3520
      %v3536 = vpack.c.b16 %v3523, %v3522
      %v3537 = vpack.c.b16 %v3525, %v3524
      %v3538 = vpack.c.b16 %v3527, %v3526
      %v3539 = vpack.c.b16 %v3529, %v3528
      %v3540 = vpack.c.b16 %v3531, %v3530
      %v3546 = vunpack.c.l.b16 %v3491
      %v3547 = vunpack.c.l.b16 %v3492
      %v3548 = vunpack.c.l.b16 %v3493
      %v3549 = vunpack.c.l.b16 %v3494
      %v3550 = vunpack.c.l.b16 %v3495
      %v3551 = vpack.c.b16 %v3547, %v3546
      %v3552 = vpack.c.b16 %v3549, %v3548
      %v3553 = vpack.c.b16 %v3550, %v3550
      %v3557 = vsel %vm1527, %v3532, 0
      %v3560 = vsel %vm1527, %v3533, 0
      %v3563 = vsel %vm1527, %v3534, 0
      %v3566 = vsel %vm1527, %v3535, 0
      %v3569 = vsel %vm1527, %v3536, 0
      %v3572 = vsel %vm1527, %v3537, 0
      %v3575 = vsel %vm1527, %v3538, 0
      %v3578 = vsel %vm1527, %v3539, 0
      %v3581 = vsel %vm1527, %v3540, 0
      %v3584 = vsel %vm2464, %v3553, 0
      %3586 = vmatprep.subr.bf16.mxu0 0
      %3587 = vmatpush1.bf16.msra.mxu0 0
      %3588 = vmatprep.subr.bf16.mxu0 0
      %3589 = vmatpush1.bf16.msra.mxu0 0
      %3590 = vmatprep.subr.bf16.mxu0 0
      %3591 = vmatpush1.bf16.msra.mxu0 0
      %3592 = vmatprep.subr.bf16.mxu0 0
      %3593 = vmatpush1.bf16.msra.mxu0 0
      %3594 = vmatprep.subr.bf16.mxu0 0
      %3595 = vmatpush1.bf16.msra.mxu0 0
      %3596 = vmatprep.subr.bf16.mxu0 0
      %3597 = vmatpush1.bf16.msra.mxu0 %v3584
      %3598 = vmatprep.subr.bf16.mxu0 0
      %3599 = vmatpush1.bf16.msra.mxu0 %v3552
      %3600 = vmatprep.subr.bf16.mxu0 0
      %3601 = vmatpush1.bf16.msra.mxu0 %v3551
      %3602 = vmatprep.subr.bf16.mxu0 0
      %3603 = vmatpush2.bf16.msra.mxu0 0
      %3604 = vmatprep.subr.bf16.mxu0 0
      %3605 = vmatpush2.bf16.msra.mxu0 0
      %3606 = vmatprep.subr.bf16.mxu0 0
      %3607 = vmatpush2.bf16.msra.mxu0 0
      %3608 = vmatprep.subr.bf16.mxu0 0
      %3609 = vmatpush2.bf16.msra.mxu0 0
      %3610 = vmatprep.subr.bf16.mxu0 0
      %3611 = vmatpush2.bf16.msra.mxu0 0
      %3612 = vmatprep.subr.bf16.mxu0 0
      %3613 = vmatpush2.bf16.msra.mxu0 0
      %3614 = vmatprep.subr.bf16.mxu0 0
      %3615 = vmatpush2.bf16.msra.mxu0 0
      %3616 = vmatprep.subr.bf16.mxu0 0
      %3617 = vmatpush2.bf16.msra.mxu0 0
      %3618 = vmatprep.mubr.bf16.mxu0 0
      %3619 = vmatmul.mubr.bf16.gmra.mxu0 %v3557
      %v3620 = vpop.f32.mrf.mxu0
      %v3621 = vadd.f32 0.0, %v3620
      %v3622 = vpop.f32.mrf.mxu0
      %v3623 = vpop.f32.mrf.mxu0
      %v3624 = vadd.f32 0.0, %v3623
      %v3625 = vpop.f32.mrf.mxu0
      %3626 = vmatprep.mubr.bf16.mxu0 0
      %3627 = vmatmul.mubr.bf16.gmra.mxu0 %v3560
      %v3628 = vpop.f32.mrf.mxu0
      %v3629 = vadd.f32 0.0, %v3628
      %v3630 = vpop.f32.mrf.mxu0
      %v3631 = vpop.f32.mrf.mxu0
      %v3632 = vadd.f32 0.0, %v3631
      %v3633 = vpop.f32.mrf.mxu0
      %3634 = vmatprep.mubr.bf16.mxu0 0
      %3635 = vmatmul.mubr.bf16.gmra.mxu0 %v3563
      %v3636 = vpop.f32.mrf.mxu0
      %v3637 = vadd.f32 0.0, %v3636
      %v3638 = vpop.f32.mrf.mxu0
      %v3639 = vpop.f32.mrf.mxu0
      %v3640 = vadd.f32 0.0, %v3639
      %v3641 = vpop.f32.mrf.mxu0
      %3642 = vmatprep.mubr.bf16.mxu0 0
      %3643 = vmatmul.mubr.bf16.gmra.mxu0 %v3566
      %v3644 = vpop.f32.mrf.mxu0
      %v3645 = vadd.f32 0.0, %v3644
      %v3646 = vpop.f32.mrf.mxu0
      %v3647 = vpop.f32.mrf.mxu0
      %v3648 = vadd.f32 0.0, %v3647
      %v3649 = vpop.f32.mrf.mxu0
      %3650 = vmatprep.mubr.bf16.mxu0 0
      %3651 = vmatmul.mubr.bf16.gmra.mxu0 %v3569
      %v3652 = vpop.f32.mrf.mxu0
      %v3653 = vadd.f32 0.0, %v3652
      %v3654 = vpop.f32.mrf.mxu0
      %v3655 = vpop.f32.mrf.mxu0
      %v3656 = vadd.f32 0.0, %v3655
      %v3657 = vpop.f32.mrf.mxu0
      %3658 = vmatprep.mubr.bf16.mxu0 0
      %3659 = vmatmul.mubr.bf16.gmra.mxu0 %v3572
      %v3660 = vpop.f32.mrf.mxu0
      %v3661 = vadd.f32 0.0, %v3660
      %v3662 = vpop.f32.mrf.mxu0
      %v3663 = vpop.f32.mrf.mxu0
      %v3664 = vadd.f32 0.0, %v3663
      %v3665 = vpop.f32.mrf.mxu0
      %3666 = vmatprep.mubr.bf16.mxu0 0
      %3667 = vmatmul.mubr.bf16.gmra.mxu0 %v3575
      %v3668 = vpop.f32.mrf.mxu0
      %v3669 = vadd.f32 0.0, %v3668
      %v3670 = vpop.f32.mrf.mxu0
      %v3671 = vpop.f32.mrf.mxu0
      %v3672 = vadd.f32 0.0, %v3671
      %v3673 = vpop.f32.mrf.mxu0
      %3674 = vmatprep.mubr.bf16.mxu0 0
      %3675 = vmatmul.mubr.bf16.gmra.mxu0 %v3578
      %v3676 = vpop.f32.mrf.mxu0
      %v3677 = vadd.f32 0.0, %v3676
      %v3678 = vpop.f32.mrf.mxu0
      %v3679 = vpop.f32.mrf.mxu0
      %v3680 = vadd.f32 0.0, %v3679
      %v3681 = vpop.f32.mrf.mxu0
      %3682 = vmatprep.mubr.bf16.mxu0 0
      %3683 = vmatmul.mubr.bf16.gmra.mxu0 %v3581
      %v3684 = vpop.f32.mrf.mxu0
      %v3685 = vadd.f32 0.0, %v3684
      %v3686 = vpop.f32.mrf.mxu0
      %v3687 = vpop.f32.mrf.mxu0
      %v3688 = vadd.f32 0.0, %v3687
      %v3689 = vpop.f32.mrf.mxu0
      %3690 = vdwg.mxu0
      %v3691 = vld [vmem:[#allocation4] sm:$0xff]
      %v3692 = vld [vmem:[#allocation4 + $0x8] sm:$0xff]
      %v3693 = vld [vmem:[#allocation4 + $0x10] sm:$0xff]
      %v3694 = vld [vmem:[#allocation4 + $0x18] sm:$0xff]
      %v3695 = vld [vmem:[#allocation4 + $0x20] sm:$0xff]
      %v3696 = vld [vmem:[#allocation4 + $0x28] sm:$0xff]
      %v3697 = vld [vmem:[#allocation4 + $0x30] sm:$0xff]
      %v3698 = vld [vmem:[#allocation4 + $0x38] sm:$0xff]
      %v3699 = vld [vmem:[#allocation4 + $0x40] sm:$0xff]
      %v3700 = vld [vmem:[#allocation4 + $0x48] sm:$0xff]
      %v3701 = vld [vmem:[#allocation4 + $0x50] sm:$0xff]
      %v3702 = vld [vmem:[#allocation4 + $0x58] sm:$0xff]
      %v3703 = vld [vmem:[#allocation4 + $0x60] sm:$0xff]
      %v3704 = vld [vmem:[#allocation4 + $0x68] sm:$0xff]
      %v3705 = vld [vmem:[#allocation4 + $0x70] sm:$0xff]
      %v3706 = vld [vmem:[#allocation4 + $0x78] sm:$0xff]
      %v3707 = vld [vmem:[#allocation4 + $0x80] sm:$0xff]
      %v3708 = vld [vmem:[#allocation4 + $0x88] sm:$0xf]
      %v3709 = vadd.f32 %v3691, %v3621
      %v3710 = vadd.f32 %v3692, %v3624
      %v3711 = vadd.f32 %v3693, %v3629
      %v3712 = vadd.f32 %v3694, %v3632
      %v3713 = vadd.f32 %v3695, %v3637
      %v3714 = vadd.f32 %v3696, %v3640
      %v3715 = vadd.f32 %v3697, %v3645
      %v3716 = vadd.f32 %v3698, %v3648
      %v3717 = vadd.f32 %v3699, %v3653
      %v3718 = vadd.f32 %v3700, %v3656
      %v3719 = vadd.f32 %v3701, %v3661
      %v3720 = vadd.f32 %v3702, %v3664
      %v3721 = vadd.f32 %v3703, %v3669
      %v3722 = vadd.f32 %v3704, %v3672
      %v3723 = vadd.f32 %v3705, %v3677
      %v3724 = vadd.f32 %v3706, %v3680
      %v3725 = vadd.f32 %v3707, %v3685
      %v3726 = vadd.f32 %v3708, %v3688
      %3727 = vst.msk [vmem:[#allocation4] sm:$0xff] %vm2573, %v3709
      %3728 = vst.msk [vmem:[#allocation4 + $0x8] sm:$0xff] %vm2573, %v3710
      %3729 = vst.msk [vmem:[#allocation4 + $0x10] sm:$0xff] %vm2573, %v3711
      %3730 = vst.msk [vmem:[#allocation4 + $0x18] sm:$0xff] %vm2573, %v3712
      %3731 = vst.msk [vmem:[#allocation4 + $0x20] sm:$0xff] %vm2573, %v3713
      %3732 = vst.msk [vmem:[#allocation4 + $0x28] sm:$0xff] %vm2573, %v3714
      %3733 = vst.msk [vmem:[#allocation4 + $0x30] sm:$0xff] %vm2573, %v3715
      %3734 = vst.msk [vmem:[#allocation4 + $0x38] sm:$0xff] %vm2573, %v3716
      %3735 = vst.msk [vmem:[#allocation4 + $0x40] sm:$0xff] %vm2573, %v3717
      %3736 = vst.msk [vmem:[#allocation4 + $0x48] sm:$0xff] %vm2573, %v3718
      %3737 = vst.msk [vmem:[#allocation4 + $0x50] sm:$0xff] %vm2573, %v3719
      %3738 = vst.msk [vmem:[#allocation4 + $0x58] sm:$0xff] %vm2573, %v3720
      %3739 = vst.msk [vmem:[#allocation4 + $0x60] sm:$0xff] %vm2573, %v3721
      %3740 = vst.msk [vmem:[#allocation4 + $0x68] sm:$0xff] %vm2573, %v3722
      %3741 = vst.msk [vmem:[#allocation4 + $0x70] sm:$0xff] %vm2573, %v3723
      %3742 = vst.msk [vmem:[#allocation4 + $0x78] sm:$0xff] %vm2573, %v3724
      %3743 = vst.msk [vmem:[#allocation4 + $0x80] sm:$0xff] %vm2573, %v3725
      %3744 = vst.msk [vmem:[#allocation4 + $0x88] sm:$0xf] %vm2591, %v3726
      %v3745 = vld [vmem:[%s4] sm:$0x1]
      %v3746 = vld [vmem:[%s6] sm:$0x1]
      %v3747 = vld [vmem:[#allocation4] ss:$2 sm:$0xff]
      %s3748 = scalar_lea.vmem [#allocation4], 16
      %v3749 = vld [vmem:[%s3748] ss:$2 sm:$0x3f]
      %s3750 = scalar_lea.vmem [#allocation4], 1
      %v3751 = vld [vmem:[%s3750] ss:$2 sm:$0xff]
      %s3752 = scalar_lea.vmem [#allocation4], 17
      %v3753 = vld [vmem:[%s3752] ss:$2 sm:$0x3f]
      %v3754 = vmax.f32 %v3747, %v3751
      %v3755 = vmax.f32 %v3749, %v3753
      %vm3758 = vcmask 1040384
      %v3759 = vrot.slane %v3754, 7
      %v3760 = vrot.slane %v3755, 7
      %v3761 = vsel %vm3758, %v3759, %v3760
      %v3763 = vmax.f32 %v3754, %v3761
      %v3765 = vlaneseq
      %v3766 = vshrl.u32 %v3765, 7
      %v3767 = vsub.s32 0, %v3766
      %v3768 = vrot.slane %v3745, %v3767
      %v3770 = vadd.f32 %v3763, %v3768
      %v3771 = vmax.f32 %v3770, 0.0
      %v3772 = vpack.c.bf16 %v3771, %v3771
      %v3773 = vld [vmem:[%s5] sm:$0xf]
      %v3774 = vld [vmem:[%s5 + $0x4] sm:$0xf]
      %v3777 = vunpack.c.l.b16 %v3773
      %v3778 = vunpack.c.l.b16 %v3774
      %v3779 = vpack.c.b16 %v3778, %v3777
      %v3782 = vsel %vm2573, %v3772, 0
      %3784 = vmatprep.subr.bf16.mxu0 0
      %3785 = vmatpush1.bf16.msra.mxu0 0
      %3786 = vmatprep.subr.bf16.mxu0 0
      %3787 = vmatpush1.bf16.msra.mxu0 0
      %3788 = vmatprep.subr.bf16.mxu0 0
      %3789 = vmatpush1.bf16.msra.mxu0 0
      %3790 = vmatprep.subr.bf16.mxu0 0
      %3791 = vmatpush1.bf16.msra.mxu0 0
      %3792 = vmatprep.subr.bf16.mxu0 0
      %3793 = vmatpush1.bf16.msra.mxu0 0
      %3794 = vmatprep.subr.bf16.mxu0 0
      %3795 = vmatpush1.bf16.msra.mxu0 0
      %3796 = vmatprep.subr.bf16.mxu0 0
      %3797 = vmatpush1.bf16.msra.mxu0 0
      %3798 = vmatprep.subr.bf16.mxu0 0
      %3799 = vmatpush1.bf16.msra.mxu0 %v3779
      %3800 = vmatprep.subr.bf16.mxu0 0
      %3801 = vmatpush2.bf16.msra.mxu0 0
      %3802 = vmatprep.subr.bf16.mxu0 0
      %3803 = vmatpush2.bf16.msra.mxu0 0
      %3804 = vmatprep.subr.bf16.mxu0 0
      %3805 = vmatpush2.bf16.msra.mxu0 0
      %3806 = vmatprep.subr.bf16.mxu0 0
      %3807 = vmatpush2.bf16.msra.mxu0 0
      %3808 = vmatprep.subr.bf16.mxu0 0
      %3809 = vmatpush2.bf16.msra.mxu0 0
      %3810 = vmatprep.subr.bf16.mxu0 0
      %3811 = vmatpush2.bf16.msra.mxu0 0
      %3812 = vmatprep.subr.bf16.mxu0 0
      %3813 = vmatpush2.bf16.msra.mxu0 0
      %3814 = vmatprep.subr.bf16.mxu0 0
      %3815 = vmatpush2.bf16.msra.mxu0 0
      %3816 = vmatprep.mubr.bf16.mxu0 0
      %3817 = vmatmul.mubr.bf16.gmra.mxu0 %v3782
      %v3818 = vpop.f32.mrf.mxu0
      %v3819 = vadd.f32 0.0, %v3818
      %v3820 = vpop.f32.mrf.mxu0
      %v3821 = vpop.f32.mrf.mxu0
      %v3822 = vpop.f32.mrf.mxu0
      %3823 = vdwg.mxu0
      %v3824 = vadd.f32 %v3746, %v3819
      %s3825 = scalar_lea.vmem %s5, 8
      %v3826 = vld [vmem:[%s3825] sm:$0xf]
      %v3827 = vld [vmem:[%s3825 + $0x4] sm:$0xf]
      %v3828 = vshrl.u32 %v3772, 16
      %v3832 = vunpack.c.l.b16 %v3826
      %v3833 = vunpack.c.l.b16 %v3827
      %v3834 = vpack.c.b16 %v3833, %v3832
      %v3837 = vsel %vm2573, %v3828, 0
      %3839 = vmatprep.subr.bf16.mxu0 0
      %3840 = vmatpush1.bf16.msra.mxu0 0
      %3841 = vmatprep.subr.bf16.mxu0 0
      %3842 = vmatpush1.bf16.msra.mxu0 0
      %3843 = vmatprep.subr.bf16.mxu0 0
      %3844 = vmatpush1.bf16.msra.mxu0 0
      %3845 = vmatprep.subr.bf16.mxu0 0
      %3846 = vmatpush1.bf16.msra.mxu0 0
      %3847 = vmatprep.subr.bf16.mxu0 0
      %3848 = vmatpush1.bf16.msra.mxu0 0
      %3849 = vmatprep.subr.bf16.mxu0 0
      %3850 = vmatpush1.bf16.msra.mxu0 0
      %3851 = vmatprep.subr.bf16.mxu0 0
      %3852 = vmatpush1.bf16.msra.mxu0 0
      %3853 = vmatprep.subr.bf16.mxu0 0
      %3854 = vmatpush1.bf16.msra.mxu0 %v3834
      %3855 = vmatprep.subr.bf16.mxu0 0
      %3856 = vmatpush2.bf16.msra.mxu0 0
      %3857 = vmatprep.subr.bf16.mxu0 0
      %3858 = vmatpush2.bf16.msra.mxu0 0
      %3859 = vmatprep.subr.bf16.mxu0 0
      %3860 = vmatpush2.bf16.msra.mxu0 0
      %3861 = vmatprep.subr.bf16.mxu0 0
      %3862 = vmatpush2.bf16.msra.mxu0 0
      %3863 = vmatprep.subr.bf16.mxu0 0
      %3864 = vmatpush2.bf16.msra.mxu0 0
      %3865 = vmatprep.subr.bf16.mxu0 0
      %3866 = vmatpush2.bf16.msra.mxu0 0
      %3867 = vmatprep.subr.bf16.mxu0 0
      %3868 = vmatpush2.bf16.msra.mxu0 0
      %3869 = vmatprep.subr.bf16.mxu0 0
      %3870 = vmatpush2.bf16.msra.mxu0 0
      %3871 = vmatprep.mubr.bf16.mxu0 0
      %3872 = vmatmul.mubr.bf16.gmra.mxu0 %v3837
      %v3873 = vpop.f32.mrf.mxu0
      %v3874 = vadd.f32 0.0, %v3873
      %v3875 = vpop.f32.mrf.mxu0
      %v3876 = vpop.f32.mrf.mxu0
      %v3877 = vpop.f32.mrf.mxu0
      %3878 = vdwg.mxu0
      %v3879 = vadd.f32 %v3824, %v3874
      %s3880 = scalar_lea.vmem %s5, 16
      %v3881 = vld [vmem:[%s3880] sm:$0xf]
      %v3882 = vld [vmem:[%s3880 + $0x4] sm:$0xf]
      %v3884 = vrot.slane %v3772, 1
      %v3887 = vunpack.c.l.b16 %v3881
      %v3888 = vunpack.c.l.b16 %v3882
      %v3889 = vpack.c.b16 %v3888, %v3887
      %v3892 = vsel %vm2573, %v3884, 0
      %3894 = vmatprep.subr.bf16.mxu0 0
      %3895 = vmatpush1.bf16.msra.mxu0 0
      %3896 = vmatprep.subr.bf16.mxu0 0
      %3897 = vmatpush1.bf16.msra.mxu0 0
      %3898 = vmatprep.subr.bf16.mxu0 0
      %3899 = vmatpush1.bf16.msra.mxu0 0
      %3900 = vmatprep.subr.bf16.mxu0 0
      %3901 = vmatpush1.bf16.msra.mxu0 0
      %3902 = vmatprep.subr.bf16.mxu0 0
      %3903 = vmatpush1.bf16.msra.mxu0 0
      %3904 = vmatprep.subr.bf16.mxu0 0
      %3905 = vmatpush1.bf16.msra.mxu0 0
      %3906 = vmatprep.subr.bf16.mxu0 0
      %3907 = vmatpush1.bf16.msra.mxu0 0
      %3908 = vmatprep.subr.bf16.mxu0 0
      %3909 = vmatpush1.bf16.msra.mxu0 %v3889
      %3910 = vmatprep.subr.bf16.mxu0 0
      %3911 = vmatpush2.bf16.msra.mxu0 0
      %3912 = vmatprep.subr.bf16.mxu0 0
      %3913 = vmatpush2.bf16.msra.mxu0 0
      %3914 = vmatprep.subr.bf16.mxu0 0
      %3915 = vmatpush2.bf16.msra.mxu0 0
      %3916 = vmatprep.subr.bf16.mxu0 0
      %3917 = vmatpush2.bf16.msra.mxu0 0
      %3918 = vmatprep.subr.bf16.mxu0 0
      %3919 = vmatpush2.bf16.msra.mxu0 0
      %3920 = vmatprep.subr.bf16.mxu0 0
      %3921 = vmatpush2.bf16.msra.mxu0 0
      %3922 = vmatprep.subr.bf16.mxu0 0
      %3923 = vmatpush2.bf16.msra.mxu0 0
      %3924 = vmatprep.subr.bf16.mxu0 0
      %3925 = vmatpush2.bf16.msra.mxu0 0
      %3926 = vmatprep.mubr.bf16.mxu0 0
      %3927 = vmatmul.mubr.bf16.gmra.mxu0 %v3892
      %v3928 = vpop.f32.mrf.mxu0
      %v3929 = vadd.f32 0.0, %v3928
      %v3930 = vpop.f32.mrf.mxu0
      %v3931 = vpop.f32.mrf.mxu0
      %v3932 = vpop.f32.mrf.mxu0
      %3933 = vdwg.mxu0
      %v3934 = vadd.f32 %v3879, %v3929
      %s3935 = scalar_lea.vmem %s5, 24
      %v3936 = vld [vmem:[%s3935] sm:$0xf]
      %v3937 = vld [vmem:[%s3935 + $0x4] sm:$0xf]
      %v3938 = vrot.slane %v3828, 1
      %v3941 = vunpack.c.l.b16 %v3936
      %v3942 = vunpack.c.l.b16 %v3937
      %v3943 = vpack.c.b16 %v3942, %v3941
      %v3946 = vsel %vm2573, %v3938, 0
      %3948 = vmatprep.subr.bf16.mxu0 0
      %3949 = vmatpush1.bf16.msra.mxu0 0
      %3950 = vmatprep.subr.bf16.mxu0 0
      %3951 = vmatpush1.bf16.msra.mxu0 0
      %3952 = vmatprep.subr.bf16.mxu0 0
      %3953 = vmatpush1.bf16.msra.mxu0 0
      %3954 = vmatprep.subr.bf16.mxu0 0
      %3955 = vmatpush1.bf16.msra.mxu0 0
      %3956 = vmatprep.subr.bf16.mxu0 0
      %3957 = vmatpush1.bf16.msra.mxu0 0
      %3958 = vmatprep.subr.bf16.mxu0 0
      %3959 = vmatpush1.bf16.msra.mxu0 0
      %3960 = vmatprep.subr.bf16.mxu0 0
      %3961 = vmatpush1.bf16.msra.mxu0 0
      %3962 = vmatprep.subr.bf16.mxu0 0
      %3963 = vmatpush1.bf16.msra.mxu0 %v3943
      %3964 = vmatprep.subr.bf16.mxu0 0
      %3965 = vmatpush2.bf16.msra.mxu0 0
      %3966 = vmatprep.subr.bf16.mxu0 0
      %3967 = vmatpush2.bf16.msra.mxu0 0
      %3968 = vmatprep.subr.bf16.mxu0 0
      %3969 = vmatpush2.bf16.msra.mxu0 0
      %3970 = vmatprep.subr.bf16.mxu0 0
      %3971 = vmatpush2.bf16.msra.mxu0 0
      %3972 = vmatprep.subr.bf16.mxu0 0
      %3973 = vmatpush2.bf16.msra.mxu0 0
      %3974 = vmatprep.subr.bf16.mxu0 0
      %3975 = vmatpush2.bf16.msra.mxu0 0
      %3976 = vmatprep.subr.bf16.mxu0 0
      %3977 = vmatpush2.bf16.msra.mxu0 0
      %3978 = vmatprep.subr.bf16.mxu0 0
      %3979 = vmatpush2.bf16.msra.mxu0 0
      %3980 = vmatprep.mubr.bf16.mxu0 0
      %3981 = vmatmul.mubr.bf16.gmra.mxu0 %v3946
      %v3982 = vpop.f32.mrf.mxu0
      %v3983 = vadd.f32 0.0, %v3982
      %v3984 = vpop.f32.mrf.mxu0
      %v3985 = vpop.f32.mrf.mxu0
      %v3986 = vpop.f32.mrf.mxu0
      %3987 = vdwg.mxu0
      %v3988 = vadd.f32 %v3934, %v3983
      %s3989 = scalar_lea.vmem %s5, 32
      %v3990 = vld [vmem:[%s3989] sm:$0xf]
      %v3991 = vld [vmem:[%s3989 + $0x4] sm:$0xf]
      %v3992 = vrot.slane %v3772, 2
      %v3995 = vunpack.c.l.b16 %v3990
      %v3996 = vunpack.c.l.b16 %v3991
      %v3997 = vpack.c.b16 %v3996, %v3995
      %v4000 = vsel %vm2573, %v3992, 0
      %4002 = vmatprep.subr.bf16.mxu0 0
      %4003 = vmatpush1.bf16.msra.mxu0 0
      %4004 = vmatprep.subr.bf16.mxu0 0
      %4005 = vmatpush1.bf16.msra.mxu0 0
      %4006 = vmatprep.subr.bf16.mxu0 0
      %4007 = vmatpush1.bf16.msra.mxu0 0
      %4008 = vmatprep.subr.bf16.mxu0 0
      %4009 = vmatpush1.bf16.msra.mxu0 0
      %4010 = vmatprep.subr.bf16.mxu0 0
      %4011 = vmatpush1.bf16.msra.mxu0 0
      %4012 = vmatprep.subr.bf16.mxu0 0
      %4013 = vmatpush1.bf16.msra.mxu0 0
      %4014 = vmatprep.subr.bf16.mxu0 0
      %4015 = vmatpush1.bf16.msra.mxu0 0
      %4016 = vmatprep.subr.bf16.mxu0 0
      %4017 = vmatpush1.bf16.msra.mxu0 %v3997
      %4018 = vmatprep.subr.bf16.mxu0 0
      %4019 = vmatpush2.bf16.msra.mxu0 0
      %4020 = vmatprep.subr.bf16.mxu0 0
      %4021 = vmatpush2.bf16.msra.mxu0 0
      %4022 = vmatprep.subr.bf16.mxu0 0
      %4023 = vmatpush2.bf16.msra.mxu0 0
      %4024 = vmatprep.subr.bf16.mxu0 0
      %4025 = vmatpush2.bf16.msra.mxu0 0
      %4026 = vmatprep.subr.bf16.mxu0 0
      %4027 = vmatpush2.bf16.msra.mxu0 0
      %4028 = vmatprep.subr.bf16.mxu0 0
      %4029 = vmatpush2.bf16.msra.mxu0 0
      %4030 = vmatprep.subr.bf16.mxu0 0
      %4031 = vmatpush2.bf16.msra.mxu0 0
      %4032 = vmatprep.subr.bf16.mxu0 0
      %4033 = vmatpush2.bf16.msra.mxu0 0
      %4034 = vmatprep.mubr.bf16.mxu0 0
      %4035 = vmatmul.mubr.bf16.gmra.mxu0 %v4000
      %v4036 = vpop.f32.mrf.mxu0
      %v4037 = vadd.f32 0.0, %v4036
      %v4038 = vpop.f32.mrf.mxu0
      %v4039 = vpop.f32.mrf.mxu0
      %v4040 = vpop.f32.mrf.mxu0
      %4041 = vdwg.mxu0
      %v4042 = vadd.f32 %v3988, %v4037
      %s4043 = scalar_lea.vmem [#allocation4], 28
      %v4044 = vld [vmem:[%s4043] ss:$2 sm:$0xff]
      %s4045 = scalar_lea.vmem [#allocation4], 44
      %v4046 = vld [vmem:[%s4045] ss:$2 sm:$0x3f]
      %s4047 = scalar_lea.vmem [#allocation4], 29
      %v4048 = vld [vmem:[%s4047] ss:$2 sm:$0xff]
      %s4049 = scalar_lea.vmem [#allocation4], 45
      %v4050 = vld [vmem:[%s4049] ss:$2 sm:$0x3f]
      %v4051 = vmax.f32 %v4044, %v4048
      %v4052 = vmax.f32 %v4046, %v4050
      %v4055 = vrot.slane %v4051, 7
      %v4056 = vrot.slane %v4052, 7
      %v4057 = vsel %vm3758, %v4055, %v4056
      %v4059 = vmax.f32 %v4051, %v4057
      %v4060 = vadd.f32 %v4059, %v3768
      %v4061 = vmax.f32 %v4060, 0.0
      %v4062 = vpack.c.bf16 %v4061, %v4061
      %s4063 = scalar_lea.vmem %s5, 40
      %v4064 = vld [vmem:[%s4063] sm:$0xf]
      %v4065 = vld [vmem:[%s4063 + $0x4] sm:$0xf]
      %v4068 = vunpack.c.l.b16 %v4064
      %v4069 = vunpack.c.l.b16 %v4065
      %v4070 = vpack.c.b16 %v4069, %v4068
      %v4073 = vsel %vm2573, %v4062, 0
      %4075 = vmatprep.subr.bf16.mxu0 0
      %4076 = vmatpush1.bf16.msra.mxu0 0
      %4077 = vmatprep.subr.bf16.mxu0 0
      %4078 = vmatpush1.bf16.msra.mxu0 0
      %4079 = vmatprep.subr.bf16.mxu0 0
      %4080 = vmatpush1.bf16.msra.mxu0 0
      %4081 = vmatprep.subr.bf16.mxu0 0
      %4082 = vmatpush1.bf16.msra.mxu0 0
      %4083 = vmatprep.subr.bf16.mxu0 0
      %4084 = vmatpush1.bf16.msra.mxu0 0
      %4085 = vmatprep.subr.bf16.mxu0 0
      %4086 = vmatpush1.bf16.msra.mxu0 0
      %4087 = vmatprep.subr.bf16.mxu0 0
      %4088 = vmatpush1.bf16.msra.mxu0 0
      %4089 = vmatprep.subr.bf16.mxu0 0
      %4090 = vmatpush1.bf16.msra.mxu0 %v4070
      %4091 = vmatprep.subr.bf16.mxu0 0
      %4092 = vmatpush2.bf16.msra.mxu0 0
      %4093 = vmatprep.subr.bf16.mxu0 0
      %4094 = vmatpush2.bf16.msra.mxu0 0
      %4095 = vmatprep.subr.bf16.mxu0 0
      %4096 = vmatpush2.bf16.msra.mxu0 0
      %4097 = vmatprep.subr.bf16.mxu0 0
      %4098 = vmatpush2.bf16.msra.mxu0 0
      %4099 = vmatprep.subr.bf16.mxu0 0
      %4100 = vmatpush2.bf16.msra.mxu0 0
      %4101 = vmatprep.subr.bf16.mxu0 0
      %4102 = vmatpush2.bf16.msra.mxu0 0
      %4103 = vmatprep.subr.bf16.mxu0 0
      %4104 = vmatpush2.bf16.msra.mxu0 0
      %4105 = vmatprep.subr.bf16.mxu0 0
      %4106 = vmatpush2.bf16.msra.mxu0 0
      %4107 = vmatprep.mubr.bf16.mxu0 0
      %4108 = vmatmul.mubr.bf16.gmra.mxu0 %v4073
      %v4109 = vpop.f32.mrf.mxu0
      %v4110 = vadd.f32 0.0, %v4109
      %v4111 = vpop.f32.mrf.mxu0
      %v4112 = vpop.f32.mrf.mxu0
      %v4113 = vpop.f32.mrf.mxu0
      %4114 = vdwg.mxu0
      %v4115 = vadd.f32 %v4042, %v4110
      %s4116 = scalar_lea.vmem %s5, 48
      %v4117 = vld [vmem:[%s4116] sm:$0xf]
      %v4118 = vld [vmem:[%s4116 + $0x4] sm:$0xf]
      %v4119 = vshrl.u32 %v4062, 16
      %v4123 = vunpack.c.l.b16 %v4117
      %v4124 = vunpack.c.l.b16 %v4118
      %v4125 = vpack.c.b16 %v4124, %v4123
      %v4128 = vsel %vm2573, %v4119, 0
      %4130 = vmatprep.subr.bf16.mxu0 0
      %4131 = vmatpush1.bf16.msra.mxu0 0
      %4132 = vmatprep.subr.bf16.mxu0 0
      %4133 = vmatpush1.bf16.msra.mxu0 0
      %4134 = vmatprep.subr.bf16.mxu0 0
      %4135 = vmatpush1.bf16.msra.mxu0 0
      %4136 = vmatprep.subr.bf16.mxu0 0
      %4137 = vmatpush1.bf16.msra.mxu0 0
      %4138 = vmatprep.subr.bf16.mxu0 0
      %4139 = vmatpush1.bf16.msra.mxu0 0
      %4140 = vmatprep.subr.bf16.mxu0 0
      %4141 = vmatpush1.bf16.msra.mxu0 0
      %4142 = vmatprep.subr.bf16.mxu0 0
      %4143 = vmatpush1.bf16.msra.mxu0 0
      %4144 = vmatprep.subr.bf16.mxu0 0
      %4145 = vmatpush1.bf16.msra.mxu0 %v4125
      %4146 = vmatprep.subr.bf16.mxu0 0
      %4147 = vmatpush2.bf16.msra.mxu0 0
      %4148 = vmatprep.subr.bf16.mxu0 0
      %4149 = vmatpush2.bf16.msra.mxu0 0
      %4150 = vmatprep.subr.bf16.mxu0 0
      %4151 = vmatpush2.bf16.msra.mxu0 0
      %4152 = vmatprep.subr.bf16.mxu0 0
      %4153 = vmatpush2.bf16.msra.mxu0 0
      %4154 = vmatprep.subr.bf16.mxu0 0
      %4155 = vmatpush2.bf16.msra.mxu0 0
      %4156 = vmatprep.subr.bf16.mxu0 0
      %4157 = vmatpush2.bf16.msra.mxu0 0
      %4158 = vmatprep.subr.bf16.mxu0 0
      %4159 = vmatpush2.bf16.msra.mxu0 0
      %4160 = vmatprep.subr.bf16.mxu0 0
      %4161 = vmatpush2.bf16.msra.mxu0 0
      %4162 = vmatprep.mubr.bf16.mxu0 0
      %4163 = vmatmul.mubr.bf16.gmra.mxu0 %v4128
      %v4164 = vpop.f32.mrf.mxu0
      %v4165 = vadd.f32 0.0, %v4164
      %v4166 = vpop.f32.mrf.mxu0
      %v4167 = vpop.f32.mrf.mxu0
      %v4168 = vpop.f32.mrf.mxu0
      %4169 = vdwg.mxu0
      %v4170 = vadd.f32 %v4115, %v4165
      %s4171 = scalar_lea.vmem %s5, 56
      %v4172 = vld [vmem:[%s4171] sm:$0xf]
      %v4173 = vld [vmem:[%s4171 + $0x4] sm:$0xf]
      %v4175 = vrot.slane %v4062, 1
      %v4178 = vunpack.c.l.b16 %v4172
      %v4179 = vunpack.c.l.b16 %v4173
      %v4180 = vpack.c.b16 %v4179, %v4178
      %v4183 = vsel %vm2573, %v4175, 0
      %4185 = vmatprep.subr.bf16.mxu0 0
      %4186 = vmatpush1.bf16.msra.mxu0 0
      %4187 = vmatprep.subr.bf16.mxu0 0
      %4188 = vmatpush1.bf16.msra.mxu0 0
      %4189 = vmatprep.subr.bf16.mxu0 0
      %4190 = vmatpush1.bf16.msra.mxu0 0
      %4191 = vmatprep.subr.bf16.mxu0 0
      %4192 = vmatpush1.bf16.msra.mxu0 0
      %4193 = vmatprep.subr.bf16.mxu0 0
      %4194 = vmatpush1.bf16.msra.mxu0 0
      %4195 = vmatprep.subr.bf16.mxu0 0
      %4196 = vmatpush1.bf16.msra.mxu0 0
      %4197 = vmatprep.subr.bf16.mxu0 0
      %4198 = vmatpush1.bf16.msra.mxu0 0
      %4199 = vmatprep.subr.bf16.mxu0 0
      %4200 = vmatpush1.bf16.msra.mxu0 %v4180
      %4201 = vmatprep.subr.bf16.mxu0 0
      %4202 = vmatpush2.bf16.msra.mxu0 0
      %4203 = vmatprep.subr.bf16.mxu0 0
      %4204 = vmatpush2.bf16.msra.mxu0 0
      %4205 = vmatprep.subr.bf16.mxu0 0
      %4206 = vmatpush2.bf16.msra.mxu0 0
      %4207 = vmatprep.subr.bf16.mxu0 0
      %4208 = vmatpush2.bf16.msra.mxu0 0
      %4209 = vmatprep.subr.bf16.mxu0 0
      %4210 = vmatpush2.bf16.msra.mxu0 0
      %4211 = vmatprep.subr.bf16.mxu0 0
      %4212 = vmatpush2.bf16.msra.mxu0 0
      %4213 = vmatprep.subr.bf16.mxu0 0
      %4214 = vmatpush2.bf16.msra.mxu0 0
      %4215 = vmatprep.subr.bf16.mxu0 0
      %4216 = vmatpush2.bf16.msra.mxu0 0
      %4217 = vmatprep.mubr.bf16.mxu0 0
      %4218 = vmatmul.mubr.bf16.gmra.mxu0 %v4183
      %v4219 = vpop.f32.mrf.mxu0
      %v4220 = vadd.f32 0.0, %v4219
      %v4221 = vpop.f32.mrf.mxu0
      %v4222 = vpop.f32.mrf.mxu0
      %v4223 = vpop.f32.mrf.mxu0
      %4224 = vdwg.mxu0
      %v4225 = vadd.f32 %v4170, %v4220
      %s4226 = scalar_lea.vmem %s5, 64
      %v4227 = vld [vmem:[%s4226] sm:$0xf]
      %v4228 = vld [vmem:[%s4226 + $0x4] sm:$0xf]
      %v4229 = vrot.slane %v4119, 1
      %v4232 = vunpack.c.l.b16 %v4227
      %v4233 = vunpack.c.l.b16 %v4228
      %v4234 = vpack.c.b16 %v4233, %v4232
      %v4237 = vsel %vm2573, %v4229, 0
      %4239 = vmatprep.subr.bf16.mxu0 0
      %4240 = vmatpush1.bf16.msra.mxu0 0
      %4241 = vmatprep.subr.bf16.mxu0 0
      %4242 = vmatpush1.bf16.msra.mxu0 0
      %4243 = vmatprep.subr.bf16.mxu0 0
      %4244 = vmatpush1.bf16.msra.mxu0 0
      %4245 = vmatprep.subr.bf16.mxu0 0
      %4246 = vmatpush1.bf16.msra.mxu0 0
      %4247 = vmatprep.subr.bf16.mxu0 0
      %4248 = vmatpush1.bf16.msra.mxu0 0
      %4249 = vmatprep.subr.bf16.mxu0 0
      %4250 = vmatpush1.bf16.msra.mxu0 0
      %4251 = vmatprep.subr.bf16.mxu0 0
      %4252 = vmatpush1.bf16.msra.mxu0 0
      %4253 = vmatprep.subr.bf16.mxu0 0
      %4254 = vmatpush1.bf16.msra.mxu0 %v4234
      %4255 = vmatprep.subr.bf16.mxu0 0
      %4256 = vmatpush2.bf16.msra.mxu0 0
      %4257 = vmatprep.subr.bf16.mxu0 0
      %4258 = vmatpush2.bf16.msra.mxu0 0
      %4259 = vmatprep.subr.bf16.mxu0 0
      %4260 = vmatpush2.bf16.msra.mxu0 0
      %4261 = vmatprep.subr.bf16.mxu0 0
      %4262 = vmatpush2.bf16.msra.mxu0 0
      %4263 = vmatprep.subr.bf16.mxu0 0
      %4264 = vmatpush2.bf16.msra.mxu0 0
      %4265 = vmatprep.subr.bf16.mxu0 0
      %4266 = vmatpush2.bf16.msra.mxu0 0
      %4267 = vmatprep.subr.bf16.mxu0 0
      %4268 = vmatpush2.bf16.msra.mxu0 0
      %4269 = vmatprep.subr.bf16.mxu0 0
      %4270 = vmatpush2.bf16.msra.mxu0 0
      %4271 = vmatprep.mubr.bf16.mxu0 0
      %4272 = vmatmul.mubr.bf16.gmra.mxu0 %v4237
      %v4273 = vpop.f32.mrf.mxu0
      %v4274 = vadd.f32 0.0, %v4273
      %v4275 = vpop.f32.mrf.mxu0
      %v4276 = vpop.f32.mrf.mxu0
      %v4277 = vpop.f32.mrf.mxu0
      %4278 = vdwg.mxu0
      %v4279 = vadd.f32 %v4225, %v4274
      %s4280 = scalar_lea.vmem %s5, 72
      %v4281 = vld [vmem:[%s4280] sm:$0xf]
      %v4282 = vld [vmem:[%s4280 + $0x4] sm:$0xf]
      %v4283 = vrot.slane %v4062, 2
      %v4286 = vunpack.c.l.b16 %v4281
      %v4287 = vunpack.c.l.b16 %v4282
      %v4288 = vpack.c.b16 %v4287, %v4286
      %v4291 = vsel %vm2573, %v4283, 0
      %4293 = vmatprep.subr.bf16.mxu0 0
      %4294 = vmatpush1.bf16.msra.mxu0 0
      %4295 = vmatprep.subr.bf16.mxu0 0
      %4296 = vmatpush1.bf16.msra.mxu0 0
      %4297 = vmatprep.subr.bf16.mxu0 0
      %4298 = vmatpush1.bf16.msra.mxu0 0
      %4299 = vmatprep.subr.bf16.mxu0 0
      %4300 = vmatpush1.bf16.msra.mxu0 0
      %4301 = vmatprep.subr.bf16.mxu0 0
      %4302 = vmatpush1.bf16.msra.mxu0 0
      %4303 = vmatprep.subr.bf16.mxu0 0
      %4304 = vmatpush1.bf16.msra.mxu0 0
      %4305 = vmatprep.subr.bf16.mxu0 0
      %4306 = vmatpush1.bf16.msra.mxu0 0
      %4307 = vmatprep.subr.bf16.mxu0 0
      %4308 = vmatpush1.bf16.msra.mxu0 %v4288
      %4309 = vmatprep.subr.bf16.mxu0 0
      %4310 = vmatpush2.bf16.msra.mxu0 0
      %4311 = vmatprep.subr.bf16.mxu0 0
      %4312 = vmatpush2.bf16.msra.mxu0 0
      %4313 = vmatprep.subr.bf16.mxu0 0
      %4314 = vmatpush2.bf16.msra.mxu0 0
      %4315 = vmatprep.subr.bf16.mxu0 0
      %4316 = vmatpush2.bf16.msra.mxu0 0
      %4317 = vmatprep.subr.bf16.mxu0 0
      %4318 = vmatpush2.bf16.msra.mxu0 0
      %4319 = vmatprep.subr.bf16.mxu0 0
      %4320 = vmatpush2.bf16.msra.mxu0 0
      %4321 = vmatprep.subr.bf16.mxu0 0
      %4322 = vmatpush2.bf16.msra.mxu0 0
      %4323 = vmatprep.subr.bf16.mxu0 0
      %4324 = vmatpush2.bf16.msra.mxu0 0
      %4325 = vmatprep.mubr.bf16.mxu0 0
      %4326 = vmatmul.mubr.bf16.gmra.mxu0 %v4291
      %v4327 = vpop.f32.mrf.mxu0
      %v4328 = vadd.f32 0.0, %v4327
      %v4329 = vpop.f32.mrf.mxu0
      %v4330 = vpop.f32.mrf.mxu0
      %v4331 = vpop.f32.mrf.mxu0
      %4332 = vdwg.mxu0
      %v4333 = vadd.f32 %v4279, %v4328
      %s4334 = scalar_lea.vmem [#allocation4], 56
      %v4335 = vld [vmem:[%s4334] ss:$2 sm:$0xff]
      %s4336 = scalar_lea.vmem [#allocation4], 72
      %v4337 = vld [vmem:[%s4336] ss:$2 sm:$0x3f]
      %s4338 = scalar_lea.vmem [#allocation4], 57
      %v4339 = vld [vmem:[%s4338] ss:$2 sm:$0xff]
      %s4340 = scalar_lea.vmem [#allocation4], 73
      %v4341 = vld [vmem:[%s4340] ss:$2 sm:$0x3f]
      %v4342 = vmax.f32 %v4335, %v4339
      %v4343 = vmax.f32 %v4337, %v4341
      %v4346 = vrot.slane %v4342, 7
      %v4347 = vrot.slane %v4343, 7
      %v4348 = vsel %vm3758, %v4346, %v4347
      %v4350 = vmax.f32 %v4342, %v4348
      %v4351 = vadd.f32 %v4350, %v3768
      %v4352 = vmax.f32 %v4351, 0.0
      %v4353 = vpack.c.bf16 %v4352, %v4352
      %s4354 = scalar_lea.vmem %s5, 80
      %v4355 = vld [vmem:[%s4354] sm:$0xf]
      %v4356 = vld [vmem:[%s4354 + $0x4] sm:$0xf]
      %v4359 = vunpack.c.l.b16 %v4355
      %v4360 = vunpack.c.l.b16 %v4356
      %v4361 = vpack.c.b16 %v4360, %v4359
      %v4364 = vsel %vm2573, %v4353, 0
      %4366 = vmatprep.subr.bf16.mxu0 0
      %4367 = vmatpush1.bf16.msra.mxu0 0
      %4368 = vmatprep.subr.bf16.mxu0 0
      %4369 = vmatpush1.bf16.msra.mxu0 0
      %4370 = vmatprep.subr.bf16.mxu0 0
      %4371 = vmatpush1.bf16.msra.mxu0 0
      %4372 = vmatprep.subr.bf16.mxu0 0
      %4373 = vmatpush1.bf16.msra.mxu0 0
      %4374 = vmatprep.subr.bf16.mxu0 0
      %4375 = vmatpush1.bf16.msra.mxu0 0
      %4376 = vmatprep.subr.bf16.mxu0 0
      %4377 = vmatpush1.bf16.msra.mxu0 0
      %4378 = vmatprep.subr.bf16.mxu0 0
      %4379 = vmatpush1.bf16.msra.mxu0 0
      %4380 = vmatprep.subr.bf16.mxu0 0
      %4381 = vmatpush1.bf16.msra.mxu0 %v4361
      %4382 = vmatprep.subr.bf16.mxu0 0
      %4383 = vmatpush2.bf16.msra.mxu0 0
      %4384 = vmatprep.subr.bf16.mxu0 0
      %4385 = vmatpush2.bf16.msra.mxu0 0
      %4386 = vmatprep.subr.bf16.mxu0 0
      %4387 = vmatpush2.bf16.msra.mxu0 0
      %4388 = vmatprep.subr.bf16.mxu0 0
      %4389 = vmatpush2.bf16.msra.mxu0 0
      %4390 = vmatprep.subr.bf16.mxu0 0
      %4391 = vmatpush2.bf16.msra.mxu0 0
      %4392 = vmatprep.subr.bf16.mxu0 0
      %4393 = vmatpush2.bf16.msra.mxu0 0
      %4394 = vmatprep.subr.bf16.mxu0 0
      %4395 = vmatpush2.bf16.msra.mxu0 0
      %4396 = vmatprep.subr.bf16.mxu0 0
      %4397 = vmatpush2.bf16.msra.mxu0 0
      %4398 = vmatprep.mubr.bf16.mxu0 0
      %4399 = vmatmul.mubr.bf16.gmra.mxu0 %v4364
      %v4400 = vpop.f32.mrf.mxu0
      %v4401 = vadd.f32 0.0, %v4400
      %v4402 = vpop.f32.mrf.mxu0
      %v4403 = vpop.f32.mrf.mxu0
      %v4404 = vpop.f32.mrf.mxu0
      %4405 = vdwg.mxu0
      %v4406 = vadd.f32 %v4333, %v4401
      %s4407 = scalar_lea.vmem %s5, 88
      %v4408 = vld [vmem:[%s4407] sm:$0xf]
      %v4409 = vld [vmem:[%s4407 + $0x4] sm:$0xf]
      %v4410 = vshrl.u32 %v4353, 16
      %v4414 = vunpack.c.l.b16 %v4408
      %v4415 = vunpack.c.l.b16 %v4409
      %v4416 = vpack.c.b16 %v4415, %v4414
      %v4419 = vsel %vm2573, %v4410, 0
      %4421 = vmatprep.subr.bf16.mxu0 0
      %4422 = vmatpush1.bf16.msra.mxu0 0
      %4423 = vmatprep.subr.bf16.mxu0 0
      %4424 = vmatpush1.bf16.msra.mxu0 0
      %4425 = vmatprep.subr.bf16.mxu0 0
      %4426 = vmatpush1.bf16.msra.mxu0 0
      %4427 = vmatprep.subr.bf16.mxu0 0
      %4428 = vmatpush1.bf16.msra.mxu0 0
      %4429 = vmatprep.subr.bf16.mxu0 0
      %4430 = vmatpush1.bf16.msra.mxu0 0
      %4431 = vmatprep.subr.bf16.mxu0 0
      %4432 = vmatpush1.bf16.msra.mxu0 0
      %4433 = vmatprep.subr.bf16.mxu0 0
      %4434 = vmatpush1.bf16.msra.mxu0 0
      %4435 = vmatprep.subr.bf16.mxu0 0
      %4436 = vmatpush1.bf16.msra.mxu0 %v4416
      %4437 = vmatprep.subr.bf16.mxu0 0
      %4438 = vmatpush2.bf16.msra.mxu0 0
      %4439 = vmatprep.subr.bf16.mxu0 0
      %4440 = vmatpush2.bf16.msra.mxu0 0
      %4441 = vmatprep.subr.bf16.mxu0 0
      %4442 = vmatpush2.bf16.msra.mxu0 0
      %4443 = vmatprep.subr.bf16.mxu0 0
      %4444 = vmatpush2.bf16.msra.mxu0 0
      %4445 = vmatprep.subr.bf16.mxu0 0
      %4446 = vmatpush2.bf16.msra.mxu0 0
      %4447 = vmatprep.subr.bf16.mxu0 0
      %4448 = vmatpush2.bf16.msra.mxu0 0
      %4449 = vmatprep.subr.bf16.mxu0 0
      %4450 = vmatpush2.bf16.msra.mxu0 0
      %4451 = vmatprep.subr.bf16.mxu0 0
      %4452 = vmatpush2.bf16.msra.mxu0 0
      %4453 = vmatprep.mubr.bf16.mxu0 0
      %4454 = vmatmul.mubr.bf16.gmra.mxu0 %v4419
      %v4455 = vpop.f32.mrf.mxu0
      %v4456 = vadd.f32 0.0, %v4455
      %v4457 = vpop.f32.mrf.mxu0
      %v4458 = vpop.f32.mrf.mxu0
      %v4459 = vpop.f32.mrf.mxu0
      %4460 = vdwg.mxu0
      %v4461 = vadd.f32 %v4406, %v4456
      %s4462 = scalar_lea.vmem %s5, 96
      %v4463 = vld [vmem:[%s4462] sm:$0xf]
      %v4464 = vld [vmem:[%s4462 + $0x4] sm:$0xf]
      %v4466 = vrot.slane %v4353, 1
      %v4469 = vunpack.c.l.b16 %v4463
      %v4470 = vunpack.c.l.b16 %v4464
      %v4471 = vpack.c.b16 %v4470, %v4469
      %v4474 = vsel %vm2573, %v4466, 0
      %4476 = vmatprep.subr.bf16.mxu0 0
      %4477 = vmatpush1.bf16.msra.mxu0 0
      %4478 = vmatprep.subr.bf16.mxu0 0
      %4479 = vmatpush1.bf16.msra.mxu0 0
      %4480 = vmatprep.subr.bf16.mxu0 0
      %4481 = vmatpush1.bf16.msra.mxu0 0
      %4482 = vmatprep.subr.bf16.mxu0 0
      %4483 = vmatpush1.bf16.msra.mxu0 0
      %4484 = vmatprep.subr.bf16.mxu0 0
      %4485 = vmatpush1.bf16.msra.mxu0 0
      %4486 = vmatprep.subr.bf16.mxu0 0
      %4487 = vmatpush1.bf16.msra.mxu0 0
      %4488 = vmatprep.subr.bf16.mxu0 0
      %4489 = vmatpush1.bf16.msra.mxu0 0
      %4490 = vmatprep.subr.bf16.mxu0 0
      %4491 = vmatpush1.bf16.msra.mxu0 %v4471
      %4492 = vmatprep.subr.bf16.mxu0 0
      %4493 = vmatpush2.bf16.msra.mxu0 0
      %4494 = vmatprep.subr.bf16.mxu0 0
      %4495 = vmatpush2.bf16.msra.mxu0 0
      %4496 = vmatprep.subr.bf16.mxu0 0
      %4497 = vmatpush2.bf16.msra.mxu0 0
      %4498 = vmatprep.subr.bf16.mxu0 0
      %4499 = vmatpush2.bf16.msra.mxu0 0
      %4500 = vmatprep.subr.bf16.mxu0 0
      %4501 = vmatpush2.bf16.msra.mxu0 0
      %4502 = vmatprep.subr.bf16.mxu0 0
      %4503 = vmatpush2.bf16.msra.mxu0 0
      %4504 = vmatprep.subr.bf16.mxu0 0
      %4505 = vmatpush2.bf16.msra.mxu0 0
      %4506 = vmatprep.subr.bf16.mxu0 0
      %4507 = vmatpush2.bf16.msra.mxu0 0
      %4508 = vmatprep.mubr.bf16.mxu0 0
      %4509 = vmatmul.mubr.bf16.gmra.mxu0 %v4474
      %v4510 = vpop.f32.mrf.mxu0
      %v4511 = vadd.f32 0.0, %v4510
      %v4512 = vpop.f32.mrf.mxu0
      %v4513 = vpop.f32.mrf.mxu0
      %v4514 = vpop.f32.mrf.mxu0
      %4515 = vdwg.mxu0
      %v4516 = vadd.f32 %v4461, %v4511
      %s4517 = scalar_lea.vmem %s5, 104
      %v4518 = vld [vmem:[%s4517] sm:$0xf]
      %v4519 = vld [vmem:[%s4517 + $0x4] sm:$0xf]
      %v4520 = vrot.slane %v4410, 1
      %v4523 = vunpack.c.l.b16 %v4518
      %v4524 = vunpack.c.l.b16 %v4519
      %v4525 = vpack.c.b16 %v4524, %v4523
      %v4528 = vsel %vm2573, %v4520, 0
      %4530 = vmatprep.subr.bf16.mxu0 0
      %4531 = vmatpush1.bf16.msra.mxu0 0
      %4532 = vmatprep.subr.bf16.mxu0 0
      %4533 = vmatpush1.bf16.msra.mxu0 0
      %4534 = vmatprep.subr.bf16.mxu0 0
      %4535 = vmatpush1.bf16.msra.mxu0 0
      %4536 = vmatprep.subr.bf16.mxu0 0
      %4537 = vmatpush1.bf16.msra.mxu0 0
      %4538 = vmatprep.subr.bf16.mxu0 0
      %4539 = vmatpush1.bf16.msra.mxu0 0
      %4540 = vmatprep.subr.bf16.mxu0 0
      %4541 = vmatpush1.bf16.msra.mxu0 0
      %4542 = vmatprep.subr.bf16.mxu0 0
      %4543 = vmatpush1.bf16.msra.mxu0 0
      %4544 = vmatprep.subr.bf16.mxu0 0
      %4545 = vmatpush1.bf16.msra.mxu0 %v4525
      %4546 = vmatprep.subr.bf16.mxu0 0
      %4547 = vmatpush2.bf16.msra.mxu0 0
      %4548 = vmatprep.subr.bf16.mxu0 0
      %4549 = vmatpush2.bf16.msra.mxu0 0
      %4550 = vmatprep.subr.bf16.mxu0 0
      %4551 = vmatpush2.bf16.msra.mxu0 0
      %4552 = vmatprep.subr.bf16.mxu0 0
      %4553 = vmatpush2.bf16.msra.mxu0 0
      %4554 = vmatprep.subr.bf16.mxu0 0
      %4555 = vmatpush2.bf16.msra.mxu0 0
      %4556 = vmatprep.subr.bf16.mxu0 0
      %4557 = vmatpush2.bf16.msra.mxu0 0
      %4558 = vmatprep.subr.bf16.mxu0 0
      %4559 = vmatpush2.bf16.msra.mxu0 0
      %4560 = vmatprep.subr.bf16.mxu0 0
      %4561 = vmatpush2.bf16.msra.mxu0 0
      %4562 = vmatprep.mubr.bf16.mxu0 0
      %4563 = vmatmul.mubr.bf16.gmra.mxu0 %v4528
      %v4564 = vpop.f32.mrf.mxu0
      %v4565 = vadd.f32 0.0, %v4564
      %v4566 = vpop.f32.mrf.mxu0
      %v4567 = vpop.f32.mrf.mxu0
      %v4568 = vpop.f32.mrf.mxu0
      %4569 = vdwg.mxu0
      %v4570 = vadd.f32 %v4516, %v4565
      %s4571 = scalar_lea.vmem %s5, 112
      %v4572 = vld [vmem:[%s4571] sm:$0xf]
      %v4573 = vld [vmem:[%s4571 + $0x4] sm:$0xf]
      %v4574 = vrot.slane %v4353, 2
      %v4577 = vunpack.c.l.b16 %v4572
      %v4578 = vunpack.c.l.b16 %v4573
      %v4579 = vpack.c.b16 %v4578, %v4577
      %v4582 = vsel %vm2573, %v4574, 0
      %4584 = vmatprep.subr.bf16.mxu0 0
      %4585 = vmatpush1.bf16.msra.mxu0 0
      %4586 = vmatprep.subr.bf16.mxu0 0
      %4587 = vmatpush1.bf16.msra.mxu0 0
      %4588 = vmatprep.subr.bf16.mxu0 0
      %4589 = vmatpush1.bf16.msra.mxu0 0
      %4590 = vmatprep.subr.bf16.mxu0 0
      %4591 = vmatpush1.bf16.msra.mxu0 0
      %4592 = vmatprep.subr.bf16.mxu0 0
      %4593 = vmatpush1.bf16.msra.mxu0 0
      %4594 = vmatprep.subr.bf16.mxu0 0
      %4595 = vmatpush1.bf16.msra.mxu0 0
      %4596 = vmatprep.subr.bf16.mxu0 0
      %4597 = vmatpush1.bf16.msra.mxu0 0
      %4598 = vmatprep.subr.bf16.mxu0 0
      %4599 = vmatpush1.bf16.msra.mxu0 %v4579
      %4600 = vmatprep.subr.bf16.mxu0 0
      %4601 = vmatpush2.bf16.msra.mxu0 0
      %4602 = vmatprep.subr.bf16.mxu0 0
      %4603 = vmatpush2.bf16.msra.mxu0 0
      %4604 = vmatprep.subr.bf16.mxu0 0
      %4605 = vmatpush2.bf16.msra.mxu0 0
      %4606 = vmatprep.subr.bf16.mxu0 0
      %4607 = vmatpush2.bf16.msra.mxu0 0
      %4608 = vmatprep.subr.bf16.mxu0 0
      %4609 = vmatpush2.bf16.msra.mxu0 0
      %4610 = vmatprep.subr.bf16.mxu0 0
      %4611 = vmatpush2.bf16.msra.mxu0 0
      %4612 = vmatprep.subr.bf16.mxu0 0
      %4613 = vmatpush2.bf16.msra.mxu0 0
      %4614 = vmatprep.subr.bf16.mxu0 0
      %4615 = vmatpush2.bf16.msra.mxu0 0
      %4616 = vmatprep.mubr.bf16.mxu0 0
      %4617 = vmatmul.mubr.bf16.gmra.mxu0 %v4582
      %v4618 = vpop.f32.mrf.mxu0
      %v4619 = vadd.f32 0.0, %v4618
      %v4620 = vpop.f32.mrf.mxu0
      %v4621 = vpop.f32.mrf.mxu0
      %v4622 = vpop.f32.mrf.mxu0
      %4623 = vdwg.mxu0
      %v4624 = vadd.f32 %v4570, %v4619
      %s4625 = scalar_lea.vmem [#allocation4], 84
      %v4626 = vld [vmem:[%s4625] ss:$2 sm:$0xff]
      %s4627 = scalar_lea.vmem [#allocation4], 100
      %v4628 = vld [vmem:[%s4627] ss:$2 sm:$0x3f]
      %s4629 = scalar_lea.vmem [#allocation4], 85
      %v4630 = vld [vmem:[%s4629] ss:$2 sm:$0xff]
      %s4631 = scalar_lea.vmem [#allocation4], 101
      %v4632 = vld [vmem:[%s4631] ss:$2 sm:$0x3f]
      %v4633 = vmax.f32 %v4626, %v4630
      %v4634 = vmax.f32 %v4628, %v4632
      %v4637 = vrot.slane %v4633, 7
      %v4638 = vrot.slane %v4634, 7
      %v4639 = vsel %vm3758, %v4637, %v4638
      %v4641 = vmax.f32 %v4633, %v4639
      %v4642 = vadd.f32 %v4641, %v3768
      %v4643 = vmax.f32 %v4642, 0.0
      %v4644 = vpack.c.bf16 %v4643, %v4643
      %s4645 = scalar_lea.vmem %s5, 120
      %v4646 = vld [vmem:[%s4645] sm:$0xf]
      %v4647 = vld [vmem:[%s4645 + $0x4] sm:$0xf]
      %v4650 = vunpack.c.l.b16 %v4646
      %v4651 = vunpack.c.l.b16 %v4647
      %v4652 = vpack.c.b16 %v4651, %v4650
      %v4655 = vsel %vm2573, %v4644, 0
      %4657 = vmatprep.subr.bf16.mxu0 0
      %4658 = vmatpush1.bf16.msra.mxu0 0
      %4659 = vmatprep.subr.bf16.mxu0 0
      %4660 = vmatpush1.bf16.msra.mxu0 0
      %4661 = vmatprep.subr.bf16.mxu0 0
      %4662 = vmatpush1.bf16.msra.mxu0 0
      %4663 = vmatprep.subr.bf16.mxu0 0
      %4664 = vmatpush1.bf16.msra.mxu0 0
      %4665 = vmatprep.subr.bf16.mxu0 0
      %4666 = vmatpush1.bf16.msra.mxu0 0
      %4667 = vmatprep.subr.bf16.mxu0 0
      %4668 = vmatpush1.bf16.msra.mxu0 0
      %4669 = vmatprep.subr.bf16.mxu0 0
      %4670 = vmatpush1.bf16.msra.mxu0 0
      %4671 = vmatprep.subr.bf16.mxu0 0
      %4672 = vmatpush1.bf16.msra.mxu0 %v4652
      %4673 = vmatprep.subr.bf16.mxu0 0
      %4674 = vmatpush2.bf16.msra.mxu0 0
      %4675 = vmatprep.subr.bf16.mxu0 0
      %4676 = vmatpush2.bf16.msra.mxu0 0
      %4677 = vmatprep.subr.bf16.mxu0 0
      %4678 = vmatpush2.bf16.msra.mxu0 0
      %4679 = vmatprep.subr.bf16.mxu0 0
      %4680 = vmatpush2.bf16.msra.mxu0 0
      %4681 = vmatprep.subr.bf16.mxu0 0
      %4682 = vmatpush2.bf16.msra.mxu0 0
      %4683 = vmatprep.subr.bf16.mxu0 0
      %4684 = vmatpush2.bf16.msra.mxu0 0
      %4685 = vmatprep.subr.bf16.mxu0 0
      %4686 = vmatpush2.bf16.msra.mxu0 0
      %4687 = vmatprep.subr.bf16.mxu0 0
      %4688 = vmatpush2.bf16.msra.mxu0 0
      %4689 = vmatprep.mubr.bf16.mxu0 0
      %4690 = vmatmul.mubr.bf16.gmra.mxu0 %v4655
      %v4691 = vpop.f32.mrf.mxu0
      %v4692 = vadd.f32 0.0, %v4691
      %v4693 = vpop.f32.mrf.mxu0
      %v4694 = vpop.f32.mrf.mxu0
      %v4695 = vpop.f32.mrf.mxu0
      %4696 = vdwg.mxu0
      %v4697 = vadd.f32 %v4624, %v4692
      %s4698 = scalar_lea.vmem %s5, 128
      %v4699 = vld [vmem:[%s4698] sm:$0xf]
      %v4700 = vld [vmem:[%s4698 + $0x4] sm:$0xf]
      %v4701 = vshrl.u32 %v4644, 16
      %v4705 = vunpack.c.l.b16 %v4699
      %v4706 = vunpack.c.l.b16 %v4700
      %v4707 = vpack.c.b16 %v4706, %v4705
      %v4710 = vsel %vm2573, %v4701, 0
      %4712 = vmatprep.subr.bf16.mxu0 0
      %4713 = vmatpush1.bf16.msra.mxu0 0
      %4714 = vmatprep.subr.bf16.mxu0 0
      %4715 = vmatpush1.bf16.msra.mxu0 0
      %4716 = vmatprep.subr.bf16.mxu0 0
      %4717 = vmatpush1.bf16.msra.mxu0 0
      %4718 = vmatprep.subr.bf16.mxu0 0
      %4719 = vmatpush1.bf16.msra.mxu0 0
      %4720 = vmatprep.subr.bf16.mxu0 0
      %4721 = vmatpush1.bf16.msra.mxu0 0
      %4722 = vmatprep.subr.bf16.mxu0 0
      %4723 = vmatpush1.bf16.msra.mxu0 0
      %4724 = vmatprep.subr.bf16.mxu0 0
      %4725 = vmatpush1.bf16.msra.mxu0 0
      %4726 = vmatprep.subr.bf16.mxu0 0
      %4727 = vmatpush1.bf16.msra.mxu0 %v4707
      %4728 = vmatprep.subr.bf16.mxu0 0
      %4729 = vmatpush2.bf16.msra.mxu0 0
      %4730 = vmatprep.subr.bf16.mxu0 0
      %4731 = vmatpush2.bf16.msra.mxu0 0
      %4732 = vmatprep.subr.bf16.mxu0 0
      %4733 = vmatpush2.bf16.msra.mxu0 0
      %4734 = vmatprep.subr.bf16.mxu0 0
      %4735 = vmatpush2.bf16.msra.mxu0 0
      %4736 = vmatprep.subr.bf16.mxu0 0
      %4737 = vmatpush2.bf16.msra.mxu0 0
      %4738 = vmatprep.subr.bf16.mxu0 0
      %4739 = vmatpush2.bf16.msra.mxu0 0
      %4740 = vmatprep.subr.bf16.mxu0 0
      %4741 = vmatpush2.bf16.msra.mxu0 0
      %4742 = vmatprep.subr.bf16.mxu0 0
      %4743 = vmatpush2.bf16.msra.mxu0 0
      %4744 = vmatprep.mubr.bf16.mxu0 0
      %4745 = vmatmul.mubr.bf16.gmra.mxu0 %v4710
      %v4746 = vpop.f32.mrf.mxu0
      %v4747 = vadd.f32 0.0, %v4746
      %v4748 = vpop.f32.mrf.mxu0
      %v4749 = vpop.f32.mrf.mxu0
      %v4750 = vpop.f32.mrf.mxu0
      %4751 = vdwg.mxu0
      %v4752 = vadd.f32 %v4697, %v4747
      %s4753 = scalar_lea.vmem %s5, 136
      %v4754 = vld [vmem:[%s4753] sm:$0xf]
      %v4755 = vld [vmem:[%s4753 + $0x4] sm:$0xf]
      %v4757 = vrot.slane %v4644, 1
      %v4760 = vunpack.c.l.b16 %v4754
      %v4761 = vunpack.c.l.b16 %v4755
      %v4762 = vpack.c.b16 %v4761, %v4760
      %v4765 = vsel %vm2573, %v4757, 0
      %4767 = vmatprep.subr.bf16.mxu0 0
      %4768 = vmatpush1.bf16.msra.mxu0 0
      %4769 = vmatprep.subr.bf16.mxu0 0
      %4770 = vmatpush1.bf16.msra.mxu0 0
      %4771 = vmatprep.subr.bf16.mxu0 0
      %4772 = vmatpush1.bf16.msra.mxu0 0
      %4773 = vmatprep.subr.bf16.mxu0 0
      %4774 = vmatpush1.bf16.msra.mxu0 0
      %4775 = vmatprep.subr.bf16.mxu0 0
      %4776 = vmatpush1.bf16.msra.mxu0 0
      %4777 = vmatprep.subr.bf16.mxu0 0
      %4778 = vmatpush1.bf16.msra.mxu0 0
      %4779 = vmatprep.subr.bf16.mxu0 0
      %4780 = vmatpush1.bf16.msra.mxu0 0
      %4781 = vmatprep.subr.bf16.mxu0 0
      %4782 = vmatpush1.bf16.msra.mxu0 %v4762
      %4783 = vmatprep.subr.bf16.mxu0 0
      %4784 = vmatpush2.bf16.msra.mxu0 0
      %4785 = vmatprep.subr.bf16.mxu0 0
      %4786 = vmatpush2.bf16.msra.mxu0 0
      %4787 = vmatprep.subr.bf16.mxu0 0
      %4788 = vmatpush2.bf16.msra.mxu0 0
      %4789 = vmatprep.subr.bf16.mxu0 0
      %4790 = vmatpush2.bf16.msra.mxu0 0
      %4791 = vmatprep.subr.bf16.mxu0 0
      %4792 = vmatpush2.bf16.msra.mxu0 0
      %4793 = vmatprep.subr.bf16.mxu0 0
      %4794 = vmatpush2.bf16.msra.mxu0 0
      %4795 = vmatprep.subr.bf16.mxu0 0
      %4796 = vmatpush2.bf16.msra.mxu0 0
      %4797 = vmatprep.subr.bf16.mxu0 0
      %4798 = vmatpush2.bf16.msra.mxu0 0
      %4799 = vmatprep.mubr.bf16.mxu0 0
      %4800 = vmatmul.mubr.bf16.gmra.mxu0 %v4765
      %v4801 = vpop.f32.mrf.mxu0
      %v4802 = vadd.f32 0.0, %v4801
      %v4803 = vpop.f32.mrf.mxu0
      %v4804 = vpop.f32.mrf.mxu0
      %v4805 = vpop.f32.mrf.mxu0
      %4806 = vdwg.mxu0
      %v4807 = vadd.f32 %v4752, %v4802
      %s4808 = scalar_lea.vmem %s5, 144
      %v4809 = vld [vmem:[%s4808] sm:$0xf]
      %v4810 = vld [vmem:[%s4808 + $0x4] sm:$0xf]
      %v4811 = vrot.slane %v4701, 1
      %v4814 = vunpack.c.l.b16 %v4809
      %v4815 = vunpack.c.l.b16 %v4810
      %v4816 = vpack.c.b16 %v4815, %v4814
      %v4819 = vsel %vm2573, %v4811, 0
      %4821 = vmatprep.subr.bf16.mxu0 0
      %4822 = vmatpush1.bf16.msra.mxu0 0
      %4823 = vmatprep.subr.bf16.mxu0 0
      %4824 = vmatpush1.bf16.msra.mxu0 0
      %4825 = vmatprep.subr.bf16.mxu0 0
      %4826 = vmatpush1.bf16.msra.mxu0 0
      %4827 = vmatprep.subr.bf16.mxu0 0
      %4828 = vmatpush1.bf16.msra.mxu0 0
      %4829 = vmatprep.subr.bf16.mxu0 0
      %4830 = vmatpush1.bf16.msra.mxu0 0
      %4831 = vmatprep.subr.bf16.mxu0 0
      %4832 = vmatpush1.bf16.msra.mxu0 0
      %4833 = vmatprep.subr.bf16.mxu0 0
      %4834 = vmatpush1.bf16.msra.mxu0 0
      %4835 = vmatprep.subr.bf16.mxu0 0
      %4836 = vmatpush1.bf16.msra.mxu0 %v4816
      %4837 = vmatprep.subr.bf16.mxu0 0
      %4838 = vmatpush2.bf16.msra.mxu0 0
      %4839 = vmatprep.subr.bf16.mxu0 0
      %4840 = vmatpush2.bf16.msra.mxu0 0
      %4841 = vmatprep.subr.bf16.mxu0 0
      %4842 = vmatpush2.bf16.msra.mxu0 0
      %4843 = vmatprep.subr.bf16.mxu0 0
      %4844 = vmatpush2.bf16.msra.mxu0 0
      %4845 = vmatprep.subr.bf16.mxu0 0
      %4846 = vmatpush2.bf16.msra.mxu0 0
      %4847 = vmatprep.subr.bf16.mxu0 0
      %4848 = vmatpush2.bf16.msra.mxu0 0
      %4849 = vmatprep.subr.bf16.mxu0 0
      %4850 = vmatpush2.bf16.msra.mxu0 0
      %4851 = vmatprep.subr.bf16.mxu0 0
      %4852 = vmatpush2.bf16.msra.mxu0 0
      %4853 = vmatprep.mubr.bf16.mxu0 0
      %4854 = vmatmul.mubr.bf16.gmra.mxu0 %v4819
      %v4855 = vpop.f32.mrf.mxu0
      %v4856 = vadd.f32 0.0, %v4855
      %v4857 = vpop.f32.mrf.mxu0
      %v4858 = vpop.f32.mrf.mxu0
      %v4859 = vpop.f32.mrf.mxu0
      %4860 = vdwg.mxu0
      %v4861 = vadd.f32 %v4807, %v4856
      %s4862 = scalar_lea.vmem %s5, 152
      %v4863 = vld [vmem:[%s4862] sm:$0xf]
      %v4864 = vld [vmem:[%s4862 + $0x4] sm:$0xf]
      %v4865 = vrot.slane %v4644, 2
      %v4868 = vunpack.c.l.b16 %v4863
      %v4869 = vunpack.c.l.b16 %v4864
      %v4870 = vpack.c.b16 %v4869, %v4868
      %v4873 = vsel %vm2573, %v4865, 0
      %4875 = vmatprep.subr.bf16.mxu0 0
      %4876 = vmatpush1.bf16.msra.mxu0 0
      %4877 = vmatprep.subr.bf16.mxu0 0
      %4878 = vmatpush1.bf16.msra.mxu0 0
      %4879 = vmatprep.subr.bf16.mxu0 0
      %4880 = vmatpush1.bf16.msra.mxu0 0
      %4881 = vmatprep.subr.bf16.mxu0 0
      %4882 = vmatpush1.bf16.msra.mxu0 0
      %4883 = vmatprep.subr.bf16.mxu0 0
      %4884 = vmatpush1.bf16.msra.mxu0 0
      %4885 = vmatprep.subr.bf16.mxu0 0
      %4886 = vmatpush1.bf16.msra.mxu0 0
      %4887 = vmatprep.subr.bf16.mxu0 0
      %4888 = vmatpush1.bf16.msra.mxu0 0
      %4889 = vmatprep.subr.bf16.mxu0 0
      %4890 = vmatpush1.bf16.msra.mxu0 %v4870
      %4891 = vmatprep.subr.bf16.mxu0 0
      %4892 = vmatpush2.bf16.msra.mxu0 0
      %4893 = vmatprep.subr.bf16.mxu0 0
      %4894 = vmatpush2.bf16.msra.mxu0 0
      %4895 = vmatprep.subr.bf16.mxu0 0
      %4896 = vmatpush2.bf16.msra.mxu0 0
      %4897 = vmatprep.subr.bf16.mxu0 0
      %4898 = vmatpush2.bf16.msra.mxu0 0
      %4899 = vmatprep.subr.bf16.mxu0 0
      %4900 = vmatpush2.bf16.msra.mxu0 0
      %4901 = vmatprep.subr.bf16.mxu0 0
      %4902 = vmatpush2.bf16.msra.mxu0 0
      %4903 = vmatprep.subr.bf16.mxu0 0
      %4904 = vmatpush2.bf16.msra.mxu0 0
      %4905 = vmatprep.subr.bf16.mxu0 0
      %4906 = vmatpush2.bf16.msra.mxu0 0
      %4907 = vmatprep.mubr.bf16.mxu0 0
      %4908 = vmatmul.mubr.bf16.gmra.mxu0 %v4873
      %v4909 = vpop.f32.mrf.mxu0
      %v4910 = vadd.f32 0.0, %v4909
      %v4911 = vpop.f32.mrf.mxu0
      %v4912 = vpop.f32.mrf.mxu0
      %v4913 = vpop.f32.mrf.mxu0
      %4914 = vdwg.mxu0
      %v4915 = vadd.f32 %v4861, %v4910
      %s4916 = scalar_lea.vmem [#allocation4], 112
      %v4917 = vld [vmem:[%s4916] ss:$2 sm:$0xff]
      %s4918 = scalar_lea.vmem [#allocation4], 128
      %v4919 = vld [vmem:[%s4918] ss:$2 sm:$0x3f]
      %s4920 = scalar_lea.vmem [#allocation4], 113
      %v4921 = vld [vmem:[%s4920] ss:$2 sm:$0xff]
      %s4922 = scalar_lea.vmem [#allocation4], 129
      %v4923 = vld [vmem:[%s4922] ss:$2 sm:$0x3f]
      %v4924 = vmax.f32 %v4917, %v4921
      %v4925 = vmax.f32 %v4919, %v4923
      %v4928 = vrot.slane %v4924, 7
      %v4929 = vrot.slane %v4925, 7
      %v4930 = vsel %vm3758, %v4928, %v4929
      %v4932 = vmax.f32 %v4924, %v4930
      %v4933 = vadd.f32 %v4932, %v3768
      %v4934 = vmax.f32 %v4933, 0.0
      %v4935 = vpack.c.bf16 %v4934, %v4934
      %s4936 = scalar_lea.vmem %s5, 160
      %v4937 = vld [vmem:[%s4936] sm:$0xf]
      %v4938 = vld [vmem:[%s4936 + $0x4] sm:$0xf]
      %v4941 = vunpack.c.l.b16 %v4937
      %v4942 = vunpack.c.l.b16 %v4938
      %v4943 = vpack.c.b16 %v4942, %v4941
      %v4946 = vsel %vm2573, %v4935, 0
      %4948 = vmatprep.subr.bf16.mxu0 0
      %4949 = vmatpush1.bf16.msra.mxu0 0
      %4950 = vmatprep.subr.bf16.mxu0 0
      %4951 = vmatpush1.bf16.msra.mxu0 0
      %4952 = vmatprep.subr.bf16.mxu0 0
      %4953 = vmatpush1.bf16.msra.mxu0 0
      %4954 = vmatprep.subr.bf16.mxu0 0
      %4955 = vmatpush1.bf16.msra.mxu0 0
      %4956 = vmatprep.subr.bf16.mxu0 0
      %4957 = vmatpush1.bf16.msra.mxu0 0
      %4958 = vmatprep.subr.bf16.mxu0 0
      %4959 = vmatpush1.bf16.msra.mxu0 0
      %4960 = vmatprep.subr.bf16.mxu0 0
      %4961 = vmatpush1.bf16.msra.mxu0 0
      %4962 = vmatprep.subr.bf16.mxu0 0
      %4963 = vmatpush1.bf16.msra.mxu0 %v4943
      %4964 = vmatprep.subr.bf16.mxu0 0
      %4965 = vmatpush2.bf16.msra.mxu0 0
      %4966 = vmatprep.subr.bf16.mxu0 0
      %4967 = vmatpush2.bf16.msra.mxu0 0
      %4968 = vmatprep.subr.bf16.mxu0 0
      %4969 = vmatpush2.bf16.msra.mxu0 0
      %4970 = vmatprep.subr.bf16.mxu0 0
      %4971 = vmatpush2.bf16.msra.mxu0 0
      %4972 = vmatprep.subr.bf16.mxu0 0
      %4973 = vmatpush2.bf16.msra.mxu0 0
      %4974 = vmatprep.subr.bf16.mxu0 0
      %4975 = vmatpush2.bf16.msra.mxu0 0
      %4976 = vmatprep.subr.bf16.mxu0 0
      %4977 = vmatpush2.bf16.msra.mxu0 0
      %4978 = vmatprep.subr.bf16.mxu0 0
      %4979 = vmatpush2.bf16.msra.mxu0 0
      %4980 = vmatprep.mubr.bf16.mxu0 0
      %4981 = vmatmul.mubr.bf16.gmra.mxu0 %v4946
      %v4982 = vpop.f32.mrf.mxu0
      %v4983 = vadd.f32 0.0, %v4982
      %v4984 = vpop.f32.mrf.mxu0
      %v4985 = vpop.f32.mrf.mxu0
      %v4986 = vpop.f32.mrf.mxu0
      %4987 = vdwg.mxu0
      %v4988 = vadd.f32 %v4915, %v4983
      %s4989 = scalar_lea.vmem %s5, 168
      %v4990 = vld [vmem:[%s4989] sm:$0xf]
      %v4991 = vld [vmem:[%s4989 + $0x4] sm:$0xf]
      %v4992 = vshrl.u32 %v4935, 16
      %v4996 = vunpack.c.l.b16 %v4990
      %v4997 = vunpack.c.l.b16 %v4991
      %v4998 = vpack.c.b16 %v4997, %v4996
      %v5001 = vsel %vm2573, %v4992, 0
      %5003 = vmatprep.subr.bf16.mxu0 0
      %5004 = vmatpush1.bf16.msra.mxu0 0
      %5005 = vmatprep.subr.bf16.mxu0 0
      %5006 = vmatpush1.bf16.msra.mxu0 0
      %5007 = vmatprep.subr.bf16.mxu0 0
      %5008 = vmatpush1.bf16.msra.mxu0 0
      %5009 = vmatprep.subr.bf16.mxu0 0
      %5010 = vmatpush1.bf16.msra.mxu0 0
      %5011 = vmatprep.subr.bf16.mxu0 0
      %5012 = vmatpush1.bf16.msra.mxu0 0
      %5013 = vmatprep.subr.bf16.mxu0 0
      %5014 = vmatpush1.bf16.msra.mxu0 0
      %5015 = vmatprep.subr.bf16.mxu0 0
      %5016 = vmatpush1.bf16.msra.mxu0 0
      %5017 = vmatprep.subr.bf16.mxu0 0
      %5018 = vmatpush1.bf16.msra.mxu0 %v4998
      %5019 = vmatprep.subr.bf16.mxu0 0
      %5020 = vmatpush2.bf16.msra.mxu0 0
      %5021 = vmatprep.subr.bf16.mxu0 0
      %5022 = vmatpush2.bf16.msra.mxu0 0
      %5023 = vmatprep.subr.bf16.mxu0 0
      %5024 = vmatpush2.bf16.msra.mxu0 0
      %5025 = vmatprep.subr.bf16.mxu0 0
      %5026 = vmatpush2.bf16.msra.mxu0 0
      %5027 = vmatprep.subr.bf16.mxu0 0
      %5028 = vmatpush2.bf16.msra.mxu0 0
      %5029 = vmatprep.subr.bf16.mxu0 0
      %5030 = vmatpush2.bf16.msra.mxu0 0
      %5031 = vmatprep.subr.bf16.mxu0 0
      %5032 = vmatpush2.bf16.msra.mxu0 0
      %5033 = vmatprep.subr.bf16.mxu0 0
      %5034 = vmatpush2.bf16.msra.mxu0 0
      %5035 = vmatprep.mubr.bf16.mxu0 0
      %5036 = vmatmul.mubr.bf16.gmra.mxu0 %v5001
      %v5037 = vpop.f32.mrf.mxu0
      %v5038 = vadd.f32 0.0, %v5037
      %v5039 = vpop.f32.mrf.mxu0
      %v5040 = vpop.f32.mrf.mxu0
      %v5041 = vpop.f32.mrf.mxu0
      %5042 = vdwg.mxu0
      %v5043 = vadd.f32 %v4988, %v5038
      %s5044 = scalar_lea.vmem %s5, 176
      %v5045 = vld [vmem:[%s5044] sm:$0xf]
      %v5046 = vld [vmem:[%s5044 + $0x4] sm:$0xf]
      %v5048 = vrot.slane %v4935, 1
      %v5051 = vunpack.c.l.b16 %v5045
      %v5052 = vunpack.c.l.b16 %v5046
      %v5053 = vpack.c.b16 %v5052, %v5051
      %v5056 = vsel %vm2573, %v5048, 0
      %5058 = vmatprep.subr.bf16.mxu0 0
      %5059 = vmatpush1.bf16.msra.mxu0 0
      %5060 = vmatprep.subr.bf16.mxu0 0
      %5061 = vmatpush1.bf16.msra.mxu0 0
      %5062 = vmatprep.subr.bf16.mxu0 0
      %5063 = vmatpush1.bf16.msra.mxu0 0
      %5064 = vmatprep.subr.bf16.mxu0 0
      %5065 = vmatpush1.bf16.msra.mxu0 0
      %5066 = vmatprep.subr.bf16.mxu0 0
      %5067 = vmatpush1.bf16.msra.mxu0 0
      %5068 = vmatprep.subr.bf16.mxu0 0
      %5069 = vmatpush1.bf16.msra.mxu0 0
      %5070 = vmatprep.subr.bf16.mxu0 0
      %5071 = vmatpush1.bf16.msra.mxu0 0
      %5072 = vmatprep.subr.bf16.mxu0 0
      %5073 = vmatpush1.bf16.msra.mxu0 %v5053
      %5074 = vmatprep.subr.bf16.mxu0 0
      %5075 = vmatpush2.bf16.msra.mxu0 0
      %5076 = vmatprep.subr.bf16.mxu0 0
      %5077 = vmatpush2.bf16.msra.mxu0 0
      %5078 = vmatprep.subr.bf16.mxu0 0
      %5079 = vmatpush2.bf16.msra.mxu0 0
      %5080 = vmatprep.subr.bf16.mxu0 0
      %5081 = vmatpush2.bf16.msra.mxu0 0
      %5082 = vmatprep.subr.bf16.mxu0 0
      %5083 = vmatpush2.bf16.msra.mxu0 0
      %5084 = vmatprep.subr.bf16.mxu0 0
      %5085 = vmatpush2.bf16.msra.mxu0 0
      %5086 = vmatprep.subr.bf16.mxu0 0
      %5087 = vmatpush2.bf16.msra.mxu0 0
      %5088 = vmatprep.subr.bf16.mxu0 0
      %5089 = vmatpush2.bf16.msra.mxu0 0
      %5090 = vmatprep.mubr.bf16.mxu0 0
      %5091 = vmatmul.mubr.bf16.gmra.mxu0 %v5056
      %v5092 = vpop.f32.mrf.mxu0
      %v5093 = vadd.f32 0.0, %v5092
      %v5094 = vpop.f32.mrf.mxu0
      %v5095 = vpop.f32.mrf.mxu0
      %v5096 = vpop.f32.mrf.mxu0
      %5097 = vdwg.mxu0
      %v5098 = vadd.f32 %v5043, %v5093
      %s5099 = scalar_lea.vmem %s5, 184
      %v5100 = vld [vmem:[%s5099] sm:$0xf]
      %v5101 = vld [vmem:[%s5099 + $0x4] sm:$0xf]
      %v5102 = vrot.slane %v4992, 1
      %v5105 = vunpack.c.l.b16 %v5100
      %v5106 = vunpack.c.l.b16 %v5101
      %v5107 = vpack.c.b16 %v5106, %v5105
      %v5110 = vsel %vm2573, %v5102, 0
      %5112 = vmatprep.subr.bf16.mxu0 0
      %5113 = vmatpush1.bf16.msra.mxu0 0
      %5114 = vmatprep.subr.bf16.mxu0 0
      %5115 = vmatpush1.bf16.msra.mxu0 0
      %5116 = vmatprep.subr.bf16.mxu0 0
      %5117 = vmatpush1.bf16.msra.mxu0 0
      %5118 = vmatprep.subr.bf16.mxu0 0
      %5119 = vmatpush1.bf16.msra.mxu0 0
      %5120 = vmatprep.subr.bf16.mxu0 0
      %5121 = vmatpush1.bf16.msra.mxu0 0
      %5122 = vmatprep.subr.bf16.mxu0 0
      %5123 = vmatpush1.bf16.msra.mxu0 0
      %5124 = vmatprep.subr.bf16.mxu0 0
      %5125 = vmatpush1.bf16.msra.mxu0 0
      %5126 = vmatprep.subr.bf16.mxu0 0
      %5127 = vmatpush1.bf16.msra.mxu0 %v5107
      %5128 = vmatprep.subr.bf16.mxu0 0
      %5129 = vmatpush2.bf16.msra.mxu0 0
      %5130 = vmatprep.subr.bf16.mxu0 0
      %5131 = vmatpush2.bf16.msra.mxu0 0
      %5132 = vmatprep.subr.bf16.mxu0 0
      %5133 = vmatpush2.bf16.msra.mxu0 0
      %5134 = vmatprep.subr.bf16.mxu0 0
      %5135 = vmatpush2.bf16.msra.mxu0 0
      %5136 = vmatprep.subr.bf16.mxu0 0
      %5137 = vmatpush2.bf16.msra.mxu0 0
      %5138 = vmatprep.subr.bf16.mxu0 0
      %5139 = vmatpush2.bf16.msra.mxu0 0
      %5140 = vmatprep.subr.bf16.mxu0 0
      %5141 = vmatpush2.bf16.msra.mxu0 0
      %5142 = vmatprep.subr.bf16.mxu0 0
      %5143 = vmatpush2.bf16.msra.mxu0 0
      %5144 = vmatprep.mubr.bf16.mxu0 0
      %5145 = vmatmul.mubr.bf16.gmra.mxu0 %v5110
      %v5146 = vpop.f32.mrf.mxu0
      %v5147 = vadd.f32 0.0, %v5146
      %v5148 = vpop.f32.mrf.mxu0
      %v5149 = vpop.f32.mrf.mxu0
      %v5150 = vpop.f32.mrf.mxu0
      %5151 = vdwg.mxu0
      %v5152 = vadd.f32 %v5098, %v5147
      %s5153 = scalar_lea.vmem %s5, 192
      %v5154 = vld [vmem:[%s5153] sm:$0xf]
      %v5155 = vld [vmem:[%s5153 + $0x4] sm:$0xf]
      %v5156 = vrot.slane %v4935, 2
      %v5159 = vunpack.c.l.b16 %v5154
      %v5160 = vunpack.c.l.b16 %v5155
      %v5161 = vpack.c.b16 %v5160, %v5159
      %v5164 = vsel %vm2573, %v5156, 0
      %5166 = vmatprep.subr.bf16.mxu0 0
      %5167 = vmatpush1.bf16.msra.mxu0 0
      %5168 = vmatprep.subr.bf16.mxu0 0
      %5169 = vmatpush1.bf16.msra.mxu0 0
      %5170 = vmatprep.subr.bf16.mxu0 0
      %5171 = vmatpush1.bf16.msra.mxu0 0
      %5172 = vmatprep.subr.bf16.mxu0 0
      %5173 = vmatpush1.bf16.msra.mxu0 0
      %5174 = vmatprep.subr.bf16.mxu0 0
      %5175 = vmatpush1.bf16.msra.mxu0 0
      %5176 = vmatprep.subr.bf16.mxu0 0
      %5177 = vmatpush1.bf16.msra.mxu0 0
      %5178 = vmatprep.subr.bf16.mxu0 0
      %5179 = vmatpush1.bf16.msra.mxu0 0
      %5180 = vmatprep.subr.bf16.mxu0 0
      %5181 = vmatpush1.bf16.msra.mxu0 %v5161
      %5182 = vmatprep.subr.bf16.mxu0 0
      %5183 = vmatpush2.bf16.msra.mxu0 0
      %5184 = vmatprep.subr.bf16.mxu0 0
      %5185 = vmatpush2.bf16.msra.mxu0 0
      %5186 = vmatprep.subr.bf16.mxu0 0
      %5187 = vmatpush2.bf16.msra.mxu0 0
      %5188 = vmatprep.subr.bf16.mxu0 0
      %5189 = vmatpush2.bf16.msra.mxu0 0
      %5190 = vmatprep.subr.bf16.mxu0 0
      %5191 = vmatpush2.bf16.msra.mxu0 0
      %5192 = vmatprep.subr.bf16.mxu0 0
      %5193 = vmatpush2.bf16.msra.mxu0 0
      %5194 = vmatprep.subr.bf16.mxu0 0
      %5195 = vmatpush2.bf16.msra.mxu0 0
      %5196 = vmatprep.subr.bf16.mxu0 0
      %5197 = vmatpush2.bf16.msra.mxu0 0
      %5198 = vmatprep.mubr.bf16.mxu0 0
      %5199 = vmatmul.mubr.bf16.gmra.mxu0 %v5164
      %v5200 = vpop.f32.mrf.mxu0
      %v5201 = vadd.f32 0.0, %v5200
      %v5202 = vpop.f32.mrf.mxu0
      %v5203 = vpop.f32.mrf.mxu0
      %v5204 = vpop.f32.mrf.mxu0
      %5205 = vdwg.mxu0
      %v5206 = vadd.f32 %v5152, %v5201
      %v5207 = vmax.f32 %v5206, 0.0
      %v5208 = vpack.c.bf16 %v5207, %v5207
      %v5209 = vld [vmem:[%s7] sm:$0xf]
      %v5210 = vld [vmem:[%s7 + $0x4] sm:$0xf]
      %v5211 = vld [vmem:[%s7 + $0x8] sm:$0xf]
      %v5212 = vld [vmem:[%s7 + $0xc] sm:$0xf]
      %v5213 = vld [vmem:[%s7 + $0x10] sm:$0xf]
      %v5214 = vld [vmem:[%s7 + $0x14] sm:$0xf]
      %v5215 = vld [vmem:[%s7 + $0x18] sm:$0xf]
      %v5216 = vld [vmem:[%s7 + $0x1c] sm:$0xf]
      %v5217 = vld [vmem:[%s7 + $0x20] sm:$0xf]
      %v5218 = vld [vmem:[%s7 + $0x24] sm:$0xf]
      %v5219 = vld [vmem:[%s7 + $0x28] sm:$0xf]
      %v5220 = vld [vmem:[%s7 + $0x2c] sm:$0xf]
      %v5221 = vld [vmem:[%s7 + $0x30] sm:$0xf]
      %v5222 = vld [vmem:[%s7 + $0x34] sm:$0xf]
      %v5223 = vld [vmem:[%s7 + $0x38] sm:$0xf]
      %v5224 = vld [vmem:[%s7 + $0x3c] sm:$0xf]
      %v5225 = vld [vmem:[%s8] sm:$0x1]
      %v5242 = vunpack.c.l.b16 %v5209
      %v5243 = vunpack.c.l.b16 %v5210
      %v5244 = vunpack.c.l.b16 %v5211
      %v5245 = vunpack.c.l.b16 %v5212
      %v5246 = vunpack.c.l.b16 %v5213
      %v5247 = vunpack.c.l.b16 %v5214
      %v5248 = vunpack.c.l.b16 %v5215
      %v5249 = vunpack.c.l.b16 %v5216
      %v5250 = vunpack.c.l.b16 %v5217
      %v5251 = vunpack.c.l.b16 %v5218
      %v5252 = vunpack.c.l.b16 %v5219
      %v5253 = vunpack.c.l.b16 %v5220
      %v5254 = vunpack.c.l.b16 %v5221
      %v5255 = vunpack.c.l.b16 %v5222
      %v5256 = vunpack.c.l.b16 %v5223
      %v5257 = vunpack.c.l.b16 %v5224
      %v5258 = vpack.c.b16 %v5243, %v5242
      %v5259 = vpack.c.b16 %v5245, %v5244
      %v5260 = vpack.c.b16 %v5247, %v5246
      %v5261 = vpack.c.b16 %v5249, %v5248
      %v5262 = vpack.c.b16 %v5251, %v5250
      %v5263 = vpack.c.b16 %v5253, %v5252
      %v5264 = vpack.c.b16 %v5255, %v5254
      %v5265 = vpack.c.b16 %v5257, %v5256
      %5274 = vmatprep.subr.bf16.mxu0 0
      %5275 = vmatpush1.bf16.msra.mxu0 %v5265
      %5276 = vmatprep.subr.bf16.mxu0 0
      %5277 = vmatpush1.bf16.msra.mxu0 %v5264
      %5278 = vmatprep.subr.bf16.mxu0 0
      %5279 = vmatpush1.bf16.msra.mxu0 %v5263
      %5280 = vmatprep.subr.bf16.mxu0 0
      %5281 = vmatpush1.bf16.msra.mxu0 %v5262
      %5282 = vmatprep.subr.bf16.mxu0 0
      %5283 = vmatpush1.bf16.msra.mxu0 %v5261
      %5284 = vmatprep.subr.bf16.mxu0 0
      %5285 = vmatpush1.bf16.msra.mxu0 %v5260
      %5286 = vmatprep.subr.bf16.mxu0 0
      %5287 = vmatpush1.bf16.msra.mxu0 %v5259
      %5288 = vmatprep.subr.bf16.mxu0 0
      %5289 = vmatpush1.bf16.msra.mxu0 %v5258
      %5290 = vmatprep.subr.bf16.mxu0 0
      %5291 = vmatpush2.bf16.msra.mxu0 0
      %5292 = vmatprep.subr.bf16.mxu0 0
      %5293 = vmatpush2.bf16.msra.mxu0 0
      %5294 = vmatprep.subr.bf16.mxu0 0
      %5295 = vmatpush2.bf16.msra.mxu0 0
      %5296 = vmatprep.subr.bf16.mxu0 0
      %5297 = vmatpush2.bf16.msra.mxu0 0
      %5298 = vmatprep.subr.bf16.mxu0 0
      %5299 = vmatpush2.bf16.msra.mxu0 0
      %5300 = vmatprep.subr.bf16.mxu0 0
      %5301 = vmatpush2.bf16.msra.mxu0 0
      %5302 = vmatprep.subr.bf16.mxu0 0
      %5303 = vmatpush2.bf16.msra.mxu0 0
      %5304 = vmatprep.subr.bf16.mxu0 0
      %5305 = vmatpush2.bf16.msra.mxu0 0
      %5306 = vmatprep.mubr.bf16.mxu0 0
      %5307 = vmatmul.mubr.bf16.gmra.mxu0 %v5208
      %v5308 = vpop.f32.mrf.mxu0
      %v5309 = vadd.f32 %v5225, %v5308
      %v5310 = vpop.f32.mrf.mxu0
      %v5311 = vpop.f32.mrf.mxu0
      %v5312 = vpop.f32.mrf.mxu0
      %5313 = vdwg.mxu0
      %v5314 = vmax.f32 %v5309, 0.0
      %v5315 = vpack.c.bf16 %v5314, %v5314
      %v5316 = vld [vmem:[%s9] sm:$0xf]
      %v5317 = vld [vmem:[%s9 + $0x4] sm:$0xf]
      %v5318 = vld [vmem:[%s9 + $0x8] sm:$0xf]
      %v5319 = vld [vmem:[%s9 + $0xc] sm:$0xf]
      %v5320 = vld [vmem:[%s9 + $0x10] sm:$0xf]
      %v5321 = vld [vmem:[%s9 + $0x14] sm:$0xf]
      %v5322 = vld [vmem:[%s9 + $0x18] sm:$0xf]
      %v5323 = vld [vmem:[%s9 + $0x1c] sm:$0xf]
      %v5324 = vld [vmem:[%s9 + $0x20] sm:$0xf]
      %v5325 = vld [vmem:[%s9 + $0x24] sm:$0xf]
      %v5326 = vld [vmem:[%s9 + $0x28] sm:$0xf]
      %v5327 = vld [vmem:[%s9 + $0x2c] sm:$0xf]
      %v5328 = vld [vmem:[%s9 + $0x30] sm:$0xf]
      %v5329 = vld [vmem:[%s9 + $0x34] sm:$0xf]
      %v5330 = vld [vmem:[%s9 + $0x38] sm:$0xf]
      %v5331 = vld [vmem:[%s9 + $0x3c] sm:$0xf]
      %v5332 = vld [vmem:[%s10] sm:$0x1]
      %v5349 = vunpack.c.l.b16 %v5316
      %v5350 = vunpack.c.l.b16 %v5317
      %v5351 = vunpack.c.l.b16 %v5318
      %v5352 = vunpack.c.l.b16 %v5319
      %v5353 = vunpack.c.l.b16 %v5320
      %v5354 = vunpack.c.l.b16 %v5321
      %v5355 = vunpack.c.l.b16 %v5322
      %v5356 = vunpack.c.l.b16 %v5323
      %v5357 = vunpack.c.l.b16 %v5324
      %v5358 = vunpack.c.l.b16 %v5325
      %v5359 = vunpack.c.l.b16 %v5326
      %v5360 = vunpack.c.l.b16 %v5327
      %v5361 = vunpack.c.l.b16 %v5328
      %v5362 = vunpack.c.l.b16 %v5329
      %v5363 = vunpack.c.l.b16 %v5330
      %v5364 = vunpack.c.l.b16 %v5331
      %v5365 = vpack.c.b16 %v5350, %v5349
      %v5366 = vpack.c.b16 %v5352, %v5351
      %v5367 = vpack.c.b16 %v5354, %v5353
      %v5368 = vpack.c.b16 %v5356, %v5355
      %v5369 = vpack.c.b16 %v5358, %v5357
      %v5370 = vpack.c.b16 %v5360, %v5359
      %v5371 = vpack.c.b16 %v5362, %v5361
      %v5372 = vpack.c.b16 %v5364, %v5363
      %5381 = vmatprep.subr.bf16.mxu0 0
      %5382 = vmatpush1.bf16.msra.mxu0 %v5372
      %5383 = vmatprep.subr.bf16.mxu0 0
      %5384 = vmatpush1.bf16.msra.mxu0 %v5371
      %5385 = vmatprep.subr.bf16.mxu0 0
      %5386 = vmatpush1.bf16.msra.mxu0 %v5370
      %5387 = vmatprep.subr.bf16.mxu0 0
      %5388 = vmatpush1.bf16.msra.mxu0 %v5369
      %5389 = vmatprep.subr.bf16.mxu0 0
      %5390 = vmatpush1.bf16.msra.mxu0 %v5368
      %5391 = vmatprep.subr.bf16.mxu0 0
      %5392 = vmatpush1.bf16.msra.mxu0 %v5367
      %5393 = vmatprep.subr.bf16.mxu0 0
      %5394 = vmatpush1.bf16.msra.mxu0 %v5366
      %5395 = vmatprep.subr.bf16.mxu0 0
      %5396 = vmatpush1.bf16.msra.mxu0 %v5365
      %5397 = vmatprep.subr.bf16.mxu0 0
      %5398 = vmatpush2.bf16.msra.mxu0 0
      %5399 = vmatprep.subr.bf16.mxu0 0
      %5400 = vmatpush2.bf16.msra.mxu0 0
      %5401 = vmatprep.subr.bf16.mxu0 0
      %5402 = vmatpush2.bf16.msra.mxu0 0
      %5403 = vmatprep.subr.bf16.mxu0 0
      %5404 = vmatpush2.bf16.msra.mxu0 0
      %5405 = vmatprep.subr.bf16.mxu0 0
      %5406 = vmatpush2.bf16.msra.mxu0 0
      %5407 = vmatprep.subr.bf16.mxu0 0
      %5408 = vmatpush2.bf16.msra.mxu0 0
      %5409 = vmatprep.subr.bf16.mxu0 0
      %5410 = vmatpush2.bf16.msra.mxu0 0
      %5411 = vmatprep.subr.bf16.mxu0 0
      %5412 = vmatpush2.bf16.msra.mxu0 0
      %5413 = vmatprep.mubr.bf16.mxu0 0
      %5414 = vmatmul.mubr.bf16.gmra.mxu0 %v5315
      %v5415 = vpop.f32.mrf.mxu0
      %v5416 = vadd.f32 %v5332, %v5415
      %v5417 = vpop.f32.mrf.mxu0
      %v5418 = vpop.f32.mrf.mxu0
      %v5419 = vpop.f32.mrf.mxu0
      %5420 = vdwg.mxu0
      %v5421 = vlaneseq
      %v5422 = vshrl.u32 %v5421, 7
      %v5423 = vsub.s32 0, %v5422
      %v5424 = vrot.slane %v5416, %v5423
      %5425 = vst [vmem:[%s384] sm:$0xff] %v5424
      %p5426 = scmp.lt.s32.totalorder %s22, 1
      %s5427 = scalar_select %p5426, %s22, 1
      %s5428 = smul.addr %s5427, 8
      %s5429 = scalar_lea.vmem %s11, %s5428
      // Predicated region
      $region65: #{net_forward.1} parent=63 // pred_check
        %p5430 = pneg %p276
      $region66: #{net_forward.1} parent=63 // pred_check_branch
        %5432 = sbr.rel (%p5430) target = $region68
      $region67: #{net_forward.1} parent=63 // pred_region
        _
      $region68: #{net_forward.1} parent=63 // pred_fallthru
        _
    $region64: #{net_forward.1} parent=5 // pred_fallthru
      _
    %p5433 = scmp.le.s32.totalorder 2, %s17
    // Predicated region
    $region69: #{net_forward.1} parent=5 // pred_check
      %p5434 = pneg %p5433
    $region70: #{net_forward.1} parent=5 // pred_check_branch
      %5436 = sbr.rel (%p5434) target = $region72
    $region71: #{net_forward.1} parent=5 // pred_region
      %s5437 = ssub.s32 %s17, 2
      // Predicated region
      $region73: #{net_forward.1} parent=71 // pred_check
        %p5438 = pneg %p282
      $region74: #{net_forward.1} parent=71 // pred_check_branch
        %5440 = sbr.rel (%p5438) target = $region76
      $region75: #{net_forward.1} parent=71 // pred_region
        %p5441 = scmp.lt.s32.totalorder %s23, 1
        %s5442 = scalar_select %p5441, %s23, 1
        %s5443 = smul.addr %s5442, 8
        %s5444 = scalar_lea.vmem %s11, %s5443
      $region76: #{net_forward.1} parent=71 // pred_fallthru
        _
    $region72: #{net_forward.1} parent=5 // pred_fallthru
      _
  $region6: #{net_forward.1} parent=0 // loop_footer
    %s21 = sadd.s32 1, %s17
  $region7: #{net_forward.1} parent=0 // loop_footer_branch
    %16 = sbr.rel target = $region3
  $region8: #{net_forward.1} parent=0 // loop_exit
    _

</llo_original>
